<compile_context>
chip_gen: v6e
topology: v6e:2x2x1
jax: 0.10.0
libtpu: 0.0.40
codegen_flags: <defaults>
</compile_context>

<pallas_src>
import functools
import math

import jax
import jax.numpy as jnp
from jax.experimental import pallas as pl
from jax.experimental.pallas import tpu as pltpu


# ------------------------------ fused kernel -------------------------------- #

def _decoder_block_kernel(
    x_ref, enc_ref, tgt_m_ref, src_m_ref,
    sa_wqkv_ref, sa_bqkv_ref, sa_wo_ref, sa_bo_ref,
    ca_wq_ref, ca_bq_ref, ca_wkv_ref, ca_bkv_ref, ca_wo_ref, ca_bo_ref,
    ff_w1_ref, ff_b1_ref, ff_w2_ref, ff_b2_ref,
    ln_g_ref, ln_b_ref,
    o_ref,
    *, num_heads, eps):
    x = x_ref[0]          # (St, D)  f32
    enc = enc_ref[0]      # (Ss, D)  f32
    D = x.shape[-1]
    Dh = D // num_heads

    def matmul(a_f32, w_ref, b_ref):
        # bf16 MXU operands, f32 accumulation, f32 bias add.
        y = jnp.dot(a_f32.astype(jnp.bfloat16), w_ref[...],
                    preferred_element_type=jnp.float32)
        return y + b_ref[...]

    def mha(q, k, v, mask):
        # q: (Sq, D), k/v: (Skv, D), mask: (Sq, Skv).  Scale already folded
        # into the Q projection.  Heads processed in-kernel; output re-packed
        # into a lane-dense (Sq, D) slab.
        outs = []
        for h in range(num_heads):
            qh = q[:, h * Dh:(h + 1) * Dh].astype(jnp.bfloat16)
            kh = k[:, h * Dh:(h + 1) * Dh].astype(jnp.bfloat16)
            vh = v[:, h * Dh:(h + 1) * Dh].astype(jnp.bfloat16)
            s = jax.lax.dot_general(
                qh, kh, dimension_numbers=(((1,), (1,)), ((), ())),
                preferred_element_type=jnp.float32)          # (Sq, Skv) f32
            s = jnp.where(mask == 0.0, -1e9, s)              # masked_fill
            s = s - jnp.max(s, axis=-1, keepdims=True)
            p = jnp.exp(s)
            p = p * pl.reciprocal(jnp.sum(p, axis=-1, keepdims=True),
                                  approx=True)
            outs.append(jnp.dot(p.astype(jnp.bfloat16), vh,
                                preferred_element_type=jnp.float32))
        return jnp.concatenate(outs, axis=-1)                # (Sq, D) f32

    def add_ln(x, r, idx):
        y = x + r
        mu = jnp.mean(y, axis=-1, keepdims=True)
        var = jnp.mean((y - mu) * (y - mu), axis=-1, keepdims=True)
        yn = (y - mu) * jax.lax.rsqrt(var + eps)
        g = ln_g_ref[idx:idx + 1, :]                         # (1, D)
        b = ln_b_ref[idx:idx + 1, :]
        return yn * g + b

    # ---- self-attention (fused QKV projection) ----
    qkv = matmul(x, sa_wqkv_ref, sa_bqkv_ref)                # (St, 3D)
    q, k, v = qkv[:, :D], qkv[:, D:2 * D], qkv[:, 2 * D:]
    ctx = mha(q, k, v, tgt_m_ref[0])
    sa = matmul(ctx, sa_wo_ref, sa_bo_ref)
    x1 = add_ln(x, sa, 0)

    # ---- cross-attention (fused KV projection from encoder output) ----
    q = matmul(x1, ca_wq_ref, ca_bq_ref)                     # (St, D)
    kv = matmul(enc, ca_wkv_ref, ca_bkv_ref)                 # (Ss, 2D)
    k, v = kv[:, :D], kv[:, D:]
    ctx = mha(q, k, v, src_m_ref[0])
    ca = matmul(ctx, ca_wo_ref, ca_bo_ref)
    x2 = add_ln(x1, ca, 1)

    # ---- feed-forward ----
    h = jnp.maximum(matmul(x2, ff_w1_ref, ff_b1_ref), 0.0)   # (St, d_ff)
    ff = matmul(h, ff_w2_ref, ff_b2_ref)                     # (St, D)
    o_ref[0] = add_ln(x2, ff, 2)


def decoder_block(x, encoder_output, tgt_mask, src_mask, fused, num_heads,
                  eps=1e-5):
    """Single fused pallas_call over grid=(B,)."""
    B, St, D = x.shape
    Ss = encoder_output.shape[1]

    def act_spec(s1, s2):
        return pl.BlockSpec((1, s1, s2), lambda b: (b, 0, 0))

    def const_spec(arr):
        return pl.BlockSpec(arr.shape, lambda b: (0, 0))

    weight_args = (
        fused["sa_wqkv"], fused["sa_bqkv"], fused["sa_wo"], fused["sa_bo"],
        fused["ca_wq"], fused["ca_bq"], fused["ca_wkv"], fused["ca_bkv"],
        fused["ca_wo"], fused["ca_bo"],
        fused["ff_w1"], fused["ff_b1"], fused["ff_w2"], fused["ff_b2"],
        fused["ln_g"], fused["ln_b"],
    )

    in_specs = [
        act_spec(St, D),          # x
        act_spec(Ss, D),          # encoder_output
        act_spec(St, St),         # tgt_mask
        act_spec(St, Ss),         # src_mask
    ] + [const_spec(w) for w in weight_args]

    return pl.pallas_call(
        functools.partial(_decoder_block_kernel, num_heads=num_heads, eps=eps),
        out_shape=jax.ShapeDtypeStruct((B, St, D), jnp.float32),
        grid=(B,),
        in_specs=in_specs,
        out_specs=pl.BlockSpec((1, St, D), lambda b: (b, 0, 0)),
        compiler_params=pltpu.CompilerParams(
            dimension_semantics=("parallel",),
            vmem_limit_bytes=32 * 1024 * 1024,
        ),
    )(x, encoder_output, tgt_mask, src_mask, *weight_args)


# ------------------------------- param init --------------------------------- #

def init_params(key, d_model, d_ff):
    ks = jax.random.split(key, 10)

    def lin(k, din, dout):
        return 0.02 * jax.random.normal(k, (din, dout), jnp.float32)

    def attn_params(k):
        k0, k1, k2, k3 = jax.random.split(k, 4)
        return {
            "wq": lin(k0, d_model, d_model), "bq": jnp.zeros((d_model,), jnp.float32),
            "wk": lin(k1, d_model, d_model), "bk": jnp.zeros((d_model,), jnp.float32),
            "wv": lin(k2, d_model, d_model), "bv": jnp.zeros((d_model,), jnp.float32),
            "wo": lin(k3, d_model, d_model), "bo": jnp.zeros((d_model,), jnp.float32),
        }

    return {
        "self_attn": attn_params(ks[0]),
        "cross_attn": attn_params(ks[1]),
        "ffn": {
            "w1": lin(ks[2], d_model, d_ff), "b1": jnp.zeros((d_ff,), jnp.float32),
            "w2": lin(ks[3], d_ff, d_model), "b2": jnp.zeros((d_model,), jnp.float32),
        },
        "ln1_g": jnp.ones((d_model,), jnp.float32), "ln1_b": jnp.zeros((d_model,), jnp.float32),
        "ln2_g": jnp.ones((d_model,), jnp.float32), "ln2_b": jnp.zeros((d_model,), jnp.float32),
        "ln3_g": jnp.ones((d_model,), jnp.float32), "ln3_b": jnp.zeros((d_model,), jnp.float32),
    }


def prepare_fused_params(params, num_heads, d_model):
    """Fuse QKV / KV weights, fold 1/sqrt(Dh) into Wq, cast weights to bf16."""
    Dh = d_model // num_heads
    scale = 1.0 / math.sqrt(Dh)
    sa, ca, ff = params["self_attn"], params["cross_attn"], params["ffn"]

    def bf16(w):
        return w.astype(jnp.bfloat16)

    def row(b):
        return b.reshape(1, -1).astype(jnp.float32)

    return {
        # self-attention: fused [Wq*scale | Wk | Wv]
        "sa_wqkv": bf16(jnp.concatenate(
            [sa["wq"] * scale, sa["wk"], sa["wv"]], axis=1)),
        "sa_bqkv": row(jnp.concatenate([sa["bq"] * scale, sa["bk"], sa["bv"]])),
        "sa_wo": bf16(sa["wo"]), "sa_bo": row(sa["bo"]),
        # cross-attention: Q from decoder stream, fused [Wk | Wv] from encoder
        "ca_wq": bf16(ca["wq"] * scale), "ca_bq": row(ca["bq"] * scale),
        "ca_wkv": bf16(jnp.concatenate([ca["wk"], ca["wv"]], axis=1)),
        "ca_bkv": row(jnp.concatenate([ca["bk"], ca["bv"]])),
        "ca_wo": bf16(ca["wo"]), "ca_bo": row(ca["bo"]),
        # feed-forward
        "ff_w1": bf16(ff["w1"]), "ff_b1": row(ff["b1"]),
        "ff_w2": bf16(ff["w2"]), "ff_b2": row(ff["b2"]),
        # layer norms packed as (3, D)
        "ln_g": jnp.stack([params["ln1_g"], params["ln2_g"], params["ln3_g"]]),
        "ln_b": jnp.stack([params["ln1_b"], params["ln2_b"], params["ln3_b"]]),
    }


# ----------------------------------- main ------------------------------------ #

if __name__ == "__main__":
    B, S_tgt, S_src = 2, 8, 8
    d_model, num_heads, d_ff = 32, 4, 64

    key = jax.random.PRNGKey(0)
    k_x, k_enc, k_p = jax.random.split(key, 3)

    x = jax.random.normal(k_x, (B, S_tgt, d_model), jnp.float32)
    enc = jax.random.normal(k_enc, (B, S_src, d_model), jnp.float32)

    # causal mask for self-attention, all-ones mask for cross-attention
    tgt_mask = jnp.tril(jnp.ones((S_tgt, S_tgt), jnp.float32))
    tgt_mask = jnp.broadcast_to(tgt_mask, (B, S_tgt, S_tgt))
    src_mask = jnp.ones((B, S_tgt, S_src), jnp.float32)

    params = init_params(k_p, d_model, d_ff)
    fused = prepare_fused_params(params, num_heads, d_model)

    out = decoder_block(x, enc, tgt_mask, src_mask, fused, num_heads)
    out = jax.block_until_ready(out)
    assert out.shape == (B, S_tgt, d_model)
    assert jnp.all(jnp.isfinite(out))
    print("KERNEL_OK")
</pallas_src>

<mosaic_0001>
module attributes {stable_mosaic.version = 11 : i64} {
  func.func @_decoder_block_kernel(%arg0: i32, %arg1: memref<1x8x32xf32, #tpu.memory_space<vmem>>, %arg2: memref<1x8x32xf32, #tpu.memory_space<vmem>>, %arg3: memref<1x8x8xf32, #tpu.memory_space<vmem>>, %arg4: memref<1x8x8xf32, #tpu.memory_space<vmem>>, %arg5: memref<32x96xbf16, #tpu.memory_space<vmem>>, %arg6: memref<1x96xf32, #tpu.memory_space<vmem>>, %arg7: memref<32x32xbf16, #tpu.memory_space<vmem>>, %arg8: memref<1x32xf32, #tpu.memory_space<vmem>>, %arg9: memref<32x32xbf16, #tpu.memory_space<vmem>>, %arg10: memref<1x32xf32, #tpu.memory_space<vmem>>, %arg11: memref<32x64xbf16, #tpu.memory_space<vmem>>, %arg12: memref<1x64xf32, #tpu.memory_space<vmem>>, %arg13: memref<32x32xbf16, #tpu.memory_space<vmem>>, %arg14: memref<1x32xf32, #tpu.memory_space<vmem>>, %arg15: memref<32x64xbf16, #tpu.memory_space<vmem>>, %arg16: memref<1x64xf32, #tpu.memory_space<vmem>>, %arg17: memref<64x32xbf16, #tpu.memory_space<vmem>>, %arg18: memref<1x32xf32, #tpu.memory_space<vmem>>, %arg19: memref<3x32xf32, #tpu.memory_space<vmem>>, %arg20: memref<3x32xf32, #tpu.memory_space<vmem>>, %arg21: memref<1x8x32xf32, #tpu.memory_space<vmem>>) attributes {dimension_semantics = [#tpu.dimension_semantics<parallel>], iteration_bounds = array<i64: 2>, scalar_prefetch = 0 : i64, scratch_operands = 0 : i64, tpu.core_type = #tpu.core_type<tc>, window_params = [{transform_indices = @transform_0, window_bounds = array<i64: 1, 8, 32>}, {transform_indices = @transform_1, window_bounds = array<i64: 1, 8, 32>}, {transform_indices = @transform_2, window_bounds = array<i64: 1, 8, 8>}, {transform_indices = @transform_3, window_bounds = array<i64: 1, 8, 8>}, {pipeline_mode = #tpu.pipeline_mode<synchronous>, transform_indices = @transform_4, window_bounds = array<i64: 32, 96>}, {pipeline_mode = #tpu.pipeline_mode<synchronous>, transform_indices = @transform_5, window_bounds = array<i64: 1, 96>}, {pipeline_mode = #tpu.pipeline_mode<synchronous>, transform_indices = @transform_6, window_bounds = array<i64: 32, 32>}, {pipeline_mode = #tpu.pipeline_mode<synchronous>, transform_indices = @transform_7, window_bounds = array<i64: 1, 32>}, {pipeline_mode = #tpu.pipeline_mode<synchronous>, transform_indices = @transform_8, window_bounds = array<i64: 32, 32>}, {pipeline_mode = #tpu.pipeline_mode<synchronous>, transform_indices = @transform_9, window_bounds = array<i64: 1, 32>}, {pipeline_mode = #tpu.pipeline_mode<synchronous>, transform_indices = @transform_10, window_bounds = array<i64: 32, 64>}, {pipeline_mode = #tpu.pipeline_mode<synchronous>, transform_indices = @transform_11, window_bounds = array<i64: 1, 64>}, {pipeline_mode = #tpu.pipeline_mode<synchronous>, transform_indices = @transform_12, window_bounds = array<i64: 32, 32>}, {pipeline_mode = #tpu.pipeline_mode<synchronous>, transform_indices = @transform_13, window_bounds = array<i64: 1, 32>}, {pipeline_mode = #tpu.pipeline_mode<synchronous>, transform_indices = @transform_14, window_bounds = array<i64: 32, 64>}, {pipeline_mode = #tpu.pipeline_mode<synchronous>, transform_indices = @transform_15, window_bounds = array<i64: 1, 64>}, {pipeline_mode = #tpu.pipeline_mode<synchronous>, transform_indices = @transform_16, window_bounds = array<i64: 64, 32>}, {pipeline_mode = #tpu.pipeline_mode<synchronous>, transform_indices = @transform_17, window_bounds = array<i64: 1, 32>}, {pipeline_mode = #tpu.pipeline_mode<synchronous>, transform_indices = @transform_18, window_bounds = array<i64: 3, 32>}, {pipeline_mode = #tpu.pipeline_mode<synchronous>, transform_indices = @transform_19, window_bounds = array<i64: 3, 32>}, {transform_indices = @transform_20, window_bounds = array<i64: 1, 8, 32>}]} {
    %c0 = arith.constant 0 : index
    %c0_0 = arith.constant 0 : index
    %c0_1 = arith.constant 0 : index
    %0 = vector.load %arg1[%c0, %c0_0, %c0_1] : memref<1x8x32xf32, #tpu.memory_space<vmem>>, vector<1x8x32xf32>
    %1 = vector.shape_cast %0 : vector<1x8x32xf32> to vector<8x32xf32>
    %c0_2 = arith.constant 0 : index
    %c0_3 = arith.constant 0 : index
    %c0_4 = arith.constant 0 : index
    %2 = vector.load %arg2[%c0_2, %c0_3, %c0_4] : memref<1x8x32xf32, #tpu.memory_space<vmem>>, vector<1x8x32xf32>
    %3 = vector.shape_cast %2 : vector<1x8x32xf32> to vector<8x32xf32>
    %4 = arith.truncf %1 : vector<8x32xf32> to vector<8x32xbf16>
    %c0_5 = arith.constant 0 : index
    %c0_6 = arith.constant 0 : index
    %5 = vector.load %arg5[%c0_5, %c0_6] : memref<32x96xbf16, #tpu.memory_space<vmem>>, vector<32x96xbf16>
    %cst = arith.constant dense<0.000000e+00> : vector<8x96xf32>
    %6 = tpu.matmul %4, %5, %cst {dimension_numbers = #tpu.dot_dimension_numbers<[1], [0], [0], [1], [0, 0, 1, 1], [], []>} : vector<8x32xbf16>, vector<32x96xbf16>, vector<8x96xf32> -> vector<8x96xf32>
    %c0_7 = arith.constant 0 : index
    %c0_8 = arith.constant 0 : index
    %7 = vector.load %arg6[%c0_7, %c0_8] : memref<1x96xf32, #tpu.memory_space<vmem>>, vector<1x96xf32>
    %8 = vector.broadcast %7 : vector<1x96xf32> to vector<8x96xf32>
    %9 = arith.addf %6, %8 : vector<8x96xf32>
    %10 = vector.extract_strided_slice %9 {offsets = [0, 0], sizes = [8, 32], strides = [1, 1]} : vector<8x96xf32> to vector<8x32xf32>
    %11 = vector.extract_strided_slice %9 {offsets = [0, 32], sizes = [8, 32], strides = [1, 1]} : vector<8x96xf32> to vector<8x32xf32>
    %12 = vector.extract_strided_slice %9 {offsets = [0, 64], sizes = [8, 32], strides = [1, 1]} : vector<8x96xf32> to vector<8x32xf32>
    %c0_9 = arith.constant 0 : index
    %c0_10 = arith.constant 0 : index
    %c0_11 = arith.constant 0 : index
    %13 = vector.load %arg3[%c0_9, %c0_10, %c0_11] : memref<1x8x8xf32, #tpu.memory_space<vmem>>, vector<1x8x8xf32>
    %14 = vector.shape_cast %13 : vector<1x8x8xf32> to vector<8x8xf32>
    %15 = vector.extract_strided_slice %10 {offsets = [0, 0], sizes = [8, 8], strides = [1, 1]} : vector<8x32xf32> to vector<8x8xf32>
    %16 = arith.truncf %15 : vector<8x8xf32> to vector<8x8xbf16>
    %17 = vector.extract_strided_slice %11 {offsets = [0, 0], sizes = [8, 8], strides = [1, 1]} : vector<8x32xf32> to vector<8x8xf32>
    %18 = arith.truncf %17 : vector<8x8xf32> to vector<8x8xbf16>
    %19 = vector.extract_strided_slice %12 {offsets = [0, 0], sizes = [8, 8], strides = [1, 1]} : vector<8x32xf32> to vector<8x8xf32>
    %20 = arith.truncf %19 : vector<8x8xf32> to vector<8x8xbf16>
    %cst_12 = arith.constant dense<0.000000e+00> : vector<8x8xf32>
    %21 = tpu.matmul %16, %18, %cst_12 {dimension_numbers = #tpu.dot_dimension_numbers<[1], [1], [0], [0], [0, 0, 1, 0], [], []>} : vector<8x8xbf16>, vector<8x8xbf16>, vector<8x8xf32> -> vector<8x8xf32>
    %cst_13 = arith.constant 0.000000e+00 : f32
    %22 = vector.broadcast %cst_13 : f32 to vector<8x8xf32>
    %23 = arith.cmpf oeq, %14, %22 : vector<8x8xf32>
    %cst_14 = arith.constant -1.000000e+09 : f32
    %24 = vector.broadcast %cst_14 : f32 to vector<8x8xf32>
    %25 = arith.select %23, %24, %21 : vector<8x8xi1>, vector<8x8xf32>
    %cst_15 = arith.constant dense<0xFF800000> : vector<8xf32>
    %26 = vector.multi_reduction <maximumf>, %25, %cst_15 [1] : vector<8x8xf32> to vector<8xf32>
    %27 = vector.shape_cast %26 : vector<8xf32> to vector<8x1xf32>
    %28 = vector.broadcast %27 : vector<8x1xf32> to vector<8x8xf32>
    %29 = arith.subf %25, %28 : vector<8x8xf32>
    %30 = math.exp %29 : vector<8x8xf32>
    %cst_16 = arith.constant dense<0.000000e+00> : vector<8xf32>
    %31 = vector.multi_reduction <add>, %30, %cst_16 [1] : vector<8x8xf32> to vector<8xf32>
    %32 = vector.shape_cast %31 : vector<8xf32> to vector<8x1xf32>
    %33 = tpu.reciprocal %32 {approx = true} : vector<8x1xf32> -> vector<8x1xf32>
    %34 = vector.broadcast %33 : vector<8x1xf32> to vector<8x8xf32>
    %35 = arith.mulf %30, %34 : vector<8x8xf32>
    %36 = arith.truncf %35 : vector<8x8xf32> to vector<8x8xbf16>
    %cst_17 = arith.constant dense<0.000000e+00> : vector<8x8xf32>
    %37 = tpu.matmul %36, %20, %cst_17 {dimension_numbers = #tpu.dot_dimension_numbers<[1], [0], [0], [1], [0, 0, 1, 1], [], []>} : vector<8x8xbf16>, vector<8x8xbf16>, vector<8x8xf32> -> vector<8x8xf32>
    %38 = vector.extract_strided_slice %10 {offsets = [0, 8], sizes = [8, 8], strides = [1, 1]} : vector<8x32xf32> to vector<8x8xf32>
    %39 = arith.truncf %38 : vector<8x8xf32> to vector<8x8xbf16>
    %40 = vector.extract_strided_slice %11 {offsets = [0, 8], sizes = [8, 8], strides = [1, 1]} : vector<8x32xf32> to vector<8x8xf32>
    %41 = arith.truncf %40 : vector<8x8xf32> to vector<8x8xbf16>
    %42 = vector.extract_strided_slice %12 {offsets = [0, 8], sizes = [8, 8], strides = [1, 1]} : vector<8x32xf32> to vector<8x8xf32>
    %43 = arith.truncf %42 : vector<8x8xf32> to vector<8x8xbf16>
    %cst_18 = arith.constant dense<0.000000e+00> : vector<8x8xf32>
    %44 = tpu.matmul %39, %41, %cst_18 {dimension_numbers = #tpu.dot_dimension_numbers<[1], [1], [0], [0], [0, 0, 1, 0], [], []>} : vector<8x8xbf16>, vector<8x8xbf16>, vector<8x8xf32> -> vector<8x8xf32>
    %cst_19 = arith.constant 0.000000e+00 : f32
    %45 = vector.broadcast %cst_19 : f32 to vector<8x8xf32>
    %46 = arith.cmpf oeq, %14, %45 : vector<8x8xf32>
    %cst_20 = arith.constant -1.000000e+09 : f32
    %47 = vector.broadcast %cst_20 : f32 to vector<8x8xf32>
    %48 = arith.select %46, %47, %44 : vector<8x8xi1>, vector<8x8xf32>
    %cst_21 = arith.constant dense<0xFF800000> : vector<8xf32>
    %49 = vector.multi_reduction <maximumf>, %48, %cst_21 [1] : vector<8x8xf32> to vector<8xf32>
    %50 = vector.shape_cast %49 : vector<8xf32> to vector<8x1xf32>
    %51 = vector.broadcast %50 : vector<8x1xf32> to vector<8x8xf32>
    %52 = arith.subf %48, %51 : vector<8x8xf32>
    %53 = math.exp %52 : vector<8x8xf32>
    %cst_22 = arith.constant dense<0.000000e+00> : vector<8xf32>
    %54 = vector.multi_reduction <add>, %53, %cst_22 [1] : vector<8x8xf32> to vector<8xf32>
    %55 = vector.shape_cast %54 : vector<8xf32> to vector<8x1xf32>
    %56 = tpu.reciprocal %55 {approx = true} : vector<8x1xf32> -> vector<8x1xf32>
    %57 = vector.broadcast %56 : vector<8x1xf32> to vector<8x8xf32>
    %58 = arith.mulf %53, %57 : vector<8x8xf32>
    %59 = arith.truncf %58 : vector<8x8xf32> to vector<8x8xbf16>
    %cst_23 = arith.constant dense<0.000000e+00> : vector<8x8xf32>
    %60 = tpu.matmul %59, %43, %cst_23 {dimension_numbers = #tpu.dot_dimension_numbers<[1], [0], [0], [1], [0, 0, 1, 1], [], []>} : vector<8x8xbf16>, vector<8x8xbf16>, vector<8x8xf32> -> vector<8x8xf32>
    %61 = vector.extract_strided_slice %10 {offsets = [0, 16], sizes = [8, 8], strides = [1, 1]} : vector<8x32xf32> to vector<8x8xf32>
    %62 = arith.truncf %61 : vector<8x8xf32> to vector<8x8xbf16>
    %63 = vector.extract_strided_slice %11 {offsets = [0, 16], sizes = [8, 8], strides = [1, 1]} : vector<8x32xf32> to vector<8x8xf32>
    %64 = arith.truncf %63 : vector<8x8xf32> to vector<8x8xbf16>
    %65 = vector.extract_strided_slice %12 {offsets = [0, 16], sizes = [8, 8], strides = [1, 1]} : vector<8x32xf32> to vector<8x8xf32>
    %66 = arith.truncf %65 : vector<8x8xf32> to vector<8x8xbf16>
    %cst_24 = arith.constant dense<0.000000e+00> : vector<8x8xf32>
    %67 = tpu.matmul %62, %64, %cst_24 {dimension_numbers = #tpu.dot_dimension_numbers<[1], [1], [0], [0], [0, 0, 1, 0], [], []>} : vector<8x8xbf16>, vector<8x8xbf16>, vector<8x8xf32> -> vector<8x8xf32>
    %cst_25 = arith.constant 0.000000e+00 : f32
    %68 = vector.broadcast %cst_25 : f32 to vector<8x8xf32>
    %69 = arith.cmpf oeq, %14, %68 : vector<8x8xf32>
    %cst_26 = arith.constant -1.000000e+09 : f32
    %70 = vector.broadcast %cst_26 : f32 to vector<8x8xf32>
    %71 = arith.select %69, %70, %67 : vector<8x8xi1>, vector<8x8xf32>
    %cst_27 = arith.constant dense<0xFF800000> : vector<8xf32>
    %72 = vector.multi_reduction <maximumf>, %71, %cst_27 [1] : vector<8x8xf32> to vector<8xf32>
    %73 = vector.shape_cast %72 : vector<8xf32> to vector<8x1xf32>
    %74 = vector.broadcast %73 : vector<8x1xf32> to vector<8x8xf32>
    %75 = arith.subf %71, %74 : vector<8x8xf32>
    %76 = math.exp %75 : vector<8x8xf32>
    %cst_28 = arith.constant dense<0.000000e+00> : vector<8xf32>
    %77 = vector.multi_reduction <add>, %76, %cst_28 [1] : vector<8x8xf32> to vector<8xf32>
    %78 = vector.shape_cast %77 : vector<8xf32> to vector<8x1xf32>
    %79 = tpu.reciprocal %78 {approx = true} : vector<8x1xf32> -> vector<8x1xf32>
    %80 = vector.broadcast %79 : vector<8x1xf32> to vector<8x8xf32>
    %81 = arith.mulf %76, %80 : vector<8x8xf32>
    %82 = arith.truncf %81 : vector<8x8xf32> to vector<8x8xbf16>
    %cst_29 = arith.constant dense<0.000000e+00> : vector<8x8xf32>
    %83 = tpu.matmul %82, %66, %cst_29 {dimension_numbers = #tpu.dot_dimension_numbers<[1], [0], [0], [1], [0, 0, 1, 1], [], []>} : vector<8x8xbf16>, vector<8x8xbf16>, vector<8x8xf32> -> vector<8x8xf32>
    %84 = vector.extract_strided_slice %10 {offsets = [0, 24], sizes = [8, 8], strides = [1, 1]} : vector<8x32xf32> to vector<8x8xf32>
    %85 = arith.truncf %84 : vector<8x8xf32> to vector<8x8xbf16>
    %86 = vector.extract_strided_slice %11 {offsets = [0, 24], sizes = [8, 8], strides = [1, 1]} : vector<8x32xf32> to vector<8x8xf32>
    %87 = arith.truncf %86 : vector<8x8xf32> to vector<8x8xbf16>
    %88 = vector.extract_strided_slice %12 {offsets = [0, 24], sizes = [8, 8], strides = [1, 1]} : vector<8x32xf32> to vector<8x8xf32>
    %89 = arith.truncf %88 : vector<8x8xf32> to vector<8x8xbf16>
    %cst_30 = arith.constant dense<0.000000e+00> : vector<8x8xf32>
    %90 = tpu.matmul %85, %87, %cst_30 {dimension_numbers = #tpu.dot_dimension_numbers<[1], [1], [0], [0], [0, 0, 1, 0], [], []>} : vector<8x8xbf16>, vector<8x8xbf16>, vector<8x8xf32> -> vector<8x8xf32>
    %cst_31 = arith.constant 0.000000e+00 : f32
    %91 = vector.broadcast %cst_31 : f32 to vector<8x8xf32>
    %92 = arith.cmpf oeq, %14, %91 : vector<8x8xf32>
    %cst_32 = arith.constant -1.000000e+09 : f32
    %93 = vector.broadcast %cst_32 : f32 to vector<8x8xf32>
    %94 = arith.select %92, %93, %90 : vector<8x8xi1>, vector<8x8xf32>
    %cst_33 = arith.constant dense<0xFF800000> : vector<8xf32>
    %95 = vector.multi_reduction <maximumf>, %94, %cst_33 [1] : vector<8x8xf32> to vector<8xf32>
    %96 = vector.shape_cast %95 : vector<8xf32> to vector<8x1xf32>
    %97 = vector.broadcast %96 : vector<8x1xf32> to vector<8x8xf32>
    %98 = arith.subf %94, %97 : vector<8x8xf32>
    %99 = math.exp %98 : vector<8x8xf32>
    %cst_34 = arith.constant dense<0.000000e+00> : vector<8xf32>
    %100 = vector.multi_reduction <add>, %99, %cst_34 [1] : vector<8x8xf32> to vector<8xf32>
    %101 = vector.shape_cast %100 : vector<8xf32> to vector<8x1xf32>
    %102 = tpu.reciprocal %101 {approx = true} : vector<8x1xf32> -> vector<8x1xf32>
    %103 = vector.broadcast %102 : vector<8x1xf32> to vector<8x8xf32>
    %104 = arith.mulf %99, %103 : vector<8x8xf32>
    %105 = arith.truncf %104 : vector<8x8xf32> to vector<8x8xbf16>
    %cst_35 = arith.constant dense<0.000000e+00> : vector<8x8xf32>
    %106 = tpu.matmul %105, %89, %cst_35 {dimension_numbers = #tpu.dot_dimension_numbers<[1], [0], [0], [1], [0, 0, 1, 1], [], []>} : vector<8x8xbf16>, vector<8x8xbf16>, vector<8x8xf32> -> vector<8x8xf32>
    %107 = tpu.concatenate %37, %60, %83, %106 in 1 : vector<8x8xf32>, vector<8x8xf32>, vector<8x8xf32>, vector<8x8xf32> -> vector<8x32xf32>
    %108 = arith.truncf %107 : vector<8x32xf32> to vector<8x32xbf16>
    %c0_36 = arith.constant 0 : index
    %c0_37 = arith.constant 0 : index
    %109 = vector.load %arg7[%c0_36, %c0_37] : memref<32x32xbf16, #tpu.memory_space<vmem>>, vector<32x32xbf16>
    %cst_38 = arith.constant dense<0.000000e+00> : vector<8x32xf32>
    %110 = tpu.matmul %108, %109, %cst_38 {dimension_numbers = #tpu.dot_dimension_numbers<[1], [0], [0], [1], [0, 0, 1, 1], [], []>} : vector<8x32xbf16>, vector<32x32xbf16>, vector<8x32xf32> -> vector<8x32xf32>
    %c0_39 = arith.constant 0 : index
    %c0_40 = arith.constant 0 : index
    %111 = vector.load %arg8[%c0_39, %c0_40] : memref<1x32xf32, #tpu.memory_space<vmem>>, vector<1x32xf32>
    %112 = vector.broadcast %111 : vector<1x32xf32> to vector<8x32xf32>
    %113 = arith.addf %110, %112 : vector<8x32xf32>
    %114 = arith.addf %1, %113 : vector<8x32xf32>
    %cst_41 = arith.constant dense<0.000000e+00> : vector<8xf32>
    %115 = vector.multi_reduction <add>, %114, %cst_41 [1] : vector<8x32xf32> to vector<8xf32>
    %116 = vector.shape_cast %115 : vector<8xf32> to vector<8x1xf32>
    %cst_42 = arith.constant 3.200000e+01 : f32
    %117 = vector.broadcast %cst_42 : f32 to vector<8x1xf32>
    %118 = arith.divf %116, %117 : vector<8x1xf32>
    %119 = vector.broadcast %118 : vector<8x1xf32> to vector<8x32xf32>
    %120 = arith.subf %114, %119 : vector<8x32xf32>
    %121 = vector.broadcast %118 : vector<8x1xf32> to vector<8x32xf32>
    %122 = arith.subf %114, %121 : vector<8x32xf32>
    %123 = arith.mulf %120, %122 : vector<8x32xf32>
    %cst_43 = arith.constant dense<0.000000e+00> : vector<8xf32>
    %124 = vector.multi_reduction <add>, %123, %cst_43 [1] : vector<8x32xf32> to vector<8xf32>
    %125 = vector.shape_cast %124 : vector<8xf32> to vector<8x1xf32>
    %cst_44 = arith.constant 3.200000e+01 : f32
    %126 = vector.broadcast %cst_44 : f32 to vector<8x1xf32>
    %127 = arith.divf %125, %126 : vector<8x1xf32>
    %128 = vector.broadcast %118 : vector<8x1xf32> to vector<8x32xf32>
    %129 = arith.subf %114, %128 : vector<8x32xf32>
    %cst_45 = arith.constant 9.99999974E-6 : f32
    %130 = vector.broadcast %cst_45 : f32 to vector<8x1xf32>
    %131 = arith.addf %127, %130 : vector<8x1xf32>
    %132 = math.rsqrt %131 : vector<8x1xf32>
    %133 = vector.broadcast %132 : vector<8x1xf32> to vector<8x32xf32>
    %134 = arith.mulf %129, %133 : vector<8x32xf32>
    %c0_46 = arith.constant 0 : index
    %c0_47 = arith.constant 0 : index
    %135 = vector.load %arg19[%c0_46, %c0_47] : memref<3x32xf32, #tpu.memory_space<vmem>>, vector<1x32xf32>
    %c0_48 = arith.constant 0 : index
    %c0_49 = arith.constant 0 : index
    %136 = vector.load %arg20[%c0_48, %c0_49] : memref<3x32xf32, #tpu.memory_space<vmem>>, vector<1x32xf32>
    %137 = vector.broadcast %135 : vector<1x32xf32> to vector<8x32xf32>
    %138 = arith.mulf %134, %137 : vector<8x32xf32>
    %139 = vector.broadcast %136 : vector<1x32xf32> to vector<8x32xf32>
    %140 = arith.addf %138, %139 : vector<8x32xf32>
    %141 = arith.truncf %140 : vector<8x32xf32> to vector<8x32xbf16>
    %c0_50 = arith.constant 0 : index
    %c0_51 = arith.constant 0 : index
    %142 = vector.load %arg9[%c0_50, %c0_51] : memref<32x32xbf16, #tpu.memory_space<vmem>>, vector<32x32xbf16>
    %cst_52 = arith.constant dense<0.000000e+00> : vector<8x32xf32>
    %143 = tpu.matmul %141, %142, %cst_52 {dimension_numbers = #tpu.dot_dimension_numbers<[1], [0], [0], [1], [0, 0, 1, 1], [], []>} : vector<8x32xbf16>, vector<32x32xbf16>, vector<8x32xf32> -> vector<8x32xf32>
    %c0_53 = arith.constant 0 : index
    %c0_54 = arith.constant 0 : index
    %144 = vector.load %arg10[%c0_53, %c0_54] : memref<1x32xf32, #tpu.memory_space<vmem>>, vector<1x32xf32>
    %145 = vector.broadcast %144 : vector<1x32xf32> to vector<8x32xf32>
    %146 = arith.addf %143, %145 : vector<8x32xf32>
    %147 = arith.truncf %3 : vector<8x32xf32> to vector<8x32xbf16>
    %c0_55 = arith.constant 0 : index
    %c0_56 = arith.constant 0 : index
    %148 = vector.load %arg11[%c0_55, %c0_56] : memref<32x64xbf16, #tpu.memory_space<vmem>>, vector<32x64xbf16>
    %cst_57 = arith.constant dense<0.000000e+00> : vector<8x64xf32>
    %149 = tpu.matmul %147, %148, %cst_57 {dimension_numbers = #tpu.dot_dimension_numbers<[1], [0], [0], [1], [0, 0, 1, 1], [], []>} : vector<8x32xbf16>, vector<32x64xbf16>, vector<8x64xf32> -> vector<8x64xf32>
    %c0_58 = arith.constant 0 : index
    %c0_59 = arith.constant 0 : index
    %150 = vector.load %arg12[%c0_58, %c0_59] : memref<1x64xf32, #tpu.memory_space<vmem>>, vector<1x64xf32>
    %151 = vector.broadcast %150 : vector<1x64xf32> to vector<8x64xf32>
    %152 = arith.addf %149, %151 : vector<8x64xf32>
    %153 = vector.extract_strided_slice %152 {offsets = [0, 0], sizes = [8, 32], strides = [1, 1]} : vector<8x64xf32> to vector<8x32xf32>
    %154 = vector.extract_strided_slice %152 {offsets = [0, 32], sizes = [8, 32], strides = [1, 1]} : vector<8x64xf32> to vector<8x32xf32>
    %c0_60 = arith.constant 0 : index
    %c0_61 = arith.constant 0 : index
    %c0_62 = arith.constant 0 : index
    %155 = vector.load %arg4[%c0_60, %c0_61, %c0_62] : memref<1x8x8xf32, #tpu.memory_space<vmem>>, vector<1x8x8xf32>
    %156 = vector.shape_cast %155 : vector<1x8x8xf32> to vector<8x8xf32>
    %157 = vector.extract_strided_slice %146 {offsets = [0, 0], sizes = [8, 8], strides = [1, 1]} : vector<8x32xf32> to vector<8x8xf32>
    %158 = arith.truncf %157 : vector<8x8xf32> to vector<8x8xbf16>
    %159 = vector.extract_strided_slice %153 {offsets = [0, 0], sizes = [8, 8], strides = [1, 1]} : vector<8x32xf32> to vector<8x8xf32>
    %160 = arith.truncf %159 : vector<8x8xf32> to vector<8x8xbf16>
    %161 = vector.extract_strided_slice %154 {offsets = [0, 0], sizes = [8, 8], strides = [1, 1]} : vector<8x32xf32> to vector<8x8xf32>
    %162 = arith.truncf %161 : vector<8x8xf32> to vector<8x8xbf16>
    %cst_63 = arith.constant dense<0.000000e+00> : vector<8x8xf32>
    %163 = tpu.matmul %158, %160, %cst_63 {dimension_numbers = #tpu.dot_dimension_numbers<[1], [1], [0], [0], [0, 0, 1, 0], [], []>} : vector<8x8xbf16>, vector<8x8xbf16>, vector<8x8xf32> -> vector<8x8xf32>
    %cst_64 = arith.constant 0.000000e+00 : f32
    %164 = vector.broadcast %cst_64 : f32 to vector<8x8xf32>
    %165 = arith.cmpf oeq, %156, %164 : vector<8x8xf32>
    %cst_65 = arith.constant -1.000000e+09 : f32
    %166 = vector.broadcast %cst_65 : f32 to vector<8x8xf32>
    %167 = arith.select %165, %166, %163 : vector<8x8xi1>, vector<8x8xf32>
    %cst_66 = arith.constant dense<0xFF800000> : vector<8xf32>
    %168 = vector.multi_reduction <maximumf>, %167, %cst_66 [1] : vector<8x8xf32> to vector<8xf32>
    %169 = vector.shape_cast %168 : vector<8xf32> to vector<8x1xf32>
    %170 = vector.broadcast %169 : vector<8x1xf32> to vector<8x8xf32>
    %171 = arith.subf %167, %170 : vector<8x8xf32>
    %172 = math.exp %171 : vector<8x8xf32>
    %cst_67 = arith.constant dense<0.000000e+00> : vector<8xf32>
    %173 = vector.multi_reduction <add>, %172, %cst_67 [1] : vector<8x8xf32> to vector<8xf32>
    %174 = vector.shape_cast %173 : vector<8xf32> to vector<8x1xf32>
    %175 = tpu.reciprocal %174 {approx = true} : vector<8x1xf32> -> vector<8x1xf32>
    %176 = vector.broadcast %175 : vector<8x1xf32> to vector<8x8xf32>
    %177 = arith.mulf %172, %176 : vector<8x8xf32>
    %178 = arith.truncf %177 : vector<8x8xf32> to vector<8x8xbf16>
    %cst_68 = arith.constant dense<0.000000e+00> : vector<8x8xf32>
    %179 = tpu.matmul %178, %162, %cst_68 {dimension_numbers = #tpu.dot_dimension_numbers<[1], [0], [0], [1], [0, 0, 1, 1], [], []>} : vector<8x8xbf16>, vector<8x8xbf16>, vector<8x8xf32> -> vector<8x8xf32>
    %180 = vector.extract_strided_slice %146 {offsets = [0, 8], sizes = [8, 8], strides = [1, 1]} : vector<8x32xf32> to vector<8x8xf32>
    %181 = arith.truncf %180 : vector<8x8xf32> to vector<8x8xbf16>
    %182 = vector.extract_strided_slice %153 {offsets = [0, 8], sizes = [8, 8], strides = [1, 1]} : vector<8x32xf32> to vector<8x8xf32>
    %183 = arith.truncf %182 : vector<8x8xf32> to vector<8x8xbf16>
    %184 = vector.extract_strided_slice %154 {offsets = [0, 8], sizes = [8, 8], strides = [1, 1]} : vector<8x32xf32> to vector<8x8xf32>
    %185 = arith.truncf %184 : vector<8x8xf32> to vector<8x8xbf16>
    %cst_69 = arith.constant dense<0.000000e+00> : vector<8x8xf32>
    %186 = tpu.matmul %181, %183, %cst_69 {dimension_numbers = #tpu.dot_dimension_numbers<[1], [1], [0], [0], [0, 0, 1, 0], [], []>} : vector<8x8xbf16>, vector<8x8xbf16>, vector<8x8xf32> -> vector<8x8xf32>
    %cst_70 = arith.constant 0.000000e+00 : f32
    %187 = vector.broadcast %cst_70 : f32 to vector<8x8xf32>
    %188 = arith.cmpf oeq, %156, %187 : vector<8x8xf32>
    %cst_71 = arith.constant -1.000000e+09 : f32
    %189 = vector.broadcast %cst_71 : f32 to vector<8x8xf32>
    %190 = arith.select %188, %189, %186 : vector<8x8xi1>, vector<8x8xf32>
    %cst_72 = arith.constant dense<0xFF800000> : vector<8xf32>
    %191 = vector.multi_reduction <maximumf>, %190, %cst_72 [1] : vector<8x8xf32> to vector<8xf32>
    %192 = vector.shape_cast %191 : vector<8xf32> to vector<8x1xf32>
    %193 = vector.broadcast %192 : vector<8x1xf32> to vector<8x8xf32>
    %194 = arith.subf %190, %193 : vector<8x8xf32>
    %195 = math.exp %194 : vector<8x8xf32>
    %cst_73 = arith.constant dense<0.000000e+00> : vector<8xf32>
    %196 = vector.multi_reduction <add>, %195, %cst_73 [1] : vector<8x8xf32> to vector<8xf32>
    %197 = vector.shape_cast %196 : vector<8xf32> to vector<8x1xf32>
    %198 = tpu.reciprocal %197 {approx = true} : vector<8x1xf32> -> vector<8x1xf32>
    %199 = vector.broadcast %198 : vector<8x1xf32> to vector<8x8xf32>
    %200 = arith.mulf %195, %199 : vector<8x8xf32>
    %201 = arith.truncf %200 : vector<8x8xf32> to vector<8x8xbf16>
    %cst_74 = arith.constant dense<0.000000e+00> : vector<8x8xf32>
    %202 = tpu.matmul %201, %185, %cst_74 {dimension_numbers = #tpu.dot_dimension_numbers<[1], [0], [0], [1], [0, 0, 1, 1], [], []>} : vector<8x8xbf16>, vector<8x8xbf16>, vector<8x8xf32> -> vector<8x8xf32>
    %203 = vector.extract_strided_slice %146 {offsets = [0, 16], sizes = [8, 8], strides = [1, 1]} : vector<8x32xf32> to vector<8x8xf32>
    %204 = arith.truncf %203 : vector<8x8xf32> to vector<8x8xbf16>
    %205 = vector.extract_strided_slice %153 {offsets = [0, 16], sizes = [8, 8], strides = [1, 1]} : vector<8x32xf32> to vector<8x8xf32>
    %206 = arith.truncf %205 : vector<8x8xf32> to vector<8x8xbf16>
    %207 = vector.extract_strided_slice %154 {offsets = [0, 16], sizes = [8, 8], strides = [1, 1]} : vector<8x32xf32> to vector<8x8xf32>
    %208 = arith.truncf %207 : vector<8x8xf32> to vector<8x8xbf16>
    %cst_75 = arith.constant dense<0.000000e+00> : vector<8x8xf32>
    %209 = tpu.matmul %204, %206, %cst_75 {dimension_numbers = #tpu.dot_dimension_numbers<[1], [1], [0], [0], [0, 0, 1, 0], [], []>} : vector<8x8xbf16>, vector<8x8xbf16>, vector<8x8xf32> -> vector<8x8xf32>
    %cst_76 = arith.constant 0.000000e+00 : f32
    %210 = vector.broadcast %cst_76 : f32 to vector<8x8xf32>
    %211 = arith.cmpf oeq, %156, %210 : vector<8x8xf32>
    %cst_77 = arith.constant -1.000000e+09 : f32
    %212 = vector.broadcast %cst_77 : f32 to vector<8x8xf32>
    %213 = arith.select %211, %212, %209 : vector<8x8xi1>, vector<8x8xf32>
    %cst_78 = arith.constant dense<0xFF800000> : vector<8xf32>
    %214 = vector.multi_reduction <maximumf>, %213, %cst_78 [1] : vector<8x8xf32> to vector<8xf32>
    %215 = vector.shape_cast %214 : vector<8xf32> to vector<8x1xf32>
    %216 = vector.broadcast %215 : vector<8x1xf32> to vector<8x8xf32>
    %217 = arith.subf %213, %216 : vector<8x8xf32>
    %218 = math.exp %217 : vector<8x8xf32>
    %cst_79 = arith.constant dense<0.000000e+00> : vector<8xf32>
    %219 = vector.multi_reduction <add>, %218, %cst_79 [1] : vector<8x8xf32> to vector<8xf32>
    %220 = vector.shape_cast %219 : vector<8xf32> to vector<8x1xf32>
    %221 = tpu.reciprocal %220 {approx = true} : vector<8x1xf32> -> vector<8x1xf32>
    %222 = vector.broadcast %221 : vector<8x1xf32> to vector<8x8xf32>
    %223 = arith.mulf %218, %222 : vector<8x8xf32>
    %224 = arith.truncf %223 : vector<8x8xf32> to vector<8x8xbf16>
    %cst_80 = arith.constant dense<0.000000e+00> : vector<8x8xf32>
    %225 = tpu.matmul %224, %208, %cst_80 {dimension_numbers = #tpu.dot_dimension_numbers<[1], [0], [0], [1], [0, 0, 1, 1], [], []>} : vector<8x8xbf16>, vector<8x8xbf16>, vector<8x8xf32> -> vector<8x8xf32>
    %226 = vector.extract_strided_slice %146 {offsets = [0, 24], sizes = [8, 8], strides = [1, 1]} : vector<8x32xf32> to vector<8x8xf32>
    %227 = arith.truncf %226 : vector<8x8xf32> to vector<8x8xbf16>
    %228 = vector.extract_strided_slice %153 {offsets = [0, 24], sizes = [8, 8], strides = [1, 1]} : vector<8x32xf32> to vector<8x8xf32>
    %229 = arith.truncf %228 : vector<8x8xf32> to vector<8x8xbf16>
    %230 = vector.extract_strided_slice %154 {offsets = [0, 24], sizes = [8, 8], strides = [1, 1]} : vector<8x32xf32> to vector<8x8xf32>
    %231 = arith.truncf %230 : vector<8x8xf32> to vector<8x8xbf16>
    %cst_81 = arith.constant dense<0.000000e+00> : vector<8x8xf32>
    %232 = tpu.matmul %227, %229, %cst_81 {dimension_numbers = #tpu.dot_dimension_numbers<[1], [1], [0], [0], [0, 0, 1, 0], [], []>} : vector<8x8xbf16>, vector<8x8xbf16>, vector<8x8xf32> -> vector<8x8xf32>
    %cst_82 = arith.constant 0.000000e+00 : f32
    %233 = vector.broadcast %cst_82 : f32 to vector<8x8xf32>
    %234 = arith.cmpf oeq, %156, %233 : vector<8x8xf32>
    %cst_83 = arith.constant -1.000000e+09 : f32
    %235 = vector.broadcast %cst_83 : f32 to vector<8x8xf32>
    %236 = arith.select %234, %235, %232 : vector<8x8xi1>, vector<8x8xf32>
    %cst_84 = arith.constant dense<0xFF800000> : vector<8xf32>
    %237 = vector.multi_reduction <maximumf>, %236, %cst_84 [1] : vector<8x8xf32> to vector<8xf32>
    %238 = vector.shape_cast %237 : vector<8xf32> to vector<8x1xf32>
    %239 = vector.broadcast %238 : vector<8x1xf32> to vector<8x8xf32>
    %240 = arith.subf %236, %239 : vector<8x8xf32>
    %241 = math.exp %240 : vector<8x8xf32>
    %cst_85 = arith.constant dense<0.000000e+00> : vector<8xf32>
    %242 = vector.multi_reduction <add>, %241, %cst_85 [1] : vector<8x8xf32> to vector<8xf32>
    %243 = vector.shape_cast %242 : vector<8xf32> to vector<8x1xf32>
    %244 = tpu.reciprocal %243 {approx = true} : vector<8x1xf32> -> vector<8x1xf32>
    %245 = vector.broadcast %244 : vector<8x1xf32> to vector<8x8xf32>
    %246 = arith.mulf %241, %245 : vector<8x8xf32>
    %247 = arith.truncf %246 : vector<8x8xf32> to vector<8x8xbf16>
    %cst_86 = arith.constant dense<0.000000e+00> : vector<8x8xf32>
    %248 = tpu.matmul %247, %231, %cst_86 {dimension_numbers = #tpu.dot_dimension_numbers<[1], [0], [0], [1], [0, 0, 1, 1], [], []>} : vector<8x8xbf16>, vector<8x8xbf16>, vector<8x8xf32> -> vector<8x8xf32>
    %249 = tpu.concatenate %179, %202, %225, %248 in 1 : vector<8x8xf32>, vector<8x8xf32>, vector<8x8xf32>, vector<8x8xf32> -> vector<8x32xf32>
    %250 = arith.truncf %249 : vector<8x32xf32> to vector<8x32xbf16>
    %c0_87 = arith.constant 0 : index
    %c0_88 = arith.constant 0 : index
    %251 = vector.load %arg13[%c0_87, %c0_88] : memref<32x32xbf16, #tpu.memory_space<vmem>>, vector<32x32xbf16>
    %cst_89 = arith.constant dense<0.000000e+00> : vector<8x32xf32>
    %252 = tpu.matmul %250, %251, %cst_89 {dimension_numbers = #tpu.dot_dimension_numbers<[1], [0], [0], [1], [0, 0, 1, 1], [], []>} : vector<8x32xbf16>, vector<32x32xbf16>, vector<8x32xf32> -> vector<8x32xf32>
    %c0_90 = arith.constant 0 : index
    %c0_91 = arith.constant 0 : index
    %253 = vector.load %arg14[%c0_90, %c0_91] : memref<1x32xf32, #tpu.memory_space<vmem>>, vector<1x32xf32>
    %254 = vector.broadcast %253 : vector<1x32xf32> to vector<8x32xf32>
    %255 = arith.addf %252, %254 : vector<8x32xf32>
    %256 = arith.addf %140, %255 : vector<8x32xf32>
    %cst_92 = arith.constant dense<0.000000e+00> : vector<8xf32>
    %257 = vector.multi_reduction <add>, %256, %cst_92 [1] : vector<8x32xf32> to vector<8xf32>
    %258 = vector.shape_cast %257 : vector<8xf32> to vector<8x1xf32>
    %cst_93 = arith.constant 3.200000e+01 : f32
    %259 = vector.broadcast %cst_93 : f32 to vector<8x1xf32>
    %260 = arith.divf %258, %259 : vector<8x1xf32>
    %261 = vector.broadcast %260 : vector<8x1xf32> to vector<8x32xf32>
    %262 = arith.subf %256, %261 : vector<8x32xf32>
    %263 = vector.broadcast %260 : vector<8x1xf32> to vector<8x32xf32>
    %264 = arith.subf %256, %263 : vector<8x32xf32>
    %265 = arith.mulf %262, %264 : vector<8x32xf32>
    %cst_94 = arith.constant dense<0.000000e+00> : vector<8xf32>
    %266 = vector.multi_reduction <add>, %265, %cst_94 [1] : vector<8x32xf32> to vector<8xf32>
    %267 = vector.shape_cast %266 : vector<8xf32> to vector<8x1xf32>
    %cst_95 = arith.constant 3.200000e+01 : f32
    %268 = vector.broadcast %cst_95 : f32 to vector<8x1xf32>
    %269 = arith.divf %267, %268 : vector<8x1xf32>
    %270 = vector.broadcast %260 : vector<8x1xf32> to vector<8x32xf32>
    %271 = arith.subf %256, %270 : vector<8x32xf32>
    %cst_96 = arith.constant 9.99999974E-6 : f32
    %272 = vector.broadcast %cst_96 : f32 to vector<8x1xf32>
    %273 = arith.addf %269, %272 : vector<8x1xf32>
    %274 = math.rsqrt %273 : vector<8x1xf32>
    %275 = vector.broadcast %274 : vector<8x1xf32> to vector<8x32xf32>
    %276 = arith.mulf %271, %275 : vector<8x32xf32>
    %c1 = arith.constant 1 : index
    %c0_97 = arith.constant 0 : index
    %277 = vector.load %arg19[%c1, %c0_97] : memref<3x32xf32, #tpu.memory_space<vmem>>, vector<1x32xf32>
    %c1_98 = arith.constant 1 : index
    %c0_99 = arith.constant 0 : index
    %278 = vector.load %arg20[%c1_98, %c0_99] : memref<3x32xf32, #tpu.memory_space<vmem>>, vector<1x32xf32>
    %279 = vector.broadcast %277 : vector<1x32xf32> to vector<8x32xf32>
    %280 = arith.mulf %276, %279 : vector<8x32xf32>
    %281 = vector.broadcast %278 : vector<1x32xf32> to vector<8x32xf32>
    %282 = arith.addf %280, %281 : vector<8x32xf32>
    %283 = arith.truncf %282 : vector<8x32xf32> to vector<8x32xbf16>
    %c0_100 = arith.constant 0 : index
    %c0_101 = arith.constant 0 : index
    %284 = vector.load %arg15[%c0_100, %c0_101] : memref<32x64xbf16, #tpu.memory_space<vmem>>, vector<32x64xbf16>
    %cst_102 = arith.constant dense<0.000000e+00> : vector<8x64xf32>
    %285 = tpu.matmul %283, %284, %cst_102 {dimension_numbers = #tpu.dot_dimension_numbers<[1], [0], [0], [1], [0, 0, 1, 1], [], []>} : vector<8x32xbf16>, vector<32x64xbf16>, vector<8x64xf32> -> vector<8x64xf32>
    %c0_103 = arith.constant 0 : index
    %c0_104 = arith.constant 0 : index
    %286 = vector.load %arg16[%c0_103, %c0_104] : memref<1x64xf32, #tpu.memory_space<vmem>>, vector<1x64xf32>
    %287 = vector.broadcast %286 : vector<1x64xf32> to vector<8x64xf32>
    %288 = arith.addf %285, %287 : vector<8x64xf32>
    %cst_105 = arith.constant 0.000000e+00 : f32
    %289 = vector.broadcast %cst_105 : f32 to vector<8x64xf32>
    %290 = arith.maximumf %288, %289 : vector<8x64xf32>
    %291 = arith.truncf %290 : vector<8x64xf32> to vector<8x64xbf16>
    %c0_106 = arith.constant 0 : index
    %c0_107 = arith.constant 0 : index
    %292 = vector.load %arg17[%c0_106, %c0_107] : memref<64x32xbf16, #tpu.memory_space<vmem>>, vector<64x32xbf16>
    %cst_108 = arith.constant dense<0.000000e+00> : vector<8x32xf32>
    %293 = tpu.matmul %291, %292, %cst_108 {dimension_numbers = #tpu.dot_dimension_numbers<[1], [0], [0], [1], [0, 0, 1, 1], [], []>} : vector<8x64xbf16>, vector<64x32xbf16>, vector<8x32xf32> -> vector<8x32xf32>
    %c0_109 = arith.constant 0 : index
    %c0_110 = arith.constant 0 : index
    %294 = vector.load %arg18[%c0_109, %c0_110] : memref<1x32xf32, #tpu.memory_space<vmem>>, vector<1x32xf32>
    %295 = vector.broadcast %294 : vector<1x32xf32> to vector<8x32xf32>
    %296 = arith.addf %293, %295 : vector<8x32xf32>
    %297 = arith.addf %282, %296 : vector<8x32xf32>
    %cst_111 = arith.constant dense<0.000000e+00> : vector<8xf32>
    %298 = vector.multi_reduction <add>, %297, %cst_111 [1] : vector<8x32xf32> to vector<8xf32>
    %299 = vector.shape_cast %298 : vector<8xf32> to vector<8x1xf32>
    %cst_112 = arith.constant 3.200000e+01 : f32
    %300 = vector.broadcast %cst_112 : f32 to vector<8x1xf32>
    %301 = arith.divf %299, %300 : vector<8x1xf32>
    %302 = vector.broadcast %301 : vector<8x1xf32> to vector<8x32xf32>
    %303 = arith.subf %297, %302 : vector<8x32xf32>
    %304 = vector.broadcast %301 : vector<8x1xf32> to vector<8x32xf32>
    %305 = arith.subf %297, %304 : vector<8x32xf32>
    %306 = arith.mulf %303, %305 : vector<8x32xf32>
    %cst_113 = arith.constant dense<0.000000e+00> : vector<8xf32>
    %307 = vector.multi_reduction <add>, %306, %cst_113 [1] : vector<8x32xf32> to vector<8xf32>
    %308 = vector.shape_cast %307 : vector<8xf32> to vector<8x1xf32>
    %cst_114 = arith.constant 3.200000e+01 : f32
    %309 = vector.broadcast %cst_114 : f32 to vector<8x1xf32>
    %310 = arith.divf %308, %309 : vector<8x1xf32>
    %311 = vector.broadcast %301 : vector<8x1xf32> to vector<8x32xf32>
    %312 = arith.subf %297, %311 : vector<8x32xf32>
    %cst_115 = arith.constant 9.99999974E-6 : f32
    %313 = vector.broadcast %cst_115 : f32 to vector<8x1xf32>
    %314 = arith.addf %310, %313 : vector<8x1xf32>
    %315 = math.rsqrt %314 : vector<8x1xf32>
    %316 = vector.broadcast %315 : vector<8x1xf32> to vector<8x32xf32>
    %317 = arith.mulf %312, %316 : vector<8x32xf32>
    %c2 = arith.constant 2 : index
    %c0_116 = arith.constant 0 : index
    %318 = vector.load %arg19[%c2, %c0_116] : memref<3x32xf32, #tpu.memory_space<vmem>>, vector<1x32xf32>
    %c2_117 = arith.constant 2 : index
    %c0_118 = arith.constant 0 : index
    %319 = vector.load %arg20[%c2_117, %c0_118] : memref<3x32xf32, #tpu.memory_space<vmem>>, vector<1x32xf32>
    %320 = vector.broadcast %318 : vector<1x32xf32> to vector<8x32xf32>
    %321 = arith.mulf %317, %320 : vector<8x32xf32>
    %322 = vector.broadcast %319 : vector<1x32xf32> to vector<8x32xf32>
    %323 = arith.addf %321, %322 : vector<8x32xf32>
    %c0_119 = arith.constant 0 : index
    %c0_120 = arith.constant 0 : index
    %c0_121 = arith.constant 0 : index
    %324 = vector.load %arg21[%c0_119, %c0_120, %c0_121] : memref<1x8x32xf32, #tpu.memory_space<vmem>>, vector<1x8x32xf32>
    %325 = vector.shape_cast %324 : vector<1x8x32xf32> to vector<8x32xf32>
    %326 = vector.shape_cast %323 : vector<8x32xf32> to vector<1x8x32xf32>
    tpu.vector_store %arg21[%c0_119, %c0_120, %c0_121], %326 {strides = array<i32>} : memref<1x8x32xf32, #tpu.memory_space<vmem>>, vector<1x8x32xf32>,
    return
  }
  func.func @transform_0(%arg0: i32) -> (i32, i32, i32) {
    %c0_i32 = arith.constant 0 : i32
    %c0_i32_0 = arith.constant 0 : i32
    %c0_i32_1 = arith.constant 0 : i32
    return %arg0, %c0_i32, %c0_i32_0 : i32, i32, i32
  }
  func.func @transform_1(%arg0: i32) -> (i32, i32, i32) {
    %c0_i32 = arith.constant 0 : i32
    %c0_i32_0 = arith.constant 0 : i32
    %c0_i32_1 = arith.constant 0 : i32
    return %arg0, %c0_i32, %c0_i32_0 : i32, i32, i32
  }
  func.func @transform_2(%arg0: i32) -> (i32, i32, i32) {
    %c0_i32 = arith.constant 0 : i32
    %c0_i32_0 = arith.constant 0 : i32
    %c0_i32_1 = arith.constant 0 : i32
    return %arg0, %c0_i32, %c0_i32_0 : i32, i32, i32
  }
  func.func @transform_3(%arg0: i32) -> (i32, i32, i32) {
    %c0_i32 = arith.constant 0 : i32
    %c0_i32_0 = arith.constant 0 : i32
    %c0_i32_1 = arith.constant 0 : i32
    return %arg0, %c0_i32, %c0_i32_0 : i32, i32, i32
  }
  func.func @transform_4(%arg0: i32) -> (i32, i32) {
    %c0_i32 = arith.constant 0 : i32
    %c0_i32_0 = arith.constant 0 : i32
    %c0_i32_1 = arith.constant 0 : i32
    return %c0_i32, %c0_i32_0 : i32, i32
  }
  func.func @transform_5(%arg0: i32) -> (i32, i32) {
    %c0_i32 = arith.constant 0 : i32
    %c0_i32_0 = arith.constant 0 : i32
    %c0_i32_1 = arith.constant 0 : i32
    return %c0_i32, %c0_i32_0 : i32, i32
  }
  func.func @transform_6(%arg0: i32) -> (i32, i32) {
    %c0_i32 = arith.constant 0 : i32
    %c0_i32_0 = arith.constant 0 : i32
    %c0_i32_1 = arith.constant 0 : i32
    return %c0_i32, %c0_i32_0 : i32, i32
  }
  func.func @transform_7(%arg0: i32) -> (i32, i32) {
    %c0_i32 = arith.constant 0 : i32
    %c0_i32_0 = arith.constant 0 : i32
    %c0_i32_1 = arith.constant 0 : i32
    return %c0_i32, %c0_i32_0 : i32, i32
  }
  func.func @transform_8(%arg0: i32) -> (i32, i32) {
    %c0_i32 = arith.constant 0 : i32
    %c0_i32_0 = arith.constant 0 : i32
    %c0_i32_1 = arith.constant 0 : i32
    return %c0_i32, %c0_i32_0 : i32, i32
  }
  func.func @transform_9(%arg0: i32) -> (i32, i32) {
    %c0_i32 = arith.constant 0 : i32
    %c0_i32_0 = arith.constant 0 : i32
    %c0_i32_1 = arith.constant 0 : i32
    return %c0_i32, %c0_i32_0 : i32, i32
  }
  func.func @transform_10(%arg0: i32) -> (i32, i32) {
    %c0_i32 = arith.constant 0 : i32
    %c0_i32_0 = arith.constant 0 : i32
    %c0_i32_1 = arith.constant 0 : i32
    return %c0_i32, %c0_i32_0 : i32, i32
  }
  func.func @transform_11(%arg0: i32) -> (i32, i32) {
    %c0_i32 = arith.constant 0 : i32
    %c0_i32_0 = arith.constant 0 : i32
    %c0_i32_1 = arith.constant 0 : i32
    return %c0_i32, %c0_i32_0 : i32, i32
  }
  func.func @transform_12(%arg0: i32) -> (i32, i32) {
    %c0_i32 = arith.constant 0 : i32
    %c0_i32_0 = arith.constant 0 : i32
    %c0_i32_1 = arith.constant 0 : i32
    return %c0_i32, %c0_i32_0 : i32, i32
  }
  func.func @transform_13(%arg0: i32) -> (i32, i32) {
    %c0_i32 = arith.constant 0 : i32
    %c0_i32_0 = arith.constant 0 : i32
    %c0_i32_1 = arith.constant 0 : i32
    return %c0_i32, %c0_i32_0 : i32, i32
  }
  func.func @transform_14(%arg0: i32) -> (i32, i32) {
    %c0_i32 = arith.constant 0 : i32
    %c0_i32_0 = arith.constant 0 : i32
    %c0_i32_1 = arith.constant 0 : i32
    return %c0_i32, %c0_i32_0 : i32, i32
  }
  func.func @transform_15(%arg0: i32) -> (i32, i32) {
    %c0_i32 = arith.constant 0 : i32
    %c0_i32_0 = arith.constant 0 : i32
    %c0_i32_1 = arith.constant 0 : i32
    return %c0_i32, %c0_i32_0 : i32, i32
  }
  func.func @transform_16(%arg0: i32) -> (i32, i32) {
    %c0_i32 = arith.constant 0 : i32
    %c0_i32_0 = arith.constant 0 : i32
    %c0_i32_1 = arith.constant 0 : i32
    return %c0_i32, %c0_i32_0 : i32, i32
  }
  func.func @transform_17(%arg0: i32) -> (i32, i32) {
    %c0_i32 = arith.constant 0 : i32
    %c0_i32_0 = arith.constant 0 : i32
    %c0_i32_1 = arith.constant 0 : i32
    return %c0_i32, %c0_i32_0 : i32, i32
  }
  func.func @transform_18(%arg0: i32) -> (i32, i32) {
    %c0_i32 = arith.constant 0 : i32
    %c0_i32_0 = arith.constant 0 : i32
    %c0_i32_1 = arith.constant 0 : i32
    return %c0_i32, %c0_i32_0 : i32, i32
  }
  func.func @transform_19(%arg0: i32) -> (i32, i32) {
    %c0_i32 = arith.constant 0 : i32
    %c0_i32_0 = arith.constant 0 : i32
    %c0_i32_1 = arith.constant 0 : i32
    return %c0_i32, %c0_i32_0 : i32, i32
  }
  func.func @transform_20(%arg0: i32) -> (i32, i32, i32) {
    %c0_i32 = arith.constant 0 : i32
    %c0_i32_0 = arith.constant 0 : i32
    %c0_i32_1 = arith.constant 0 : i32
    return %arg0, %c0_i32, %c0_i32_0 : i32, i32, i32
  }
}

</mosaic_0001>

<llo_original>
// kernel: tpu_custom_call.1
$region0: #{tpu_custom_call.1}
  #allocation0 [shape = 'u32[]', space=smem, size = 0x4, offset = 0x4, fixed_abs, tag = 'smem constant byte address 0x4 - core index']
  #allocation1 [shape = 'u32[144,128]{1,0:T(1,128)}', space=vmem, size = 0x12000, scoped, tag = 'internal scratch']
  %s0 = inlined_call_operand.vmem [shape: f32[2,8,32], index: 0, kind: input, shape index: {}]
  %s1 = inlined_call_operand.vmem [shape: f32[2,8,32], index: 1, kind: input, shape index: {}]
  %s2 = inlined_call_operand.vmem [shape: f32[2,8,8], index: 2, kind: input, shape index: {}]
  %s3 = inlined_call_operand.hbm [shape: f32[2,8,8], index: 3, kind: input, shape index: {}]
  %s4 = inlined_call_operand.hbm [shape: bf16[32,96], index: 4, kind: input, shape index: {}]
  %s5 = inlined_call_operand.hbm [shape: f32[1,96], index: 5, kind: input, shape index: {}]
  %s6 = inlined_call_operand.hbm [shape: bf16[32,32], index: 6, kind: input, shape index: {}]
  %s7 = inlined_call_operand.hbm [shape: f32[1,32], index: 7, kind: input, shape index: {}]
  %s8 = inlined_call_operand.hbm [shape: bf16[32,32], index: 8, kind: input, shape index: {}]
  %s9 = inlined_call_operand.hbm [shape: f32[1,32], index: 9, kind: input, shape index: {}]
  %s10 = inlined_call_operand.vmem [shape: bf16[32,64], index: 10, kind: input, shape index: {}]
  %s11 = inlined_call_operand.hbm [shape: f32[1,64], index: 11, kind: input, shape index: {}]
  %s12 = inlined_call_operand.hbm [shape: bf16[32,32], index: 12, kind: input, shape index: {}]
  %s13 = inlined_call_operand.vmem [shape: f32[1,32], index: 13, kind: input, shape index: {}]
  %s14 = inlined_call_operand.hbm [shape: bf16[32,64], index: 14, kind: input, shape index: {}]
  %s15 = inlined_call_operand.vmem [shape: f32[1,64], index: 15, kind: input, shape index: {}]
  %s16 = inlined_call_operand.vmem [shape: bf16[64,32], index: 16, kind: input, shape index: {}]
  %s17 = inlined_call_operand.vmem [shape: f32[1,32], index: 17, kind: input, shape index: {}]
  %s18 = inlined_call_operand.vmem [shape: f32[3,32], index: 18, kind: input, shape index: {}]
  %s19 = inlined_call_operand.vmem [shape: f32[3,32], index: 19, kind: input, shape index: {}]
  %s20 = inlined_call_operand.hbm [shape: f32[2,8,32], index: 20, kind: output, shape index: {}]
  %s21 = sld [smem:[#allocation0]]
  $region153: #{tpu_custom_call.1} parent=0
    _
  %s23 = ssub.s32 1, %s21
  %s24 = scalar_select 0, %s23, %s21
  $region1: #{tpu_custom_call.1} parent=0
    #allocation2 [shape = 'u8[8192]{0}', space=vmem, size = 0x2000, scoped, tag = 'input window, operand 3']
    #allocation3 [shape = 's32[2]{0}', space=sflag, size = 0x8, scoped, tag = 'scoped memory for tpu_custom_call.1']
    #allocation4 [shape = 's32[2]{0}', space=sflag, size = 0x8, scoped, tag = 'scoped memory for tpu_custom_call.1']
    #allocation5 [shape = 'u8[8192]{0}', space=vmem, size = 0x2000, scoped, tag = 'input window, operand 4, single buffered']
    #allocation6 [shape = 's32[1]{0}', space=sflag, size = 0x4, scoped, tag = 'scoped memory for tpu_custom_call.1']
    #allocation7 [shape = 'u8[512]{0}', space=vmem, size = 0x400, scoped, tag = 'input window, operand 5, single buffered']
    #allocation8 [shape = 'u8[8192]{0}', space=vmem, size = 0x2000, scoped, tag = 'input window, operand 6, single buffered']
    #allocation9 [shape = 's32[1]{0}', space=sflag, size = 0x4, scoped, tag = 'scoped memory for tpu_custom_call.1']
    #allocation10 [shape = 'u8[512]{0}', space=vmem, size = 0x400, scoped, tag = 'input window, operand 7, single buffered']
    #allocation11 [shape = 'u8[8192]{0}', space=vmem, size = 0x2000, scoped, tag = 'input window, operand 8, single buffered']
    #allocation12 [shape = 's32[1]{0}', space=sflag, size = 0x4, scoped, tag = 'scoped memory for tpu_custom_call.1']
    #allocation13 [shape = 'u8[512]{0}', space=vmem, size = 0x400, scoped, tag = 'input window, operand 9, single buffered']
    #allocation14 [shape = 'u8[512]{0}', space=vmem, size = 0x400, scoped, tag = 'input window, operand 11, single buffered']
    #allocation15 [shape = 's32[1]{0}', space=sflag, size = 0x4, scoped, tag = 'scoped memory for tpu_custom_call.1']
    #allocation16 [shape = 'u8[8192]{0}', space=vmem, size = 0x2000, scoped, tag = 'input window, operand 12, single buffered']
    #allocation17 [shape = 'u8[8192]{0}', space=vmem, size = 0x2000, scoped, tag = 'input window, operand 14, single buffered']
    #allocation18 [shape = 's32[1]{0}', space=sflag, size = 0x4, scoped, tag = 'scoped memory for tpu_custom_call.1']
    #allocation19 [shape = 'u8[8192]{0}', space=vmem, size = 0x2000, scoped, tag = 'output window, operand 0']
    %25 = vsyncpa [#allocation3], 0
    %s26 = scalar_lea.sflag [#allocation3], 1
    %27 = vsyncpa %s26, 0
    %28 = vsyncpa [#allocation6], 0
    %29 = vsyncpa [#allocation9], 0
    %30 = vsyncpa [#allocation12], 0
    %31 = vsyncpa [#allocation15], 0
    %32 = vsyncpa [#allocation18], 0
    %33 = vsyncpa [#allocation4], 0
    %s34 = scalar_lea.sflag [#allocation4], 1
    %35 = vsyncpa %s34, 0
    loop: start=0, step=1, limit=4
    $region2: #{tpu_custom_call.1} parent=1 // loop_pre_header
      _
    $region3: #{tpu_custom_call.1} parent=1 // loop_header
      %s37 = sphi 0, %s41
      %p38 = scmp.ge.s32.totalorder %s37, 4
      %s47 = sphi 0, %s49
      %s50 = sphi 0, %s47
      %s51 = sphi 0, %s50
      %s67 = sphi 0, %s51
      %s73 = sphi 0, %s75
      %s76 = sphi 0, %s73
      %s77 = sphi 0, %s76
      %s93 = sphi 0, %s77
      %s99 = sphi 0, %s101
      %s102 = sphi 0, %s99
      %s103 = sphi 0, %s102
      %s119 = sphi 0, %s103
      %s125 = sphi 0, %s127
      %s128 = sphi 0, %s125
      %s129 = sphi 0, %s128
      %s145 = sphi 0, %s129
      %s149 = sphi 0, %s149
      %s151 = sphi 0, %s149
      %s152 = sphi 0, %s151
      %s166 = sphi 0, %s152
      %s170 = sphi 0, %s170
      %s172 = sphi 0, %s170
      %s173 = sphi 0, %s172
      %s187 = sphi 0, %s173
      %s191 = sphi 0, %s191
      %s193 = sphi 0, %s191
      %s194 = sphi 0, %s193
      %s208 = sphi 0, %s194
      %s212 = sphi 0, %s212
      %s214 = sphi 0, %s212
      %s215 = sphi 0, %s214
      %s229 = sphi 0, %s215
      %s233 = sphi 0, %s233
      %s235 = sphi 0, %s233
      %s236 = sphi 0, %s235
      %s250 = sphi 0, %s236
      %s254 = sphi 0, %s254
      %s256 = sphi 0, %s254
      %s257 = sphi 0, %s256
      %s271 = sphi 0, %s257
      %s275 = sphi 0, %s275
      %s277 = sphi 0, %s275
      %s278 = sphi 0, %s277
      %s292 = sphi 0, %s278
      %s296 = sphi 0, %s296
      %s298 = sphi 0, %s296
      %s299 = sphi 0, %s298
      %s313 = sphi 0, %s299
      %s317 = sphi 0, %s317
      %s319 = sphi 0, %s317
      %s320 = sphi 0, %s319
      %s334 = sphi 0, %s320
      %s338 = sphi 0, %s338
      %s340 = sphi 0, %s338
      %s341 = sphi 0, %s340
      %s355 = sphi 0, %s341
      %s359 = sphi 0, %s359
      %s361 = sphi 0, %s359
      %s362 = sphi 0, %s361
      %s376 = sphi 0, %s362
      %s380 = sphi 0, %s380
      %s382 = sphi 0, %s380
      %s383 = sphi 0, %s382
      %s397 = sphi 0, %s383
      %s401 = sphi 0, %s401
      %s403 = sphi 0, %s401
      %s404 = sphi 0, %s403
      %s418 = sphi 0, %s404
      %s422 = sphi 0, %s422
      %s424 = sphi 0, %s422
      %s425 = sphi 0, %s424
      %s439 = sphi 0, %s425
      %s443 = sphi 0, %s443
      %s445 = sphi 0, %s443
      %s446 = sphi 0, %s445
      %s460 = sphi 0, %s446
      %s464 = sphi 0, %s464
      %s466 = sphi 0, %s464
      %s467 = sphi 0, %s466
      %s481 = sphi 0, %s467
      %s487 = sphi 0, %s489
      %s490 = sphi 0, %s487
      %s491 = sphi 0, %s490
      %s507 = sphi 0, %s491
    $region4: #{tpu_custom_call.1} parent=1 // loop_header_branch
      %40 = sbr.rel (%p38) target = $region8
    $region5: #{tpu_custom_call.1} parent=1 // loop_body
      %s42 = ssub.s32 %s37, 1
      %s43 = ssub.s32 %s37, 2
      %s44 = sadd.s32 %s37, 1
      %s45 = ssub.s32 %s37, %s44
      %p46 = scmp.eq.s32.totalorder %s45, 0
      %s48 = sadd.s32 %s47, 1
      %s49 = scalar_select %p46, %s47, %s48
      %p52 = pneg %p46
      %p53 = scmp.eq.s32.totalorder %s37, 1
      %p54 = por %p52, %p53
      %p55 = scmp.ne.s32.totalorder %s47, %s50
      %p56 = scmp.eq.s32.totalorder %s37, 0
      %p57 = por %p55, %p56
      %p58 = scmp.ne.s32.totalorder %s47, %s50
      %p59 = scmp.eq.s32.totalorder %s42, 1
      %p60 = por %p58, %p59
      %p61 = scmp.ne.s32.totalorder %s50, %s51
      %p62 = scmp.eq.s32.totalorder %s42, 0
      %p63 = por %p61, %p62
      %p64 = scmp.ne.s32.totalorder %s50, %s51
      %p65 = scmp.eq.s32.totalorder %s43, 1
      %p66 = por %p64, %p65
      %p68 = scmp.ne.s32.totalorder %s51, %s67
      %p69 = scmp.eq.s32.totalorder %s43, 0
      %p70 = por %p68, %p69
      %s71 = ssub.s32 %s37, %s44
      %p72 = scmp.eq.s32.totalorder %s71, 0
      %s74 = sadd.s32 %s73, 1
      %s75 = scalar_select %p72, %s73, %s74
      %p78 = pneg %p72
      %p79 = scmp.eq.s32.totalorder %s37, 1
      %p80 = por %p78, %p79
      %p81 = scmp.ne.s32.totalorder %s73, %s76
      %p82 = scmp.eq.s32.totalorder %s37, 0
      %p83 = por %p81, %p82
      %p84 = scmp.ne.s32.totalorder %s73, %s76
      %p85 = scmp.eq.s32.totalorder %s42, 1
      %p86 = por %p84, %p85
      %p87 = scmp.ne.s32.totalorder %s76, %s77
      %p88 = scmp.eq.s32.totalorder %s42, 0
      %p89 = por %p87, %p88
      %p90 = scmp.ne.s32.totalorder %s76, %s77
      %p91 = scmp.eq.s32.totalorder %s43, 1
      %p92 = por %p90, %p91
      %p94 = scmp.ne.s32.totalorder %s77, %s93
      %p95 = scmp.eq.s32.totalorder %s43, 0
      %p96 = por %p94, %p95
      %s97 = ssub.s32 %s37, %s44
      %p98 = scmp.eq.s32.totalorder %s97, 0
      %s100 = sadd.s32 %s99, 1
      %s101 = scalar_select %p98, %s99, %s100
      %p104 = pneg %p98
      %p105 = scmp.eq.s32.totalorder %s37, 1
      %p106 = por %p104, %p105
      %p107 = scmp.ne.s32.totalorder %s99, %s102
      %p108 = scmp.eq.s32.totalorder %s37, 0
      %p109 = por %p107, %p108
      %p110 = scmp.ne.s32.totalorder %s99, %s102
      %p111 = scmp.eq.s32.totalorder %s42, 1
      %p112 = por %p110, %p111
      %p113 = scmp.ne.s32.totalorder %s102, %s103
      %p114 = scmp.eq.s32.totalorder %s42, 0
      %p115 = por %p113, %p114
      %p116 = scmp.ne.s32.totalorder %s102, %s103
      %p117 = scmp.eq.s32.totalorder %s43, 1
      %p118 = por %p116, %p117
      %p120 = scmp.ne.s32.totalorder %s103, %s119
      %p121 = scmp.eq.s32.totalorder %s43, 0
      %p122 = por %p120, %p121
      %s123 = ssub.s32 %s37, %s44
      %p124 = scmp.eq.s32.totalorder %s123, 0
      %s126 = sadd.s32 %s125, 1
      %s127 = scalar_select %p124, %s125, %s126
      %p130 = pneg %p124
      %p131 = scmp.eq.s32.totalorder %s37, 1
      %p132 = por %p130, %p131
      %p133 = scmp.ne.s32.totalorder %s125, %s128
      %p134 = scmp.eq.s32.totalorder %s37, 0
      %p135 = por %p133, %p134
      %p136 = scmp.ne.s32.totalorder %s125, %s128
      %p137 = scmp.eq.s32.totalorder %s42, 1
      %p138 = por %p136, %p137
      %p139 = scmp.ne.s32.totalorder %s128, %s129
      %p140 = scmp.eq.s32.totalorder %s42, 0
      %p141 = por %p139, %p140
      %p142 = scmp.ne.s32.totalorder %s128, %s129
      %p143 = scmp.eq.s32.totalorder %s43, 1
      %p144 = por %p142, %p143
      %p146 = scmp.ne.s32.totalorder %s129, %s145
      %p147 = scmp.eq.s32.totalorder %s43, 0
      %p148 = por %p146, %p147
      %s150 = sadd.s32 %s149, 1
      %p153 = scmp.eq.s32.totalorder %s37, 1
      %p154 = scmp.ne.s32.totalorder %s149, %s151
      %p155 = scmp.eq.s32.totalorder %s37, 0
      %p156 = por %p154, %p155
      %p157 = scmp.ne.s32.totalorder %s149, %s151
      %p158 = scmp.eq.s32.totalorder %s42, 1
      %p159 = por %p157, %p158
      %p160 = scmp.ne.s32.totalorder %s151, %s152
      %p161 = scmp.eq.s32.totalorder %s42, 0
      %p162 = por %p160, %p161
      %p163 = scmp.ne.s32.totalorder %s151, %s152
      %p164 = scmp.eq.s32.totalorder %s43, 1
      %p165 = por %p163, %p164
      %p167 = scmp.ne.s32.totalorder %s152, %s166
      %p168 = scmp.eq.s32.totalorder %s43, 0
      %p169 = por %p167, %p168
      %s171 = sadd.s32 %s170, 1
      %p174 = scmp.eq.s32.totalorder %s37, 1
      %p175 = scmp.ne.s32.totalorder %s170, %s172
      %p176 = scmp.eq.s32.totalorder %s37, 0
      %p177 = por %p175, %p176
      %p178 = scmp.ne.s32.totalorder %s170, %s172
      %p179 = scmp.eq.s32.totalorder %s42, 1
      %p180 = por %p178, %p179
      %p181 = scmp.ne.s32.totalorder %s172, %s173
      %p182 = scmp.eq.s32.totalorder %s42, 0
      %p183 = por %p181, %p182
      %p184 = scmp.ne.s32.totalorder %s172, %s173
      %p185 = scmp.eq.s32.totalorder %s43, 1
      %p186 = por %p184, %p185
      %p188 = scmp.ne.s32.totalorder %s173, %s187
      %p189 = scmp.eq.s32.totalorder %s43, 0
      %p190 = por %p188, %p189
      %s192 = sadd.s32 %s191, 1
      %p195 = scmp.eq.s32.totalorder %s37, 1
      %p196 = scmp.ne.s32.totalorder %s191, %s193
      %p197 = scmp.eq.s32.totalorder %s37, 0
      %p198 = por %p196, %p197
      %p199 = scmp.ne.s32.totalorder %s191, %s193
      %p200 = scmp.eq.s32.totalorder %s42, 1
      %p201 = por %p199, %p200
      %p202 = scmp.ne.s32.totalorder %s193, %s194
      %p203 = scmp.eq.s32.totalorder %s42, 0
      %p204 = por %p202, %p203
      %p205 = scmp.ne.s32.totalorder %s193, %s194
      %p206 = scmp.eq.s32.totalorder %s43, 1
      %p207 = por %p205, %p206
      %p209 = scmp.ne.s32.totalorder %s194, %s208
      %p210 = scmp.eq.s32.totalorder %s43, 0
      %p211 = por %p209, %p210
      %s213 = sadd.s32 %s212, 1
      %p216 = scmp.eq.s32.totalorder %s37, 1
      %p217 = scmp.ne.s32.totalorder %s212, %s214
      %p218 = scmp.eq.s32.totalorder %s37, 0
      %p219 = por %p217, %p218
      %p220 = scmp.ne.s32.totalorder %s212, %s214
      %p221 = scmp.eq.s32.totalorder %s42, 1
      %p222 = por %p220, %p221
      %p223 = scmp.ne.s32.totalorder %s214, %s215
      %p224 = scmp.eq.s32.totalorder %s42, 0
      %p225 = por %p223, %p224
      %p226 = scmp.ne.s32.totalorder %s214, %s215
      %p227 = scmp.eq.s32.totalorder %s43, 1
      %p228 = por %p226, %p227
      %p230 = scmp.ne.s32.totalorder %s215, %s229
      %p231 = scmp.eq.s32.totalorder %s43, 0
      %p232 = por %p230, %p231
      %s234 = sadd.s32 %s233, 1
      %p237 = scmp.eq.s32.totalorder %s37, 1
      %p238 = scmp.ne.s32.totalorder %s233, %s235
      %p239 = scmp.eq.s32.totalorder %s37, 0
      %p240 = por %p238, %p239
      %p241 = scmp.ne.s32.totalorder %s233, %s235
      %p242 = scmp.eq.s32.totalorder %s42, 1
      %p243 = por %p241, %p242
      %p244 = scmp.ne.s32.totalorder %s235, %s236
      %p245 = scmp.eq.s32.totalorder %s42, 0
      %p246 = por %p244, %p245
      %p247 = scmp.ne.s32.totalorder %s235, %s236
      %p248 = scmp.eq.s32.totalorder %s43, 1
      %p249 = por %p247, %p248
      %p251 = scmp.ne.s32.totalorder %s236, %s250
      %p252 = scmp.eq.s32.totalorder %s43, 0
      %p253 = por %p251, %p252
      %s255 = sadd.s32 %s254, 1
      %p258 = scmp.eq.s32.totalorder %s37, 1
      %p259 = scmp.ne.s32.totalorder %s254, %s256
      %p260 = scmp.eq.s32.totalorder %s37, 0
      %p261 = por %p259, %p260
      %p262 = scmp.ne.s32.totalorder %s254, %s256
      %p263 = scmp.eq.s32.totalorder %s42, 1
      %p264 = por %p262, %p263
      %p265 = scmp.ne.s32.totalorder %s256, %s257
      %p266 = scmp.eq.s32.totalorder %s42, 0
      %p267 = por %p265, %p266
      %p268 = scmp.ne.s32.totalorder %s256, %s257
      %p269 = scmp.eq.s32.totalorder %s43, 1
      %p270 = por %p268, %p269
      %p272 = scmp.ne.s32.totalorder %s257, %s271
      %p273 = scmp.eq.s32.totalorder %s43, 0
      %p274 = por %p272, %p273
      %s276 = sadd.s32 %s275, 1
      %p279 = scmp.eq.s32.totalorder %s37, 1
      %p280 = scmp.ne.s32.totalorder %s275, %s277
      %p281 = scmp.eq.s32.totalorder %s37, 0
      %p282 = por %p280, %p281
      %p283 = scmp.ne.s32.totalorder %s275, %s277
      %p284 = scmp.eq.s32.totalorder %s42, 1
      %p285 = por %p283, %p284
      %p286 = scmp.ne.s32.totalorder %s277, %s278
      %p287 = scmp.eq.s32.totalorder %s42, 0
      %p288 = por %p286, %p287
      %p289 = scmp.ne.s32.totalorder %s277, %s278
      %p290 = scmp.eq.s32.totalorder %s43, 1
      %p291 = por %p289, %p290
      %p293 = scmp.ne.s32.totalorder %s278, %s292
      %p294 = scmp.eq.s32.totalorder %s43, 0
      %p295 = por %p293, %p294
      %s297 = sadd.s32 %s296, 1
      %p300 = scmp.eq.s32.totalorder %s37, 1
      %p301 = scmp.ne.s32.totalorder %s296, %s298
      %p302 = scmp.eq.s32.totalorder %s37, 0
      %p303 = por %p301, %p302
      %p304 = scmp.ne.s32.totalorder %s296, %s298
      %p305 = scmp.eq.s32.totalorder %s42, 1
      %p306 = por %p304, %p305
      %p307 = scmp.ne.s32.totalorder %s298, %s299
      %p308 = scmp.eq.s32.totalorder %s42, 0
      %p309 = por %p307, %p308
      %p310 = scmp.ne.s32.totalorder %s298, %s299
      %p311 = scmp.eq.s32.totalorder %s43, 1
      %p312 = por %p310, %p311
      %p314 = scmp.ne.s32.totalorder %s299, %s313
      %p315 = scmp.eq.s32.totalorder %s43, 0
      %p316 = por %p314, %p315
      %s318 = sadd.s32 %s317, 1
      %p321 = scmp.eq.s32.totalorder %s37, 1
      %p322 = scmp.ne.s32.totalorder %s317, %s319
      %p323 = scmp.eq.s32.totalorder %s37, 0
      %p324 = por %p322, %p323
      %p325 = scmp.ne.s32.totalorder %s317, %s319
      %p326 = scmp.eq.s32.totalorder %s42, 1
      %p327 = por %p325, %p326
      %p328 = scmp.ne.s32.totalorder %s319, %s320
      %p329 = scmp.eq.s32.totalorder %s42, 0
      %p330 = por %p328, %p329
      %p331 = scmp.ne.s32.totalorder %s319, %s320
      %p332 = scmp.eq.s32.totalorder %s43, 1
      %p333 = por %p331, %p332
      %p335 = scmp.ne.s32.totalorder %s320, %s334
      %p336 = scmp.eq.s32.totalorder %s43, 0
      %p337 = por %p335, %p336
      %s339 = sadd.s32 %s338, 1
      %p342 = scmp.eq.s32.totalorder %s37, 1
      %p343 = scmp.ne.s32.totalorder %s338, %s340
      %p344 = scmp.eq.s32.totalorder %s37, 0
      %p345 = por %p343, %p344
      %p346 = scmp.ne.s32.totalorder %s338, %s340
      %p347 = scmp.eq.s32.totalorder %s42, 1
      %p348 = por %p346, %p347
      %p349 = scmp.ne.s32.totalorder %s340, %s341
      %p350 = scmp.eq.s32.totalorder %s42, 0
      %p351 = por %p349, %p350
      %p352 = scmp.ne.s32.totalorder %s340, %s341
      %p353 = scmp.eq.s32.totalorder %s43, 1
      %p354 = por %p352, %p353
      %p356 = scmp.ne.s32.totalorder %s341, %s355
      %p357 = scmp.eq.s32.totalorder %s43, 0
      %p358 = por %p356, %p357
      %s360 = sadd.s32 %s359, 1
      %p363 = scmp.eq.s32.totalorder %s37, 1
      %p364 = scmp.ne.s32.totalorder %s359, %s361
      %p365 = scmp.eq.s32.totalorder %s37, 0
      %p366 = por %p364, %p365
      %p367 = scmp.ne.s32.totalorder %s359, %s361
      %p368 = scmp.eq.s32.totalorder %s42, 1
      %p369 = por %p367, %p368
      %p370 = scmp.ne.s32.totalorder %s361, %s362
      %p371 = scmp.eq.s32.totalorder %s42, 0
      %p372 = por %p370, %p371
      %p373 = scmp.ne.s32.totalorder %s361, %s362
      %p374 = scmp.eq.s32.totalorder %s43, 1
      %p375 = por %p373, %p374
      %p377 = scmp.ne.s32.totalorder %s362, %s376
      %p378 = scmp.eq.s32.totalorder %s43, 0
      %p379 = por %p377, %p378
      %s381 = sadd.s32 %s380, 1
      %p384 = scmp.eq.s32.totalorder %s37, 1
      %p385 = scmp.ne.s32.totalorder %s380, %s382
      %p386 = scmp.eq.s32.totalorder %s37, 0
      %p387 = por %p385, %p386
      %p388 = scmp.ne.s32.totalorder %s380, %s382
      %p389 = scmp.eq.s32.totalorder %s42, 1
      %p390 = por %p388, %p389
      %p391 = scmp.ne.s32.totalorder %s382, %s383
      %p392 = scmp.eq.s32.totalorder %s42, 0
      %p393 = por %p391, %p392
      %p394 = scmp.ne.s32.totalorder %s382, %s383
      %p395 = scmp.eq.s32.totalorder %s43, 1
      %p396 = por %p394, %p395
      %p398 = scmp.ne.s32.totalorder %s383, %s397
      %p399 = scmp.eq.s32.totalorder %s43, 0
      %p400 = por %p398, %p399
      %s402 = sadd.s32 %s401, 1
      %p405 = scmp.eq.s32.totalorder %s37, 1
      %p406 = scmp.ne.s32.totalorder %s401, %s403
      %p407 = scmp.eq.s32.totalorder %s37, 0
      %p408 = por %p406, %p407
      %p409 = scmp.ne.s32.totalorder %s401, %s403
      %p410 = scmp.eq.s32.totalorder %s42, 1
      %p411 = por %p409, %p410
      %p412 = scmp.ne.s32.totalorder %s403, %s404
      %p413 = scmp.eq.s32.totalorder %s42, 0
      %p414 = por %p412, %p413
      %p415 = scmp.ne.s32.totalorder %s403, %s404
      %p416 = scmp.eq.s32.totalorder %s43, 1
      %p417 = por %p415, %p416
      %p419 = scmp.ne.s32.totalorder %s404, %s418
      %p420 = scmp.eq.s32.totalorder %s43, 0
      %p421 = por %p419, %p420
      %s423 = sadd.s32 %s422, 1
      %p426 = scmp.eq.s32.totalorder %s37, 1
      %p427 = scmp.ne.s32.totalorder %s422, %s424
      %p428 = scmp.eq.s32.totalorder %s37, 0
      %p429 = por %p427, %p428
      %p430 = scmp.ne.s32.totalorder %s422, %s424
      %p431 = scmp.eq.s32.totalorder %s42, 1
      %p432 = por %p430, %p431
      %p433 = scmp.ne.s32.totalorder %s424, %s425
      %p434 = scmp.eq.s32.totalorder %s42, 0
      %p435 = por %p433, %p434
      %p436 = scmp.ne.s32.totalorder %s424, %s425
      %p437 = scmp.eq.s32.totalorder %s43, 1
      %p438 = por %p436, %p437
      %p440 = scmp.ne.s32.totalorder %s425, %s439
      %p441 = scmp.eq.s32.totalorder %s43, 0
      %p442 = por %p440, %p441
      %s444 = sadd.s32 %s443, 1
      %p447 = scmp.eq.s32.totalorder %s37, 1
      %p448 = scmp.ne.s32.totalorder %s443, %s445
      %p449 = scmp.eq.s32.totalorder %s37, 0
      %p450 = por %p448, %p449
      %p451 = scmp.ne.s32.totalorder %s443, %s445
      %p452 = scmp.eq.s32.totalorder %s42, 1
      %p453 = por %p451, %p452
      %p454 = scmp.ne.s32.totalorder %s445, %s446
      %p455 = scmp.eq.s32.totalorder %s42, 0
      %p456 = por %p454, %p455
      %p457 = scmp.ne.s32.totalorder %s445, %s446
      %p458 = scmp.eq.s32.totalorder %s43, 1
      %p459 = por %p457, %p458
      %p461 = scmp.ne.s32.totalorder %s446, %s460
      %p462 = scmp.eq.s32.totalorder %s43, 0
      %p463 = por %p461, %p462
      %s465 = sadd.s32 %s464, 1
      %p468 = scmp.eq.s32.totalorder %s37, 1
      %p469 = scmp.ne.s32.totalorder %s464, %s466
      %p470 = scmp.eq.s32.totalorder %s37, 0
      %p471 = por %p469, %p470
      %p472 = scmp.ne.s32.totalorder %s464, %s466
      %p473 = scmp.eq.s32.totalorder %s42, 1
      %p474 = por %p472, %p473
      %p475 = scmp.ne.s32.totalorder %s466, %s467
      %p476 = scmp.eq.s32.totalorder %s42, 0
      %p477 = por %p475, %p476
      %p478 = scmp.ne.s32.totalorder %s466, %s467
      %p479 = scmp.eq.s32.totalorder %s43, 1
      %p480 = por %p478, %p479
      %p482 = scmp.ne.s32.totalorder %s467, %s481
      %p483 = scmp.eq.s32.totalorder %s43, 0
      %p484 = por %p482, %p483
      %s485 = ssub.s32 %s37, %s44
      %p486 = scmp.eq.s32.totalorder %s485, 0
      %s488 = sadd.s32 %s487, 1
      %s489 = scalar_select %p486, %s487, %s488
      %p492 = pneg %p486
      %p493 = scmp.eq.s32.totalorder %s37, 1
      %p494 = por %p492, %p493
      %p495 = scmp.ne.s32.totalorder %s487, %s490
      %p496 = scmp.eq.s32.totalorder %s37, 0
      %p497 = por %p495, %p496
      %p498 = scmp.ne.s32.totalorder %s487, %s490
      %p499 = scmp.eq.s32.totalorder %s42, 1
      %p500 = por %p498, %p499
      %p501 = scmp.ne.s32.totalorder %s490, %s491
      %p502 = scmp.eq.s32.totalorder %s42, 0
      %p503 = por %p501, %p502
      %p504 = scmp.ne.s32.totalorder %s490, %s491
      %p505 = scmp.eq.s32.totalorder %s43, 1
      %p506 = por %p504, %p505
      %p508 = scmp.ne.s32.totalorder %s491, %s507
      %p509 = scmp.eq.s32.totalorder %s43, 0
      %p510 = por %p508, %p509
      %p511 = scmp.le.s32.totalorder 1, %s37
      %p512 = scmp.lt.s32.totalorder %s37, 3
      %p513 = pnand %p511, %p512
      %p514 = pneg %p513
      // Predicated region
      $region9: #{tpu_custom_call.1} parent=5 // pred_check
        _
      $region10: #{tpu_custom_call.1} parent=5 // pred_check_branch
        %516 = sbr.rel (%p513) target = $region12
      $region11: #{tpu_custom_call.1} parent=5 // pred_region
        %s517 = ssub.s32 %s37, 1
        // Predicated region
        $region13: #{tpu_custom_call.1} parent=11 // pred_check
          %p518 = pneg %p162
        $region14: #{tpu_custom_call.1} parent=11 // pred_check_branch
          %520 = sbr.rel (%p518) target = $region16
        $region15: #{tpu_custom_call.1} parent=11 // pred_region
          %s522 = ssub.s32 256, 256
          %523 = vsyncadd [#allocation6], %s522
          %s524 = sshll.u32 [#allocation5], 4
          %s525 = int_to_ptr.vmem [resolvable:$true] %s524
          %530 = dma.hbm_to_vmem [thread:$0]  %s4, 256, %s525, [#allocation6], 64, 64, 4
        $region16: #{tpu_custom_call.1} parent=11 // pred_fallthru
          _
        // Predicated region
        $region17: #{tpu_custom_call.1} parent=11 // pred_check
          %p531 = pneg %p183
        $region18: #{tpu_custom_call.1} parent=11 // pred_check_branch
          %533 = sbr.rel (%p531) target = $region20
        $region19: #{tpu_custom_call.1} parent=11 // pred_region
          %s535 = ssub.s32 16, 16
          %536 = vsyncadd [#allocation6], %s535
          %s538 = sshll.u32 [#allocation7], 4
          %s539 = int_to_ptr.vmem [resolvable:$true] %s538
          %541 = dma.hbm_to_vmem [thread:$0]  %s5, 16, %s539, [#allocation6]
        $region20: #{tpu_custom_call.1} parent=11 // pred_fallthru
          _
        // Predicated region
        $region21: #{tpu_custom_call.1} parent=11 // pred_check
          %p542 = pneg %p204
        $region22: #{tpu_custom_call.1} parent=11 // pred_check_branch
          %544 = sbr.rel (%p542) target = $region24
        $region23: #{tpu_custom_call.1} parent=11 // pred_region
          %s546 = ssub.s32 256, 256
          %547 = vsyncadd [#allocation9], %s546
          %s548 = sshll.u32 [#allocation8], 4
          %s549 = int_to_ptr.vmem [resolvable:$true] %s548
          %554 = dma.hbm_to_vmem [thread:$0]  %s6, 256, %s549, [#allocation9], 64, 64, 4
        $region24: #{tpu_custom_call.1} parent=11 // pred_fallthru
          _
        // Predicated region
        $region25: #{tpu_custom_call.1} parent=11 // pred_check
          %p555 = pneg %p225
        $region26: #{tpu_custom_call.1} parent=11 // pred_check_branch
          %557 = sbr.rel (%p555) target = $region28
        $region27: #{tpu_custom_call.1} parent=11 // pred_region
          %s559 = ssub.s32 16, 16
          %560 = vsyncadd [#allocation9], %s559
          %s562 = sshll.u32 [#allocation10], 4
          %s563 = int_to_ptr.vmem [resolvable:$true] %s562
          %565 = dma.hbm_to_vmem [thread:$0]  %s7, 16, %s563, [#allocation9]
        $region28: #{tpu_custom_call.1} parent=11 // pred_fallthru
          _
        // Predicated region
        $region29: #{tpu_custom_call.1} parent=11 // pred_check
          %p566 = pneg %p246
        $region30: #{tpu_custom_call.1} parent=11 // pred_check_branch
          %568 = sbr.rel (%p566) target = $region32
        $region31: #{tpu_custom_call.1} parent=11 // pred_region
          %s570 = ssub.s32 256, 256
          %571 = vsyncadd [#allocation12], %s570
          %s572 = sshll.u32 [#allocation11], 4
          %s573 = int_to_ptr.vmem [resolvable:$true] %s572
          %578 = dma.hbm_to_vmem [thread:$0]  %s8, 256, %s573, [#allocation12], 64, 64, 4
        $region32: #{tpu_custom_call.1} parent=11 // pred_fallthru
          _
        // Predicated region
        $region33: #{tpu_custom_call.1} parent=11 // pred_check
          %p579 = pneg %p267
        $region34: #{tpu_custom_call.1} parent=11 // pred_check_branch
          %581 = sbr.rel (%p579) target = $region36
        $region35: #{tpu_custom_call.1} parent=11 // pred_region
          %s583 = ssub.s32 16, 16
          %584 = vsyncadd [#allocation12], %s583
          %s586 = sshll.u32 [#allocation13], 4
          %s587 = int_to_ptr.vmem [resolvable:$true] %s586
          %589 = dma.hbm_to_vmem [thread:$0]  %s9, 16, %s587, [#allocation12]
        $region36: #{tpu_custom_call.1} parent=11 // pred_fallthru
          _
        // Predicated region
        $region37: #{tpu_custom_call.1} parent=11 // pred_check
          %p590 = pneg %p288
        $region38: #{tpu_custom_call.1} parent=11 // pred_check_branch
          %592 = sbr.rel (%p590) target = $region40
        $region39: #{tpu_custom_call.1} parent=11 // pred_region
          _
        $region40: #{tpu_custom_call.1} parent=11 // pred_fallthru
          _
        // Predicated region
        $region41: #{tpu_custom_call.1} parent=11 // pred_check
          %p593 = pneg %p309
        $region42: #{tpu_custom_call.1} parent=11 // pred_check_branch
          %595 = sbr.rel (%p593) target = $region44
        $region43: #{tpu_custom_call.1} parent=11 // pred_region
          %s597 = ssub.s32 16, 16
          %598 = vsyncadd [#allocation15], %s597
          %s600 = sshll.u32 [#allocation14], 4
          %s601 = int_to_ptr.vmem [resolvable:$true] %s600
          %603 = dma.hbm_to_vmem [thread:$0]  %s11, 16, %s601, [#allocation15]
        $region44: #{tpu_custom_call.1} parent=11 // pred_fallthru
          _
        // Predicated region
        $region45: #{tpu_custom_call.1} parent=11 // pred_check
          %p604 = pneg %p330
        $region46: #{tpu_custom_call.1} parent=11 // pred_check_branch
          %606 = sbr.rel (%p604) target = $region48
        $region47: #{tpu_custom_call.1} parent=11 // pred_region
          %s608 = ssub.s32 256, 256
          %609 = vsyncadd [#allocation15], %s608
          %s610 = sshll.u32 [#allocation16], 4
          %s611 = int_to_ptr.vmem [resolvable:$true] %s610
          %616 = dma.hbm_to_vmem [thread:$0]  %s12, 256, %s611, [#allocation15], 64, 64, 4
        $region48: #{tpu_custom_call.1} parent=11 // pred_fallthru
          _
        // Predicated region
        $region49: #{tpu_custom_call.1} parent=11 // pred_check
          %p617 = pneg %p351
        $region50: #{tpu_custom_call.1} parent=11 // pred_check_branch
          %619 = sbr.rel (%p617) target = $region52
        $region51: #{tpu_custom_call.1} parent=11 // pred_region
          _
        $region52: #{tpu_custom_call.1} parent=11 // pred_fallthru
          _
        // Predicated region
        $region53: #{tpu_custom_call.1} parent=11 // pred_check
          %p620 = pneg %p372
        $region54: #{tpu_custom_call.1} parent=11 // pred_check_branch
          %622 = sbr.rel (%p620) target = $region56
        $region55: #{tpu_custom_call.1} parent=11 // pred_region
          %s624 = ssub.s32 256, 256
          %625 = vsyncadd [#allocation18], %s624
          %s626 = sshll.u32 [#allocation17], 4
          %s627 = int_to_ptr.vmem [resolvable:$true] %s626
          %632 = dma.hbm_to_vmem [thread:$0]  %s14, 256, %s627, [#allocation18], 64, 64, 4
        $region56: #{tpu_custom_call.1} parent=11 // pred_fallthru
          _
        // Predicated region
        $region57: #{tpu_custom_call.1} parent=11 // pred_check
          %p633 = pneg %p393
        $region58: #{tpu_custom_call.1} parent=11 // pred_check_branch
          %635 = sbr.rel (%p633) target = $region60
        $region59: #{tpu_custom_call.1} parent=11 // pred_region
          _
        $region60: #{tpu_custom_call.1} parent=11 // pred_fallthru
          _
        // Predicated region
        $region61: #{tpu_custom_call.1} parent=11 // pred_check
          %p636 = pneg %p414
        $region62: #{tpu_custom_call.1} parent=11 // pred_check_branch
          %638 = sbr.rel (%p636) target = $region64
        $region63: #{tpu_custom_call.1} parent=11 // pred_region
          _
        $region64: #{tpu_custom_call.1} parent=11 // pred_fallthru
          _
        // Predicated region
        $region65: #{tpu_custom_call.1} parent=11 // pred_check
          %p639 = pneg %p435
        $region66: #{tpu_custom_call.1} parent=11 // pred_check_branch
          %641 = sbr.rel (%p639) target = $region68
        $region67: #{tpu_custom_call.1} parent=11 // pred_region
          _
        $region68: #{tpu_custom_call.1} parent=11 // pred_fallthru
          _
        // Predicated region
        $region69: #{tpu_custom_call.1} parent=11 // pred_check
          %p642 = pneg %p456
        $region70: #{tpu_custom_call.1} parent=11 // pred_check_branch
          %644 = sbr.rel (%p642) target = $region72
        $region71: #{tpu_custom_call.1} parent=11 // pred_region
          _
        $region72: #{tpu_custom_call.1} parent=11 // pred_fallthru
          _
        // Predicated region
        $region73: #{tpu_custom_call.1} parent=11 // pred_check
          %p645 = pneg %p477
        $region74: #{tpu_custom_call.1} parent=11 // pred_check_branch
          %647 = sbr.rel (%p645) target = $region76
        $region75: #{tpu_custom_call.1} parent=11 // pred_region
          _
        $region76: #{tpu_custom_call.1} parent=11 // pred_fallthru
          _
      $region12: #{tpu_custom_call.1} parent=5 // pred_fallthru
        _
      %p648 = scmp.lt.s32.totalorder %s37, 2
      // Predicated region
      $region77: #{tpu_custom_call.1} parent=5 // pred_check
        %p649 = pneg %p648
      $region78: #{tpu_custom_call.1} parent=5 // pred_check_branch
        %651 = sbr.rel (%p649) target = $region80
      $region79: #{tpu_custom_call.1} parent=5 // pred_region
        // Predicated region
        $region81: #{tpu_custom_call.1} parent=79 // pred_check
          %p652 = pneg %p57
        $region82: #{tpu_custom_call.1} parent=79 // pred_check_branch
          %654 = sbr.rel (%p652) target = $region84
        $region83: #{tpu_custom_call.1} parent=79 // pred_region
          %p655 = scmp.lt.s32.totalorder %s37, 1
          %s656 = scalar_select %p655, %s37, 1
          %s657 = smul.addr %s656, 8
          %s658 = scalar_lea.vmem %s0, %s657
        $region84: #{tpu_custom_call.1} parent=79 // pred_fallthru
          _
        // Predicated region
        $region85: #{tpu_custom_call.1} parent=79 // pred_check
          %p659 = pneg %p83
        $region86: #{tpu_custom_call.1} parent=79 // pred_check_branch
          %661 = sbr.rel (%p659) target = $region88
        $region87: #{tpu_custom_call.1} parent=79 // pred_region
          %p662 = scmp.lt.s32.totalorder %s37, 1
          %s663 = scalar_select %p662, %s37, 1
          %s664 = smul.addr %s663, 8
          %s665 = scalar_lea.vmem %s1, %s664
        $region88: #{tpu_custom_call.1} parent=79 // pred_fallthru
          _
        // Predicated region
        $region89: #{tpu_custom_call.1} parent=79 // pred_check
          %p666 = pneg %p109
        $region90: #{tpu_custom_call.1} parent=79 // pred_check_branch
          %668 = sbr.rel (%p666) target = $region92
        $region91: #{tpu_custom_call.1} parent=79 // pred_region
          %p669 = scmp.lt.s32.totalorder %s37, 1
          %s670 = scalar_select %p669, %s37, 1
          %s671 = smul.addr %s670, 8
          %s672 = scalar_lea.vmem %s2, %s671
        $region92: #{tpu_custom_call.1} parent=79 // pred_fallthru
          _
        // Predicated region
        $region93: #{tpu_custom_call.1} parent=79 // pred_check
          %p673 = pneg %p135
        $region94: #{tpu_custom_call.1} parent=79 // pred_check_branch
          %675 = sbr.rel (%p673) target = $region96
        $region95: #{tpu_custom_call.1} parent=79 // pred_region
          %s676 = sand.u32 %s125, 1
          %s677 = scalar_lea.sflag [#allocation3], %s676
          %s678 = sand.u32 %s125, 1
          %s679 = smul.addr %s678, 8
          %s680 = scalar_lea.vmem [#allocation2], %s679
          %s682 = ssub.s32 128, 128
          %683 = vsyncadd %s677, %s682
          %s684 = smul.addr %s37, 128
          %s685 = scalar_lea.hbm %s3, %s684
          %s687 = sshll.u32 %s680, 4
          %s688 = int_to_ptr.vmem [resolvable:$true] %s687
          %690 = dma.hbm_to_vmem [thread:$0]  %s685, 128, %s688, %s677
        $region96: #{tpu_custom_call.1} parent=79 // pred_fallthru
          _
      $region80: #{tpu_custom_call.1} parent=5 // pred_fallthru
        _
      %p691 = scmp.le.s32.totalorder 1, %s37
      %p692 = scmp.lt.s32.totalorder %s37, 3
      %p693 = pnand %p691, %p692
      %p694 = pneg %p693
      // Predicated region
      $region97: #{tpu_custom_call.1} parent=5 // pred_check
        _
      $region98: #{tpu_custom_call.1} parent=5 // pred_check_branch
        %696 = sbr.rel (%p693) target = $region100
      $region99: #{tpu_custom_call.1} parent=5 // pred_region
        %s697 = ssub.s32 %s37, 1
        %s698 = sand.u32 %s128, 1
        %s699 = scalar_lea.sflag [#allocation3], %s698
        %s700 = sand.u32 %s128, 1
        %s701 = smul.addr %s700, 8
        %s702 = scalar_lea.vmem [#allocation2], %s701
        // Predicated region
        $region101: #{tpu_custom_call.1} parent=99 // pred_check
          %p703 = pneg %p141
        $region102: #{tpu_custom_call.1} parent=99 // pred_check_branch
          %705 = sbr.rel (%p703) target = $region104
        $region103: #{tpu_custom_call.1} parent=99 // pred_region
          %706 = dma.done %s699, 128
        $region104: #{tpu_custom_call.1} parent=99 // pred_fallthru
          _
        // Predicated region
        $region105: #{tpu_custom_call.1} parent=99 // pred_check
          %p707 = pneg %p162
        $region106: #{tpu_custom_call.1} parent=99 // pred_check_branch
          %709 = sbr.rel (%p707) target = $region108
        $region107: #{tpu_custom_call.1} parent=99 // pred_region
          %710 = dma.done [#allocation6], 256
        $region108: #{tpu_custom_call.1} parent=99 // pred_fallthru
          _
        // Predicated region
        $region109: #{tpu_custom_call.1} parent=99 // pred_check
          %p711 = pneg %p183
        $region110: #{tpu_custom_call.1} parent=99 // pred_check_branch
          %713 = sbr.rel (%p711) target = $region112
        $region111: #{tpu_custom_call.1} parent=99 // pred_region
          %714 = dma.done [#allocation6], 16
        $region112: #{tpu_custom_call.1} parent=99 // pred_fallthru
          _
        // Predicated region
        $region113: #{tpu_custom_call.1} parent=99 // pred_check
          %p715 = pneg %p204
        $region114: #{tpu_custom_call.1} parent=99 // pred_check_branch
          %717 = sbr.rel (%p715) target = $region116
        $region115: #{tpu_custom_call.1} parent=99 // pred_region
          %718 = dma.done [#allocation9], 256
        $region116: #{tpu_custom_call.1} parent=99 // pred_fallthru
          _
        // Predicated region
        $region117: #{tpu_custom_call.1} parent=99 // pred_check
          %p719 = pneg %p225
        $region118: #{tpu_custom_call.1} parent=99 // pred_check_branch
          %721 = sbr.rel (%p719) target = $region120
        $region119: #{tpu_custom_call.1} parent=99 // pred_region
          %722 = dma.done [#allocation9], 16
        $region120: #{tpu_custom_call.1} parent=99 // pred_fallthru
          _
        // Predicated region
        $region121: #{tpu_custom_call.1} parent=99 // pred_check
          %p723 = pneg %p246
        $region122: #{tpu_custom_call.1} parent=99 // pred_check_branch
          %725 = sbr.rel (%p723) target = $region124
        $region123: #{tpu_custom_call.1} parent=99 // pred_region
          %726 = dma.done [#allocation12], 256
        $region124: #{tpu_custom_call.1} parent=99 // pred_fallthru
          _
        // Predicated region
        $region125: #{tpu_custom_call.1} parent=99 // pred_check
          %p727 = pneg %p267
        $region126: #{tpu_custom_call.1} parent=99 // pred_check_branch
          %729 = sbr.rel (%p727) target = $region128
        $region127: #{tpu_custom_call.1} parent=99 // pred_region
          %730 = dma.done [#allocation12], 16
        $region128: #{tpu_custom_call.1} parent=99 // pred_fallthru
          _
        // Predicated region
        $region129: #{tpu_custom_call.1} parent=99 // pred_check
          %p731 = pneg %p309
        $region130: #{tpu_custom_call.1} parent=99 // pred_check_branch
          %733 = sbr.rel (%p731) target = $region132
        $region131: #{tpu_custom_call.1} parent=99 // pred_region
          %734 = dma.done [#allocation15], 16
        $region132: #{tpu_custom_call.1} parent=99 // pred_fallthru
          _
        // Predicated region
        $region133: #{tpu_custom_call.1} parent=99 // pred_check
          %p735 = pneg %p330
        $region134: #{tpu_custom_call.1} parent=99 // pred_check_branch
          %737 = sbr.rel (%p735) target = $region136
        $region135: #{tpu_custom_call.1} parent=99 // pred_region
          %738 = dma.done [#allocation15], 256
        $region136: #{tpu_custom_call.1} parent=99 // pred_fallthru
          _
        // Predicated region
        $region137: #{tpu_custom_call.1} parent=99 // pred_check
          %p739 = pneg %p372
        $region138: #{tpu_custom_call.1} parent=99 // pred_check_branch
          %741 = sbr.rel (%p739) target = $region140
        $region139: #{tpu_custom_call.1} parent=99 // pred_region
          %742 = dma.done [#allocation18], 256
        $region140: #{tpu_custom_call.1} parent=99 // pred_fallthru
          _
        %p743 = scmp.lt.s32.totalorder %s42, 1
        %s744 = scalar_select %p743, %s42, 1
        %s745 = smul.addr %s744, 8
        %s746 = scalar_lea.vmem %s0, %s745
        %p747 = pneg %p63
        %p748 = pneg %p60
        %p749 = scmp.lt.s32.totalorder %s42, 1
        %s750 = scalar_select %p749, %s42, 1
        %s751 = smul.addr %s750, 8
        %s752 = scalar_lea.vmem %s1, %s751
        %p753 = pneg %p89
        %p754 = pneg %p86
        %p755 = scmp.lt.s32.totalorder %s42, 1
        %s756 = scalar_select %p755, %s42, 1
        %s757 = smul.addr %s756, 8
        %s758 = scalar_lea.vmem %s2, %s757
        %p759 = pneg %p115
        %p760 = pneg %p112
        %s761 = sand.u32 %s128, 1
        %s762 = scalar_lea.sflag [#allocation3], %s761
        %s763 = sand.u32 %s128, 1
        %s764 = smul.addr %s763, 8
        %s765 = scalar_lea.vmem [#allocation2], %s764
        %p766 = pneg %p141
        %p767 = pneg %p138
        %p768 = pneg %p162
        %p769 = pneg %p159
        %p770 = pneg %p183
        %p771 = pneg %p180
        %p772 = pneg %p204
        %p773 = pneg %p201
        %p774 = pneg %p225
        %p775 = pneg %p222
        %p776 = pneg %p246
        %p777 = pneg %p243
        %p778 = pneg %p267
        %p779 = pneg %p264
        %p780 = pneg %p288
        %p781 = pneg %p285
        %p782 = pneg %p309
        %p783 = pneg %p306
        %p784 = pneg %p330
        %p785 = pneg %p327
        %p786 = pneg %p351
        %p787 = pneg %p348
        %p788 = pneg %p372
        %p789 = pneg %p369
        %p790 = pneg %p393
        %p791 = pneg %p390
        %p792 = pneg %p414
        %p793 = pneg %p411
        %p794 = pneg %p435
        %p795 = pneg %p432
        %p796 = pneg %p456
        %p797 = pneg %p453
        %p798 = pneg %p477
        %p799 = pneg %p474
        %p800 = pneg %p503
        %p801 = pneg %p500
        %s802 = sand.u32 %s490, 1
        %s803 = scalar_lea.sflag [#allocation4], %s802
        %s804 = sand.u32 %s490, 1
        %s805 = smul.addr %s804, 8
        %s806 = scalar_lea.vmem [#allocation19], %s805
        %p807 = scmp.lt.s32.totalorder %s42, 1
        %s808 = scalar_select %p807, %s42, 1
        %s809 = smul.addr %s808, 8
        %s810 = scalar_lea.vmem %s0, %s809
        %p811 = scmp.lt.s32.totalorder %s42, 1
        %s812 = scalar_select %p811, %s42, 1
        %s813 = smul.addr %s812, 8
        %s814 = scalar_lea.vmem %s1, %s813
        %p815 = scmp.lt.s32.totalorder %s42, 1
        %s816 = scalar_select %p815, %s42, 1
        %s817 = smul.addr %s816, 8
        %s818 = scalar_lea.vmem %s2, %s817
        %v820 = vld [vmem:[%s810] sm:$0xff]
        %v821 = vld [vmem:[%s814] sm:$0xff]
        %v822 = vpack.c.bf16 %v820, %v820
        %v823 = vld [vmem:[#allocation5] sm:$0xf]
        %v824 = vld [vmem:[#allocation5 + $0x4] sm:$0xf]
        %v825 = vld [vmem:[#allocation5 + $0x8] sm:$0xf]
        %v826 = vld [vmem:[#allocation5 + $0xc] sm:$0xf]
        %v827 = vld [vmem:[#allocation7] sm:$0x1]
        %v829 = vlaneseq
        %v830 = vshrl.u32 %v829, 7
        %v831 = vsub.s32 0, %v830
        %v832 = vrot.slane %v827, %v831
        %v838 = vunpack.c.l.b16 %v823
        %v839 = vunpack.c.l.b16 %v824
        %v840 = vunpack.c.l.b16 %v825
        %v841 = vunpack.c.l.b16 %v826
        %v842 = vpack.c.b16 %v839, %v838
        %v843 = vpack.c.b16 %v841, %v840
        %vm846 = vcmask 261120
        %v848 = vsel %vm846, %v822, 0
        %850 = vmatprep.subr.bf16.mxu0 0
        %851 = vmatpush1.bf16.msra.mxu0 0
        %852 = vmatprep.subr.bf16.mxu0 0
        %853 = vmatpush1.bf16.msra.mxu0 0
        %854 = vmatprep.subr.bf16.mxu0 0
        %855 = vmatpush1.bf16.msra.mxu0 0
        %856 = vmatprep.subr.bf16.mxu0 0
        %857 = vmatpush1.bf16.msra.mxu0 0
        %858 = vmatprep.subr.bf16.mxu0 0
        %859 = vmatpush1.bf16.msra.mxu0 0
        %860 = vmatprep.subr.bf16.mxu0 0
        %861 = vmatpush1.bf16.msra.mxu0 0
        %862 = vmatprep.subr.bf16.mxu0 0
        %863 = vmatpush1.bf16.msra.mxu0 %v843
        %864 = vmatprep.subr.bf16.mxu0 0
        %865 = vmatpush1.bf16.msra.mxu0 %v842
        %866 = vmatprep.subr.bf16.mxu0 0
        %867 = vmatpush2.bf16.msra.mxu0 0
        %868 = vmatprep.subr.bf16.mxu0 0
        %869 = vmatpush2.bf16.msra.mxu0 0
        %870 = vmatprep.subr.bf16.mxu0 0
        %871 = vmatpush2.bf16.msra.mxu0 0
        %872 = vmatprep.subr.bf16.mxu0 0
        %873 = vmatpush2.bf16.msra.mxu0 0
        %874 = vmatprep.subr.bf16.mxu0 0
        %875 = vmatpush2.bf16.msra.mxu0 0
        %876 = vmatprep.subr.bf16.mxu0 0
        %877 = vmatpush2.bf16.msra.mxu0 0
        %878 = vmatprep.subr.bf16.mxu0 0
        %879 = vmatpush2.bf16.msra.mxu0 0
        %880 = vmatprep.subr.bf16.mxu0 0
        %881 = vmatpush2.bf16.msra.mxu0 0
        %882 = vmatprep.mubr.bf16.mxu0 0
        %883 = vmatmul.mubr.bf16.gmra.mxu0 %v848
        %v884 = vpop.f32.mrf.mxu0
        %v885 = vadd.f32 %v832, %v884
        %v886 = vpop.f32.mrf.mxu0
        %v887 = vpop.f32.mrf.mxu0
        %v888 = vpop.f32.mrf.mxu0
        %889 = vdwg.mxu0
        %v890 = vld [vmem:[%s818] sm:$0xff]
        %v891 = vpack.c.bf16 %v885, %v885
        %893 = vrot.lane.b32.xlu0 %v891, 96
        %v894 = vpop.permute.xlu0 %893
        %vm895 = vcmask 64512
        %v897 = vsel %vm895, %v891, 0
        %v900 = vsel %vm895, %v894, 0
        %902 = vmatprep.subr.bf16.mxu0 0
        %903 = vmatpush1.bf16.xpose.msra.mxu0 0
        %904 = vmatprep.subr.bf16.mxu0 0
        %905 = vmatpush1.bf16.xpose.msra.mxu0 0
        %906 = vmatprep.subr.bf16.mxu0 0
        %907 = vmatpush1.bf16.xpose.msra.mxu0 0
        %908 = vmatprep.subr.bf16.mxu0 0
        %909 = vmatpush1.bf16.xpose.msra.mxu0 0
        %910 = vmatprep.subr.bf16.mxu0 0
        %911 = vmatpush1.bf16.xpose.msra.mxu0 0
        %912 = vmatprep.subr.bf16.mxu0 0
        %913 = vmatpush1.bf16.xpose.msra.mxu0 0
        %914 = vmatprep.subr.bf16.mxu0 0
        %915 = vmatpush1.bf16.xpose.msra.mxu0 0
        %916 = vmatprep.subr.bf16.mxu0 0
        %917 = vmatpush1.bf16.xpose.msra.mxu0 %v900
        %918 = vmatprep.subr.bf16.mxu0 0
        %919 = vmatpush2.bf16.xpose.msra.mxu0 0
        %920 = vmatprep.subr.bf16.mxu0 0
        %921 = vmatpush2.bf16.xpose.msra.mxu0 0
        %922 = vmatprep.subr.bf16.mxu0 0
        %923 = vmatpush2.bf16.xpose.msra.mxu0 0
        %924 = vmatprep.subr.bf16.mxu0 0
        %925 = vmatpush2.bf16.xpose.msra.mxu0 0
        %926 = vmatprep.subr.bf16.mxu0 0
        %927 = vmatpush2.bf16.xpose.msra.mxu0 0
        %928 = vmatprep.subr.bf16.mxu0 0
        %929 = vmatpush2.bf16.xpose.msra.mxu0 0
        %930 = vmatprep.subr.bf16.mxu0 0
        %931 = vmatpush2.bf16.xpose.msra.mxu0 0
        %932 = vmatprep.subr.bf16.mxu0 0
        %933 = vmatpush2.bf16.xpose.msra.mxu0 0
        %934 = vmatprep.mubr.bf16.mxu0 0
        %935 = vmatmul.mubr.bf16.gmra.mxu0 %v897
        %v936 = vpop.f32.mrf.mxu0
        %v937 = vadd.f32 0.0, %v936
        %v938 = vpop.f32.mrf.mxu0
        %v939 = vpop.f32.mrf.mxu0
        %v940 = vpop.f32.mrf.mxu0
        %941 = vdwg.mxu0
        %vm942 = vcmp.eq.f32.partialorder %v890, 0.0
        %v943 = vsel %vm942, -1e+09, %v937
        %v944 = vsel %vm895, %v943, -inf
        %945 = vmax.xlane.f32.xlu0 %v944
        %v946 = vpop.xlane.xlu0 %945
        %v947 = vsub.f32 %v943, %v946
        %v948 = vmul.f32 %v947, 1.442695
        %v949 = vpow.pop %v948
        %v950 = vsel %vm895, %v949, 0.0
        %951 = vadd.xlane.f32.xlu0 %v950
        %v952 = vpop.xlane.xlu0 %951
        %v953 = vrcp.pop %v952
        %v954 = vmul.f32 %v949, %v953
        %v955 = vpack.c.bf16 %v954, %v954
        %956 = vrot.lane.b32.xlu0 %v891, 64
        %v957 = vpop.permute.xlu0 %956
        %v959 = vsel %vm895, %v955, 0
        %vm961 = vcmask 1043456
        %v963 = vsel %vm961, %v957, 0
        %965 = vmatprep.subr.bf16.mxu0 0
        %966 = vmatpush1.bf16.msra.mxu0 0
        %967 = vmatprep.subr.bf16.mxu0 0
        %968 = vmatpush1.bf16.msra.mxu0 0
        %969 = vmatprep.subr.bf16.mxu0 0
        %970 = vmatpush1.bf16.msra.mxu0 0
        %971 = vmatprep.subr.bf16.mxu0 0
        %972 = vmatpush1.bf16.msra.mxu0 0
        %973 = vmatprep.subr.bf16.mxu0 0
        %974 = vmatpush1.bf16.msra.mxu0 0
        %975 = vmatprep.subr.bf16.mxu0 0
        %976 = vmatpush1.bf16.msra.mxu0 0
        %977 = vmatprep.subr.bf16.mxu0 0
        %978 = vmatpush1.bf16.msra.mxu0 0
        %979 = vmatprep.subr.bf16.mxu0 0
        %980 = vmatpush1.bf16.msra.mxu0 %v963
        %981 = vmatprep.subr.bf16.mxu0 0
        %982 = vmatpush2.bf16.msra.mxu0 0
        %983 = vmatprep.subr.bf16.mxu0 0
        %984 = vmatpush2.bf16.msra.mxu0 0
        %985 = vmatprep.subr.bf16.mxu0 0
        %986 = vmatpush2.bf16.msra.mxu0 0
        %987 = vmatprep.subr.bf16.mxu0 0
        %988 = vmatpush2.bf16.msra.mxu0 0
        %989 = vmatprep.subr.bf16.mxu0 0
        %990 = vmatpush2.bf16.msra.mxu0 0
        %991 = vmatprep.subr.bf16.mxu0 0
        %992 = vmatpush2.bf16.msra.mxu0 0
        %993 = vmatprep.subr.bf16.mxu0 0
        %994 = vmatpush2.bf16.msra.mxu0 0
        %995 = vmatprep.subr.bf16.mxu0 0
        %996 = vmatpush2.bf16.msra.mxu0 0
        %997 = vmatprep.mubr.bf16.mxu0 0
        %998 = vmatmul.mubr.bf16.gmra.mxu0 %v959
        %v999 = vpop.f32.mrf.mxu0
        %v1000 = vadd.f32 0.0, %v999
        %v1001 = vpop.f32.mrf.mxu0
        %v1002 = vpop.f32.mrf.mxu0
        %v1003 = vpop.f32.mrf.mxu0
        %1004 = vdwg.mxu0
        %1005 = vrot.lane.b32.xlu0 %v891, 120
        %v1006 = vpop.permute.xlu0 %1005
        %1007 = vrot.lane.b32.xlu0 %v891, 88
        %v1008 = vpop.permute.xlu0 %1007
        %v1010 = vsel %vm895, %v1006, 0
        %v1013 = vsel %vm895, %v1008, 0
        %1015 = vmatprep.subr.bf16.mxu0 0
        %1016 = vmatpush1.bf16.xpose.msra.mxu0 0
        %1017 = vmatprep.subr.bf16.mxu0 0
        %1018 = vmatpush1.bf16.xpose.msra.mxu0 0
        %1019 = vmatprep.subr.bf16.mxu0 0
        %1020 = vmatpush1.bf16.xpose.msra.mxu0 0
        %1021 = vmatprep.subr.bf16.mxu0 0
        %1022 = vmatpush1.bf16.xpose.msra.mxu0 0
        %1023 = vmatprep.subr.bf16.mxu0 0
        %1024 = vmatpush1.bf16.xpose.msra.mxu0 0
        %1025 = vmatprep.subr.bf16.mxu0 0
        %1026 = vmatpush1.bf16.xpose.msra.mxu0 0
        %1027 = vmatprep.subr.bf16.mxu0 0
        %1028 = vmatpush1.bf16.xpose.msra.mxu0 0
        %1029 = vmatprep.subr.bf16.mxu0 0
        %1030 = vmatpush1.bf16.xpose.msra.mxu0 %v1013
        %1031 = vmatprep.subr.bf16.mxu0 0
        %1032 = vmatpush2.bf16.xpose.msra.mxu0 0
        %1033 = vmatprep.subr.bf16.mxu0 0
        %1034 = vmatpush2.bf16.xpose.msra.mxu0 0
        %1035 = vmatprep.subr.bf16.mxu0 0
        %1036 = vmatpush2.bf16.xpose.msra.mxu0 0
        %1037 = vmatprep.subr.bf16.mxu0 0
        %1038 = vmatpush2.bf16.xpose.msra.mxu0 0
        %1039 = vmatprep.subr.bf16.mxu0 0
        %1040 = vmatpush2.bf16.xpose.msra.mxu0 0
        %1041 = vmatprep.subr.bf16.mxu0 0
        %1042 = vmatpush2.bf16.xpose.msra.mxu0 0
        %1043 = vmatprep.subr.bf16.mxu0 0
        %1044 = vmatpush2.bf16.xpose.msra.mxu0 0
        %1045 = vmatprep.subr.bf16.mxu0 0
        %1046 = vmatpush2.bf16.xpose.msra.mxu0 0
        %1047 = vmatprep.mubr.bf16.mxu0 0
        %1048 = vmatmul.mubr.bf16.gmra.mxu0 %v1010
        %v1049 = vpop.f32.mrf.mxu0
        %v1050 = vadd.f32 0.0, %v1049
        %v1051 = vpop.f32.mrf.mxu0
        %v1052 = vpop.f32.mrf.mxu0
        %v1053 = vpop.f32.mrf.mxu0
        %1054 = vdwg.mxu0
        %v1055 = vsel %vm942, -1e+09, %v1050
        %v1056 = vsel %vm895, %v1055, -inf
        %1057 = vmax.xlane.f32.xlu0 %v1056
        %v1058 = vpop.xlane.xlu0 %1057
        %v1059 = vsub.f32 %v1055, %v1058
        %v1060 = vmul.f32 %v1059, 1.442695
        %v1061 = vpow.pop %v1060
        %v1062 = vsel %vm895, %v1061, 0.0
        %1063 = vadd.xlane.f32.xlu0 %v1062
        %v1064 = vpop.xlane.xlu0 %1063
        %v1065 = vrcp.pop %v1064
        %v1066 = vmul.f32 %v1061, %v1065
        %v1067 = vpack.c.bf16 %v1066, %v1066
        %1068 = vrot.lane.b32.xlu0 %v891, 56
        %v1069 = vpop.permute.xlu0 %1068
        %v1071 = vsel %vm895, %v1067, 0
        %v1074 = vsel %vm961, %v1069, 0
        %1076 = vmatprep.subr.bf16.mxu0 0
        %1077 = vmatpush1.bf16.msra.mxu0 0
        %1078 = vmatprep.subr.bf16.mxu0 0
        %1079 = vmatpush1.bf16.msra.mxu0 0
        %1080 = vmatprep.subr.bf16.mxu0 0
        %1081 = vmatpush1.bf16.msra.mxu0 0
        %1082 = vmatprep.subr.bf16.mxu0 0
        %1083 = vmatpush1.bf16.msra.mxu0 0
        %1084 = vmatprep.subr.bf16.mxu0 0
        %1085 = vmatpush1.bf16.msra.mxu0 0
        %1086 = vmatprep.subr.bf16.mxu0 0
        %1087 = vmatpush1.bf16.msra.mxu0 0
        %1088 = vmatprep.subr.bf16.mxu0 0
        %1089 = vmatpush1.bf16.msra.mxu0 0
        %1090 = vmatprep.subr.bf16.mxu0 0
        %1091 = vmatpush1.bf16.msra.mxu0 %v1074
        %1092 = vmatprep.subr.bf16.mxu0 0
        %1093 = vmatpush2.bf16.msra.mxu0 0
        %1094 = vmatprep.subr.bf16.mxu0 0
        %1095 = vmatpush2.bf16.msra.mxu0 0
        %1096 = vmatprep.subr.bf16.mxu0 0
        %1097 = vmatpush2.bf16.msra.mxu0 0
        %1098 = vmatprep.subr.bf16.mxu0 0
        %1099 = vmatpush2.bf16.msra.mxu0 0
        %1100 = vmatprep.subr.bf16.mxu0 0
        %1101 = vmatpush2.bf16.msra.mxu0 0
        %1102 = vmatprep.subr.bf16.mxu0 0
        %1103 = vmatpush2.bf16.msra.mxu0 0
        %1104 = vmatprep.subr.bf16.mxu0 0
        %1105 = vmatpush2.bf16.msra.mxu0 0
        %1106 = vmatprep.subr.bf16.mxu0 0
        %1107 = vmatpush2.bf16.msra.mxu0 0
        %1108 = vmatprep.mubr.bf16.mxu0 0
        %1109 = vmatmul.mubr.bf16.gmra.mxu0 %v1071
        %v1110 = vpop.f32.mrf.mxu0
        %v1111 = vadd.f32 0.0, %v1110
        %v1112 = vpop.f32.mrf.mxu0
        %v1113 = vpop.f32.mrf.mxu0
        %v1114 = vpop.f32.mrf.mxu0
        %1115 = vdwg.mxu0
        %1116 = vrot.lane.b32.xlu0 %v891, 112
        %v1117 = vpop.permute.xlu0 %1116
        %1118 = vrot.lane.b32.xlu0 %v891, 80
        %v1119 = vpop.permute.xlu0 %1118
        %v1121 = vsel %vm895, %v1117, 0
        %v1124 = vsel %vm895, %v1119, 0
        %1126 = vmatprep.subr.bf16.mxu0 0
        %1127 = vmatpush1.bf16.xpose.msra.mxu0 0
        %1128 = vmatprep.subr.bf16.mxu0 0
        %1129 = vmatpush1.bf16.xpose.msra.mxu0 0
        %1130 = vmatprep.subr.bf16.mxu0 0
        %1131 = vmatpush1.bf16.xpose.msra.mxu0 0
        %1132 = vmatprep.subr.bf16.mxu0 0
        %1133 = vmatpush1.bf16.xpose.msra.mxu0 0
        %1134 = vmatprep.subr.bf16.mxu0 0
        %1135 = vmatpush1.bf16.xpose.msra.mxu0 0
        %1136 = vmatprep.subr.bf16.mxu0 0
        %1137 = vmatpush1.bf16.xpose.msra.mxu0 0
        %1138 = vmatprep.subr.bf16.mxu0 0
        %1139 = vmatpush1.bf16.xpose.msra.mxu0 0
        %1140 = vmatprep.subr.bf16.mxu0 0
        %1141 = vmatpush1.bf16.xpose.msra.mxu0 %v1124
        %1142 = vmatprep.subr.bf16.mxu0 0
        %1143 = vmatpush2.bf16.xpose.msra.mxu0 0
        %1144 = vmatprep.subr.bf16.mxu0 0
        %1145 = vmatpush2.bf16.xpose.msra.mxu0 0
        %1146 = vmatprep.subr.bf16.mxu0 0
        %1147 = vmatpush2.bf16.xpose.msra.mxu0 0
        %1148 = vmatprep.subr.bf16.mxu0 0
        %1149 = vmatpush2.bf16.xpose.msra.mxu0 0
        %1150 = vmatprep.subr.bf16.mxu0 0
        %1151 = vmatpush2.bf16.xpose.msra.mxu0 0
        %1152 = vmatprep.subr.bf16.mxu0 0
        %1153 = vmatpush2.bf16.xpose.msra.mxu0 0
        %1154 = vmatprep.subr.bf16.mxu0 0
        %1155 = vmatpush2.bf16.xpose.msra.mxu0 0
        %1156 = vmatprep.subr.bf16.mxu0 0
        %1157 = vmatpush2.bf16.xpose.msra.mxu0 0
        %1158 = vmatprep.mubr.bf16.mxu0 0
        %1159 = vmatmul.mubr.bf16.gmra.mxu0 %v1121
        %v1160 = vpop.f32.mrf.mxu0
        %v1161 = vadd.f32 0.0, %v1160
        %v1162 = vpop.f32.mrf.mxu0
        %v1163 = vpop.f32.mrf.mxu0
        %v1164 = vpop.f32.mrf.mxu0
        %1165 = vdwg.mxu0
        %v1166 = vsel %vm942, -1e+09, %v1161
        %v1167 = vsel %vm895, %v1166, -inf
        %1168 = vmax.xlane.f32.xlu0 %v1167
        %v1169 = vpop.xlane.xlu0 %1168
        %v1170 = vsub.f32 %v1166, %v1169
        %v1171 = vmul.f32 %v1170, 1.442695
        %v1172 = vpow.pop %v1171
        %v1173 = vsel %vm895, %v1172, 0.0
        %1174 = vadd.xlane.f32.xlu0 %v1173
        %v1175 = vpop.xlane.xlu0 %1174
        %v1176 = vrcp.pop %v1175
        %v1177 = vmul.f32 %v1172, %v1176
        %v1178 = vpack.c.bf16 %v1177, %v1177
        %1179 = vrot.lane.b32.xlu0 %v891, 48
        %v1180 = vpop.permute.xlu0 %1179
        %v1182 = vsel %vm895, %v1178, 0
        %v1185 = vsel %vm961, %v1180, 0
        %1187 = vmatprep.subr.bf16.mxu0 0
        %1188 = vmatpush1.bf16.msra.mxu0 0
        %1189 = vmatprep.subr.bf16.mxu0 0
        %1190 = vmatpush1.bf16.msra.mxu0 0
        %1191 = vmatprep.subr.bf16.mxu0 0
        %1192 = vmatpush1.bf16.msra.mxu0 0
        %1193 = vmatprep.subr.bf16.mxu0 0
        %1194 = vmatpush1.bf16.msra.mxu0 0
        %1195 = vmatprep.subr.bf16.mxu0 0
        %1196 = vmatpush1.bf16.msra.mxu0 0
        %1197 = vmatprep.subr.bf16.mxu0 0
        %1198 = vmatpush1.bf16.msra.mxu0 0
        %1199 = vmatprep.subr.bf16.mxu0 0
        %1200 = vmatpush1.bf16.msra.mxu0 0
        %1201 = vmatprep.subr.bf16.mxu0 0
        %1202 = vmatpush1.bf16.msra.mxu0 %v1185
        %1203 = vmatprep.subr.bf16.mxu0 0
        %1204 = vmatpush2.bf16.msra.mxu0 0
        %1205 = vmatprep.subr.bf16.mxu0 0
        %1206 = vmatpush2.bf16.msra.mxu0 0
        %1207 = vmatprep.subr.bf16.mxu0 0
        %1208 = vmatpush2.bf16.msra.mxu0 0
        %1209 = vmatprep.subr.bf16.mxu0 0
        %1210 = vmatpush2.bf16.msra.mxu0 0
        %1211 = vmatprep.subr.bf16.mxu0 0
        %1212 = vmatpush2.bf16.msra.mxu0 0
        %1213 = vmatprep.subr.bf16.mxu0 0
        %1214 = vmatpush2.bf16.msra.mxu0 0
        %1215 = vmatprep.subr.bf16.mxu0 0
        %1216 = vmatpush2.bf16.msra.mxu0 0
        %1217 = vmatprep.subr.bf16.mxu0 0
        %1218 = vmatpush2.bf16.msra.mxu0 0
        %1219 = vmatprep.mubr.bf16.mxu0 0
        %1220 = vmatmul.mubr.bf16.gmra.mxu0 %v1182
        %v1221 = vpop.f32.mrf.mxu0
        %v1222 = vadd.f32 0.0, %v1221
        %v1223 = vpop.f32.mrf.mxu0
        %v1224 = vpop.f32.mrf.mxu0
        %v1225 = vpop.f32.mrf.mxu0
        %1226 = vdwg.mxu0
        %1227 = vrot.lane.b32.xlu0 %v891, 104
        %v1228 = vpop.permute.xlu0 %1227
        %1229 = vrot.lane.b32.xlu0 %v891, 72
        %v1230 = vpop.permute.xlu0 %1229
        %v1232 = vsel %vm895, %v1228, 0
        %v1235 = vsel %vm895, %v1230, 0
        %1237 = vmatprep.subr.bf16.mxu0 0
        %1238 = vmatpush1.bf16.xpose.msra.mxu0 0
        %1239 = vmatprep.subr.bf16.mxu0 0
        %1240 = vmatpush1.bf16.xpose.msra.mxu0 0
        %1241 = vmatprep.subr.bf16.mxu0 0
        %1242 = vmatpush1.bf16.xpose.msra.mxu0 0
        %1243 = vmatprep.subr.bf16.mxu0 0
        %1244 = vmatpush1.bf16.xpose.msra.mxu0 0
        %1245 = vmatprep.subr.bf16.mxu0 0
        %1246 = vmatpush1.bf16.xpose.msra.mxu0 0
        %1247 = vmatprep.subr.bf16.mxu0 0
        %1248 = vmatpush1.bf16.xpose.msra.mxu0 0
        %1249 = vmatprep.subr.bf16.mxu0 0
        %1250 = vmatpush1.bf16.xpose.msra.mxu0 0
        %1251 = vmatprep.subr.bf16.mxu0 0
        %1252 = vmatpush1.bf16.xpose.msra.mxu0 %v1235
        %1253 = vmatprep.subr.bf16.mxu0 0
        %1254 = vmatpush2.bf16.xpose.msra.mxu0 0
        %1255 = vmatprep.subr.bf16.mxu0 0
        %1256 = vmatpush2.bf16.xpose.msra.mxu0 0
        %1257 = vmatprep.subr.bf16.mxu0 0
        %1258 = vmatpush2.bf16.xpose.msra.mxu0 0
        %1259 = vmatprep.subr.bf16.mxu0 0
        %1260 = vmatpush2.bf16.xpose.msra.mxu0 0
        %1261 = vmatprep.subr.bf16.mxu0 0
        %1262 = vmatpush2.bf16.xpose.msra.mxu0 0
        %1263 = vmatprep.subr.bf16.mxu0 0
        %1264 = vmatpush2.bf16.xpose.msra.mxu0 0
        %1265 = vmatprep.subr.bf16.mxu0 0
        %1266 = vmatpush2.bf16.xpose.msra.mxu0 0
        %1267 = vmatprep.subr.bf16.mxu0 0
        %1268 = vmatpush2.bf16.xpose.msra.mxu0 0
        %1269 = vmatprep.mubr.bf16.mxu0 0
        %1270 = vmatmul.mubr.bf16.gmra.mxu0 %v1232
        %v1271 = vpop.f32.mrf.mxu0
        %v1272 = vadd.f32 0.0, %v1271
        %v1273 = vpop.f32.mrf.mxu0
        %v1274 = vpop.f32.mrf.mxu0
        %v1275 = vpop.f32.mrf.mxu0
        %1276 = vdwg.mxu0
        %v1277 = vsel %vm942, -1e+09, %v1272
        %v1278 = vsel %vm895, %v1277, -inf
        %1279 = vmax.xlane.f32.xlu0 %v1278
        %v1280 = vpop.xlane.xlu0 %1279
        %v1281 = vsub.f32 %v1277, %v1280
        %v1282 = vmul.f32 %v1281, 1.442695
        %v1283 = vpow.pop %v1282
        %v1284 = vsel %vm895, %v1283, 0.0
        %1285 = vadd.xlane.f32.xlu0 %v1284
        %v1286 = vpop.xlane.xlu0 %1285
        %v1287 = vrcp.pop %v1286
        %v1288 = vmul.f32 %v1283, %v1287
        %v1289 = vpack.c.bf16 %v1288, %v1288
        %1290 = vrot.lane.b32.xlu0 %v891, 40
        %v1291 = vpop.permute.xlu0 %1290
        %v1293 = vsel %vm895, %v1289, 0
        %v1296 = vsel %vm961, %v1291, 0
        %1298 = vmatprep.subr.bf16.mxu0 0
        %1299 = vmatpush1.bf16.msra.mxu0 0
        %1300 = vmatprep.subr.bf16.mxu0 0
        %1301 = vmatpush1.bf16.msra.mxu0 0
        %1302 = vmatprep.subr.bf16.mxu0 0
        %1303 = vmatpush1.bf16.msra.mxu0 0
        %1304 = vmatprep.subr.bf16.mxu0 0
        %1305 = vmatpush1.bf16.msra.mxu0 0
        %1306 = vmatprep.subr.bf16.mxu0 0
        %1307 = vmatpush1.bf16.msra.mxu0 0
        %1308 = vmatprep.subr.bf16.mxu0 0
        %1309 = vmatpush1.bf16.msra.mxu0 0
        %1310 = vmatprep.subr.bf16.mxu0 0
        %1311 = vmatpush1.bf16.msra.mxu0 0
        %1312 = vmatprep.subr.bf16.mxu0 0
        %1313 = vmatpush1.bf16.msra.mxu0 %v1296
        %1314 = vmatprep.subr.bf16.mxu0 0
        %1315 = vmatpush2.bf16.msra.mxu0 0
        %1316 = vmatprep.subr.bf16.mxu0 0
        %1317 = vmatpush2.bf16.msra.mxu0 0
        %1318 = vmatprep.subr.bf16.mxu0 0
        %1319 = vmatpush2.bf16.msra.mxu0 0
        %1320 = vmatprep.subr.bf16.mxu0 0
        %1321 = vmatpush2.bf16.msra.mxu0 0
        %1322 = vmatprep.subr.bf16.mxu0 0
        %1323 = vmatpush2.bf16.msra.mxu0 0
        %1324 = vmatprep.subr.bf16.mxu0 0
        %1325 = vmatpush2.bf16.msra.mxu0 0
        %1326 = vmatprep.subr.bf16.mxu0 0
        %1327 = vmatpush2.bf16.msra.mxu0 0
        %1328 = vmatprep.subr.bf16.mxu0 0
        %1329 = vmatpush2.bf16.msra.mxu0 0
        %1330 = vmatprep.mubr.bf16.mxu0 0
        %1331 = vmatmul.mubr.bf16.gmra.mxu0 %v1293
        %v1332 = vpop.f32.mrf.mxu0
        %v1333 = vadd.f32 0.0, %v1332
        %v1334 = vpop.f32.mrf.mxu0
        %v1335 = vpop.f32.mrf.mxu0
        %v1336 = vpop.f32.mrf.mxu0
        %1337 = vdwg.mxu0
        %1339 = vrot.lane.b32.xlu0 %v1111, 8
        %v1340 = vpop.permute.xlu0 %1339
        %1343 = vrot.lane.b32.xlu0 %v1222, 16
        %v1344 = vpop.permute.xlu0 %1343
        %1347 = vrot.lane.b32.xlu0 %v1333, 24
        %v1348 = vpop.permute.xlu0 %1347
        %v1350 = vsel %vm895, %v1000, %v1340
        %vm1351 = vcmask 130048
        %v1352 = vsel %vm1351, %v1350, %v1344
        %vm1353 = vcmask 195584
        %v1354 = vsel %vm1353, %v1352, %v1348
        %v1355 = vpack.c.bf16 %v1354, %v1354
        %v1356 = vld [vmem:[#allocation8] sm:$0xf]
        %v1357 = vld [vmem:[#allocation8 + $0x4] sm:$0xf]
        %v1358 = vld [vmem:[#allocation8 + $0x8] sm:$0xf]
        %v1359 = vld [vmem:[#allocation8 + $0xc] sm:$0xf]
        %v1360 = vld [vmem:[#allocation10] sm:$0x1]
        %v1362 = vlaneseq
        %v1363 = vshrl.u32 %v1362, 7
        %v1364 = vsub.s32 0, %v1363
        %v1365 = vrot.slane %v1360, %v1364
        %v1371 = vunpack.c.l.b16 %v1356
        %v1372 = vunpack.c.l.b16 %v1357
        %v1373 = vunpack.c.l.b16 %v1358
        %v1374 = vunpack.c.l.b16 %v1359
        %v1375 = vpack.c.b16 %v1372, %v1371
        %v1376 = vpack.c.b16 %v1374, %v1373
        %v1380 = vsel %vm846, %v1355, 0
        %1382 = vmatprep.subr.bf16.mxu0 0
        %1383 = vmatpush1.bf16.msra.mxu0 0
        %1384 = vmatprep.subr.bf16.mxu0 0
        %1385 = vmatpush1.bf16.msra.mxu0 0
        %1386 = vmatprep.subr.bf16.mxu0 0
        %1387 = vmatpush1.bf16.msra.mxu0 0
        %1388 = vmatprep.subr.bf16.mxu0 0
        %1389 = vmatpush1.bf16.msra.mxu0 0
        %1390 = vmatprep.subr.bf16.mxu0 0
        %1391 = vmatpush1.bf16.msra.mxu0 0
        %1392 = vmatprep.subr.bf16.mxu0 0
        %1393 = vmatpush1.bf16.msra.mxu0 0
        %1394 = vmatprep.subr.bf16.mxu0 0
        %1395 = vmatpush1.bf16.msra.mxu0 %v1376
        %1396 = vmatprep.subr.bf16.mxu0 0
        %1397 = vmatpush1.bf16.msra.mxu0 %v1375
        %1398 = vmatprep.subr.bf16.mxu0 0
        %1399 = vmatpush2.bf16.msra.mxu0 0
        %1400 = vmatprep.subr.bf16.mxu0 0
        %1401 = vmatpush2.bf16.msra.mxu0 0
        %1402 = vmatprep.subr.bf16.mxu0 0
        %1403 = vmatpush2.bf16.msra.mxu0 0
        %1404 = vmatprep.subr.bf16.mxu0 0
        %1405 = vmatpush2.bf16.msra.mxu0 0
        %1406 = vmatprep.subr.bf16.mxu0 0
        %1407 = vmatpush2.bf16.msra.mxu0 0
        %1408 = vmatprep.subr.bf16.mxu0 0
        %1409 = vmatpush2.bf16.msra.mxu0 0
        %1410 = vmatprep.subr.bf16.mxu0 0
        %1411 = vmatpush2.bf16.msra.mxu0 0
        %1412 = vmatprep.subr.bf16.mxu0 0
        %1413 = vmatpush2.bf16.msra.mxu0 0
        %1414 = vmatprep.mubr.bf16.mxu0 0
        %1415 = vmatmul.mubr.bf16.gmra.mxu0 %v1380
        %v1416 = vpop.f32.mrf.mxu0
        %v1417 = vadd.f32 %v1365, %v1416
        %v1418 = vpop.f32.mrf.mxu0
        %v1419 = vpop.f32.mrf.mxu0
        %v1420 = vpop.f32.mrf.mxu0
        %1421 = vdwg.mxu0
        %v1422 = vadd.f32 %v820, %v1417
        %v1423 = vsel %vm846, %v1422, 0.0
        %1424 = vadd.xlane.f32.xlu0 %v1423
        %v1425 = vpop.xlane.xlu0 %1424
        %v1426 = vrcp.pop 32.0
        %v1427 = vmul.f32 %v1425, %v1426
        %v1428 = vsub.f32 %v1422, %v1427
        %v1429 = vmul.f32 %v1428, %v1428
        %v1430 = vsel %vm846, %v1429, 0.0
        %1431 = vadd.xlane.f32.xlu0 %v1430
        %v1432 = vpop.xlane.xlu0 %1431
        %v1433 = vmul.f32 %v1432, %v1426
        %v1434 = vadd.f32 %v1433, 1e-05
        %v1435 = vrsqrt.pop %v1434
        %v1436 = vmul.f32 %v1428, %v1435
        %v1437 = vld [vmem:[%s18] sm:$0x1]
        %v1438 = vld [vmem:[%s19] sm:$0x1]
        %v1439 = vlaneseq
        %v1440 = vshrl.u32 %v1439, 7
        %v1441 = vsub.s32 0, %v1440
        %v1442 = vrot.slane %v1437, %v1441
        %v1443 = vmul.f32 %v1436, %v1442
        %v1444 = vlaneseq
        %v1445 = vshrl.u32 %v1444, 7
        %v1446 = vsub.s32 0, %v1445
        %v1447 = vrot.slane %v1438, %v1446
        %v1448 = vadd.f32 %v1443, %v1447
        %v1449 = vpack.c.bf16 %v1448, %v1448
        %v1450 = vld [vmem:[#allocation11] sm:$0xf]
        %v1451 = vld [vmem:[#allocation11 + $0x4] sm:$0xf]
        %v1452 = vld [vmem:[#allocation11 + $0x8] sm:$0xf]
        %v1453 = vld [vmem:[#allocation11 + $0xc] sm:$0xf]
        %v1454 = vld [vmem:[#allocation13] sm:$0x1]
        %v1456 = vlaneseq
        %v1457 = vshrl.u32 %v1456, 7
        %v1458 = vsub.s32 0, %v1457
        %v1459 = vrot.slane %v1454, %v1458
        %v1465 = vunpack.c.l.b16 %v1450
        %v1466 = vunpack.c.l.b16 %v1451
        %v1467 = vunpack.c.l.b16 %v1452
        %v1468 = vunpack.c.l.b16 %v1453
        %v1469 = vpack.c.b16 %v1466, %v1465
        %v1470 = vpack.c.b16 %v1468, %v1467
        %v1474 = vsel %vm846, %v1449, 0
        %1476 = vmatprep.subr.bf16.mxu0 0
        %1477 = vmatpush1.bf16.msra.mxu0 0
        %1478 = vmatprep.subr.bf16.mxu0 0
        %1479 = vmatpush1.bf16.msra.mxu0 0
        %1480 = vmatprep.subr.bf16.mxu0 0
        %1481 = vmatpush1.bf16.msra.mxu0 0
        %1482 = vmatprep.subr.bf16.mxu0 0
        %1483 = vmatpush1.bf16.msra.mxu0 0
        %1484 = vmatprep.subr.bf16.mxu0 0
        %1485 = vmatpush1.bf16.msra.mxu0 0
        %1486 = vmatprep.subr.bf16.mxu0 0
        %1487 = vmatpush1.bf16.msra.mxu0 0
        %1488 = vmatprep.subr.bf16.mxu0 0
        %1489 = vmatpush1.bf16.msra.mxu0 %v1470
        %1490 = vmatprep.subr.bf16.mxu0 0
        %1491 = vmatpush1.bf16.msra.mxu0 %v1469
        %1492 = vmatprep.subr.bf16.mxu0 0
        %1493 = vmatpush2.bf16.msra.mxu0 0
        %1494 = vmatprep.subr.bf16.mxu0 0
        %1495 = vmatpush2.bf16.msra.mxu0 0
        %1496 = vmatprep.subr.bf16.mxu0 0
        %1497 = vmatpush2.bf16.msra.mxu0 0
        %1498 = vmatprep.subr.bf16.mxu0 0
        %1499 = vmatpush2.bf16.msra.mxu0 0
        %1500 = vmatprep.subr.bf16.mxu0 0
        %1501 = vmatpush2.bf16.msra.mxu0 0
        %1502 = vmatprep.subr.bf16.mxu0 0
        %1503 = vmatpush2.bf16.msra.mxu0 0
        %1504 = vmatprep.subr.bf16.mxu0 0
        %1505 = vmatpush2.bf16.msra.mxu0 0
        %1506 = vmatprep.subr.bf16.mxu0 0
        %1507 = vmatpush2.bf16.msra.mxu0 0
        %1508 = vmatprep.mubr.bf16.mxu0 0
        %1509 = vmatmul.mubr.bf16.gmra.mxu0 %v1474
        %v1510 = vpop.f32.mrf.mxu0
        %v1511 = vadd.f32 %v1459, %v1510
        %v1512 = vpop.f32.mrf.mxu0
        %v1513 = vpop.f32.mrf.mxu0
        %v1514 = vpop.f32.mrf.mxu0
        %1515 = vdwg.mxu0
        %v1516 = vpack.c.bf16 %v821, %v821
        %v1517 = vld [vmem:[%s10] sm:$0xf]
        %v1518 = vld [vmem:[%s10 + $0x4] sm:$0xf]
        %v1519 = vld [vmem:[%s10 + $0x8] sm:$0xf]
        %v1520 = vld [vmem:[%s10 + $0xc] sm:$0xf]
        %v1521 = vld [vmem:[#allocation14] sm:$0x1]
        %v1523 = vlaneseq
        %v1524 = vshrl.u32 %v1523, 7
        %v1525 = vsub.s32 0, %v1524
        %v1526 = vrot.slane %v1521, %v1525
        %v1532 = vunpack.c.l.b16 %v1517
        %v1533 = vunpack.c.l.b16 %v1518
        %v1534 = vunpack.c.l.b16 %v1519
        %v1535 = vunpack.c.l.b16 %v1520
        %v1536 = vpack.c.b16 %v1533, %v1532
        %v1537 = vpack.c.b16 %v1535, %v1534
        %v1541 = vsel %vm846, %v1516, 0
        %1543 = vmatprep.subr.bf16.mxu0 0
        %1544 = vmatpush1.bf16.msra.mxu0 0
        %1545 = vmatprep.subr.bf16.mxu0 0
        %1546 = vmatpush1.bf16.msra.mxu0 0
        %1547 = vmatprep.subr.bf16.mxu0 0
        %1548 = vmatpush1.bf16.msra.mxu0 0
        %1549 = vmatprep.subr.bf16.mxu0 0
        %1550 = vmatpush1.bf16.msra.mxu0 0
        %1551 = vmatprep.subr.bf16.mxu0 0
        %1552 = vmatpush1.bf16.msra.mxu0 0
        %1553 = vmatprep.subr.bf16.mxu0 0
        %1554 = vmatpush1.bf16.msra.mxu0 0
        %1555 = vmatprep.subr.bf16.mxu0 0
        %1556 = vmatpush1.bf16.msra.mxu0 %v1537
        %1557 = vmatprep.subr.bf16.mxu0 0
        %1558 = vmatpush1.bf16.msra.mxu0 %v1536
        %1559 = vmatprep.subr.bf16.mxu0 0
        %1560 = vmatpush2.bf16.msra.mxu0 0
        %1561 = vmatprep.subr.bf16.mxu0 0
        %1562 = vmatpush2.bf16.msra.mxu0 0
        %1563 = vmatprep.subr.bf16.mxu0 0
        %1564 = vmatpush2.bf16.msra.mxu0 0
        %1565 = vmatprep.subr.bf16.mxu0 0
        %1566 = vmatpush2.bf16.msra.mxu0 0
        %1567 = vmatprep.subr.bf16.mxu0 0
        %1568 = vmatpush2.bf16.msra.mxu0 0
        %1569 = vmatprep.subr.bf16.mxu0 0
        %1570 = vmatpush2.bf16.msra.mxu0 0
        %1571 = vmatprep.subr.bf16.mxu0 0
        %1572 = vmatpush2.bf16.msra.mxu0 0
        %1573 = vmatprep.subr.bf16.mxu0 0
        %1574 = vmatpush2.bf16.msra.mxu0 0
        %1575 = vmatprep.mubr.bf16.mxu0 0
        %1576 = vmatmul.mubr.bf16.gmra.mxu0 %v1541
        %v1577 = vpop.f32.mrf.mxu0
        %v1578 = vadd.f32 %v1526, %v1577
        %v1579 = vpop.f32.mrf.mxu0
        %v1580 = vpop.f32.mrf.mxu0
        %v1581 = vpop.f32.mrf.mxu0
        %1582 = vdwg.mxu0
        %v1583 = vld [vmem:[%s702] sm:$0xff]
        %v1584 = vpack.c.bf16 %v1511, %v1511
        %v1585 = vpack.c.bf16 %v1578, %v1578
        %v1587 = vsel %vm895, %v1584, 0
        %v1590 = vsel %vm895, %v1585, 0
        %1592 = vmatprep.subr.bf16.mxu0 0
        %1593 = vmatpush1.bf16.xpose.msra.mxu0 0
        %1594 = vmatprep.subr.bf16.mxu0 0
        %1595 = vmatpush1.bf16.xpose.msra.mxu0 0
        %1596 = vmatprep.subr.bf16.mxu0 0
        %1597 = vmatpush1.bf16.xpose.msra.mxu0 0
        %1598 = vmatprep.subr.bf16.mxu0 0
        %1599 = vmatpush1.bf16.xpose.msra.mxu0 0
        %1600 = vmatprep.subr.bf16.mxu0 0
        %1601 = vmatpush1.bf16.xpose.msra.mxu0 0
        %1602 = vmatprep.subr.bf16.mxu0 0
        %1603 = vmatpush1.bf16.xpose.msra.mxu0 0
        %1604 = vmatprep.subr.bf16.mxu0 0
        %1605 = vmatpush1.bf16.xpose.msra.mxu0 0
        %1606 = vmatprep.subr.bf16.mxu0 0
        %1607 = vmatpush1.bf16.xpose.msra.mxu0 %v1590
        %1608 = vmatprep.subr.bf16.mxu0 0
        %1609 = vmatpush2.bf16.xpose.msra.mxu0 0
        %1610 = vmatprep.subr.bf16.mxu0 0
        %1611 = vmatpush2.bf16.xpose.msra.mxu0 0
        %1612 = vmatprep.subr.bf16.mxu0 0
        %1613 = vmatpush2.bf16.xpose.msra.mxu0 0
        %1614 = vmatprep.subr.bf16.mxu0 0
        %1615 = vmatpush2.bf16.xpose.msra.mxu0 0
        %1616 = vmatprep.subr.bf16.mxu0 0
        %1617 = vmatpush2.bf16.xpose.msra.mxu0 0
        %1618 = vmatprep.subr.bf16.mxu0 0
        %1619 = vmatpush2.bf16.xpose.msra.mxu0 0
        %1620 = vmatprep.subr.bf16.mxu0 0
        %1621 = vmatpush2.bf16.xpose.msra.mxu0 0
        %1622 = vmatprep.subr.bf16.mxu0 0
        %1623 = vmatpush2.bf16.xpose.msra.mxu0 0
        %1624 = vmatprep.mubr.bf16.mxu0 0
        %1625 = vmatmul.mubr.bf16.gmra.mxu0 %v1587
        %v1626 = vpop.f32.mrf.mxu0
        %v1627 = vadd.f32 0.0, %v1626
        %v1628 = vpop.f32.mrf.mxu0
        %v1629 = vpop.f32.mrf.mxu0
        %v1630 = vpop.f32.mrf.mxu0
        %1631 = vdwg.mxu0
        %vm1632 = vcmp.eq.f32.partialorder %v1583, 0.0
        %v1633 = vsel %vm1632, -1e+09, %v1627
        %v1634 = vsel %vm895, %v1633, -inf
        %1635 = vmax.xlane.f32.xlu0 %v1634
        %v1636 = vpop.xlane.xlu0 %1635
        %v1637 = vsub.f32 %v1633, %v1636
        %v1638 = vmul.f32 %v1637, 1.442695
        %v1639 = vpow.pop %v1638
        %v1640 = vsel %vm895, %v1639, 0.0
        %1641 = vadd.xlane.f32.xlu0 %v1640
        %v1642 = vpop.xlane.xlu0 %1641
        %v1643 = vrcp.pop %v1642
        %v1644 = vmul.f32 %v1639, %v1643
        %v1645 = vpack.c.bf16 %v1644, %v1644
        %1647 = vrot.lane.b32.xlu0 %v1585, 96
        %v1648 = vpop.permute.xlu0 %1647
        %v1650 = vsel %vm895, %v1645, 0
        %v1653 = vsel %vm961, %v1648, 0
        %1655 = vmatprep.subr.bf16.mxu0 0
        %1656 = vmatpush1.bf16.msra.mxu0 0
        %1657 = vmatprep.subr.bf16.mxu0 0
        %1658 = vmatpush1.bf16.msra.mxu0 0
        %1659 = vmatprep.subr.bf16.mxu0 0
        %1660 = vmatpush1.bf16.msra.mxu0 0
        %1661 = vmatprep.subr.bf16.mxu0 0
        %1662 = vmatpush1.bf16.msra.mxu0 0
        %1663 = vmatprep.subr.bf16.mxu0 0
        %1664 = vmatpush1.bf16.msra.mxu0 0
        %1665 = vmatprep.subr.bf16.mxu0 0
        %1666 = vmatpush1.bf16.msra.mxu0 0
        %1667 = vmatprep.subr.bf16.mxu0 0
        %1668 = vmatpush1.bf16.msra.mxu0 0
        %1669 = vmatprep.subr.bf16.mxu0 0
        %1670 = vmatpush1.bf16.msra.mxu0 %v1653
        %1671 = vmatprep.subr.bf16.mxu0 0
        %1672 = vmatpush2.bf16.msra.mxu0 0
        %1673 = vmatprep.subr.bf16.mxu0 0
        %1674 = vmatpush2.bf16.msra.mxu0 0
        %1675 = vmatprep.subr.bf16.mxu0 0
        %1676 = vmatpush2.bf16.msra.mxu0 0
        %1677 = vmatprep.subr.bf16.mxu0 0
        %1678 = vmatpush2.bf16.msra.mxu0 0
        %1679 = vmatprep.subr.bf16.mxu0 0
        %1680 = vmatpush2.bf16.msra.mxu0 0
        %1681 = vmatprep.subr.bf16.mxu0 0
        %1682 = vmatpush2.bf16.msra.mxu0 0
        %1683 = vmatprep.subr.bf16.mxu0 0
        %1684 = vmatpush2.bf16.msra.mxu0 0
        %1685 = vmatprep.subr.bf16.mxu0 0
        %1686 = vmatpush2.bf16.msra.mxu0 0
        %1687 = vmatprep.mubr.bf16.mxu0 0
        %1688 = vmatmul.mubr.bf16.gmra.mxu0 %v1650
        %v1689 = vpop.f32.mrf.mxu0
        %v1690 = vadd.f32 0.0, %v1689
        %v1691 = vpop.f32.mrf.mxu0
        %v1692 = vpop.f32.mrf.mxu0
        %v1693 = vpop.f32.mrf.mxu0
        %1694 = vdwg.mxu0
        %1696 = vrot.lane.b32.xlu0 %v1584, 120
        %v1697 = vpop.permute.xlu0 %1696
        %1698 = vrot.lane.b32.xlu0 %v1585, 120
        %v1699 = vpop.permute.xlu0 %1698
        %v1701 = vsel %vm895, %v1697, 0
        %v1704 = vsel %vm895, %v1699, 0
        %1706 = vmatprep.subr.bf16.mxu0 0
        %1707 = vmatpush1.bf16.xpose.msra.mxu0 0
        %1708 = vmatprep.subr.bf16.mxu0 0
        %1709 = vmatpush1.bf16.xpose.msra.mxu0 0
        %1710 = vmatprep.subr.bf16.mxu0 0
        %1711 = vmatpush1.bf16.xpose.msra.mxu0 0
        %1712 = vmatprep.subr.bf16.mxu0 0
        %1713 = vmatpush1.bf16.xpose.msra.mxu0 0
        %1714 = vmatprep.subr.bf16.mxu0 0
        %1715 = vmatpush1.bf16.xpose.msra.mxu0 0
        %1716 = vmatprep.subr.bf16.mxu0 0
        %1717 = vmatpush1.bf16.xpose.msra.mxu0 0
        %1718 = vmatprep.subr.bf16.mxu0 0
        %1719 = vmatpush1.bf16.xpose.msra.mxu0 0
        %1720 = vmatprep.subr.bf16.mxu0 0
        %1721 = vmatpush1.bf16.xpose.msra.mxu0 %v1704
        %1722 = vmatprep.subr.bf16.mxu0 0
        %1723 = vmatpush2.bf16.xpose.msra.mxu0 0
        %1724 = vmatprep.subr.bf16.mxu0 0
        %1725 = vmatpush2.bf16.xpose.msra.mxu0 0
        %1726 = vmatprep.subr.bf16.mxu0 0
        %1727 = vmatpush2.bf16.xpose.msra.mxu0 0
        %1728 = vmatprep.subr.bf16.mxu0 0
        %1729 = vmatpush2.bf16.xpose.msra.mxu0 0
        %1730 = vmatprep.subr.bf16.mxu0 0
        %1731 = vmatpush2.bf16.xpose.msra.mxu0 0
        %1732 = vmatprep.subr.bf16.mxu0 0
        %1733 = vmatpush2.bf16.xpose.msra.mxu0 0
        %1734 = vmatprep.subr.bf16.mxu0 0
        %1735 = vmatpush2.bf16.xpose.msra.mxu0 0
        %1736 = vmatprep.subr.bf16.mxu0 0
        %1737 = vmatpush2.bf16.xpose.msra.mxu0 0
        %1738 = vmatprep.mubr.bf16.mxu0 0
        %1739 = vmatmul.mubr.bf16.gmra.mxu0 %v1701
        %v1740 = vpop.f32.mrf.mxu0
        %v1741 = vadd.f32 0.0, %v1740
        %v1742 = vpop.f32.mrf.mxu0
        %v1743 = vpop.f32.mrf.mxu0
        %v1744 = vpop.f32.mrf.mxu0
        %1745 = vdwg.mxu0
        %v1746 = vsel %vm1632, -1e+09, %v1741
        %v1747 = vsel %vm895, %v1746, -inf
        %1748 = vmax.xlane.f32.xlu0 %v1747
        %v1749 = vpop.xlane.xlu0 %1748
        %v1750 = vsub.f32 %v1746, %v1749
        %v1751 = vmul.f32 %v1750, 1.442695
        %v1752 = vpow.pop %v1751
        %v1753 = vsel %vm895, %v1752, 0.0
        %1754 = vadd.xlane.f32.xlu0 %v1753
        %v1755 = vpop.xlane.xlu0 %1754
        %v1756 = vrcp.pop %v1755
        %v1757 = vmul.f32 %v1752, %v1756
        %v1758 = vpack.c.bf16 %v1757, %v1757
        %1759 = vrot.lane.b32.xlu0 %v1585, 88
        %v1760 = vpop.permute.xlu0 %1759
        %v1762 = vsel %vm895, %v1758, 0
        %v1765 = vsel %vm961, %v1760, 0
        %1767 = vmatprep.subr.bf16.mxu0 0
        %1768 = vmatpush1.bf16.msra.mxu0 0
        %1769 = vmatprep.subr.bf16.mxu0 0
        %1770 = vmatpush1.bf16.msra.mxu0 0
        %1771 = vmatprep.subr.bf16.mxu0 0
        %1772 = vmatpush1.bf16.msra.mxu0 0
        %1773 = vmatprep.subr.bf16.mxu0 0
        %1774 = vmatpush1.bf16.msra.mxu0 0
        %1775 = vmatprep.subr.bf16.mxu0 0
        %1776 = vmatpush1.bf16.msra.mxu0 0
        %1777 = vmatprep.subr.bf16.mxu0 0
        %1778 = vmatpush1.bf16.msra.mxu0 0
        %1779 = vmatprep.subr.bf16.mxu0 0
        %1780 = vmatpush1.bf16.msra.mxu0 0
        %1781 = vmatprep.subr.bf16.mxu0 0
        %1782 = vmatpush1.bf16.msra.mxu0 %v1765
        %1783 = vmatprep.subr.bf16.mxu0 0
        %1784 = vmatpush2.bf16.msra.mxu0 0
        %1785 = vmatprep.subr.bf16.mxu0 0
        %1786 = vmatpush2.bf16.msra.mxu0 0
        %1787 = vmatprep.subr.bf16.mxu0 0
        %1788 = vmatpush2.bf16.msra.mxu0 0
        %1789 = vmatprep.subr.bf16.mxu0 0
        %1790 = vmatpush2.bf16.msra.mxu0 0
        %1791 = vmatprep.subr.bf16.mxu0 0
        %1792 = vmatpush2.bf16.msra.mxu0 0
        %1793 = vmatprep.subr.bf16.mxu0 0
        %1794 = vmatpush2.bf16.msra.mxu0 0
        %1795 = vmatprep.subr.bf16.mxu0 0
        %1796 = vmatpush2.bf16.msra.mxu0 0
        %1797 = vmatprep.subr.bf16.mxu0 0
        %1798 = vmatpush2.bf16.msra.mxu0 0
        %1799 = vmatprep.mubr.bf16.mxu0 0
        %1800 = vmatmul.mubr.bf16.gmra.mxu0 %v1762
        %v1801 = vpop.f32.mrf.mxu0
        %v1802 = vadd.f32 0.0, %v1801
        %v1803 = vpop.f32.mrf.mxu0
        %v1804 = vpop.f32.mrf.mxu0
        %v1805 = vpop.f32.mrf.mxu0
        %1806 = vdwg.mxu0
        %1807 = vrot.lane.b32.xlu0 %v1584, 112
        %v1808 = vpop.permute.xlu0 %1807
        %1809 = vrot.lane.b32.xlu0 %v1585, 112
        %v1810 = vpop.permute.xlu0 %1809
        %v1812 = vsel %vm895, %v1808, 0
        %v1815 = vsel %vm895, %v1810, 0
        %1817 = vmatprep.subr.bf16.mxu0 0
        %1818 = vmatpush1.bf16.xpose.msra.mxu0 0
        %1819 = vmatprep.subr.bf16.mxu0 0
        %1820 = vmatpush1.bf16.xpose.msra.mxu0 0
        %1821 = vmatprep.subr.bf16.mxu0 0
        %1822 = vmatpush1.bf16.xpose.msra.mxu0 0
        %1823 = vmatprep.subr.bf16.mxu0 0
        %1824 = vmatpush1.bf16.xpose.msra.mxu0 0
        %1825 = vmatprep.subr.bf16.mxu0 0
        %1826 = vmatpush1.bf16.xpose.msra.mxu0 0
        %1827 = vmatprep.subr.bf16.mxu0 0
        %1828 = vmatpush1.bf16.xpose.msra.mxu0 0
        %1829 = vmatprep.subr.bf16.mxu0 0
        %1830 = vmatpush1.bf16.xpose.msra.mxu0 0
        %1831 = vmatprep.subr.bf16.mxu0 0
        %1832 = vmatpush1.bf16.xpose.msra.mxu0 %v1815
        %1833 = vmatprep.subr.bf16.mxu0 0
        %1834 = vmatpush2.bf16.xpose.msra.mxu0 0
        %1835 = vmatprep.subr.bf16.mxu0 0
        %1836 = vmatpush2.bf16.xpose.msra.mxu0 0
        %1837 = vmatprep.subr.bf16.mxu0 0
        %1838 = vmatpush2.bf16.xpose.msra.mxu0 0
        %1839 = vmatprep.subr.bf16.mxu0 0
        %1840 = vmatpush2.bf16.xpose.msra.mxu0 0
        %1841 = vmatprep.subr.bf16.mxu0 0
        %1842 = vmatpush2.bf16.xpose.msra.mxu0 0
        %1843 = vmatprep.subr.bf16.mxu0 0
        %1844 = vmatpush2.bf16.xpose.msra.mxu0 0
        %1845 = vmatprep.subr.bf16.mxu0 0
        %1846 = vmatpush2.bf16.xpose.msra.mxu0 0
        %1847 = vmatprep.subr.bf16.mxu0 0
        %1848 = vmatpush2.bf16.xpose.msra.mxu0 0
        %1849 = vmatprep.mubr.bf16.mxu0 0
        %1850 = vmatmul.mubr.bf16.gmra.mxu0 %v1812
        %v1851 = vpop.f32.mrf.mxu0
        %v1852 = vadd.f32 0.0, %v1851
        %v1853 = vpop.f32.mrf.mxu0
        %v1854 = vpop.f32.mrf.mxu0
        %v1855 = vpop.f32.mrf.mxu0
        %1856 = vdwg.mxu0
        %v1857 = vsel %vm1632, -1e+09, %v1852
        %v1858 = vsel %vm895, %v1857, -inf
        %1859 = vmax.xlane.f32.xlu0 %v1858
        %v1860 = vpop.xlane.xlu0 %1859
        %v1861 = vsub.f32 %v1857, %v1860
        %v1862 = vmul.f32 %v1861, 1.442695
        %v1863 = vpow.pop %v1862
        %v1864 = vsel %vm895, %v1863, 0.0
        %1865 = vadd.xlane.f32.xlu0 %v1864
        %v1866 = vpop.xlane.xlu0 %1865
        %v1867 = vrcp.pop %v1866
        %v1868 = vmul.f32 %v1863, %v1867
        %v1869 = vpack.c.bf16 %v1868, %v1868
        %1870 = vrot.lane.b32.xlu0 %v1585, 80
        %v1871 = vpop.permute.xlu0 %1870
        %v1873 = vsel %vm895, %v1869, 0
        %v1876 = vsel %vm961, %v1871, 0
        %1878 = vmatprep.subr.bf16.mxu0 0
        %1879 = vmatpush1.bf16.msra.mxu0 0
        %1880 = vmatprep.subr.bf16.mxu0 0
        %1881 = vmatpush1.bf16.msra.mxu0 0
        %1882 = vmatprep.subr.bf16.mxu0 0
        %1883 = vmatpush1.bf16.msra.mxu0 0
        %1884 = vmatprep.subr.bf16.mxu0 0
        %1885 = vmatpush1.bf16.msra.mxu0 0
        %1886 = vmatprep.subr.bf16.mxu0 0
        %1887 = vmatpush1.bf16.msra.mxu0 0
        %1888 = vmatprep.subr.bf16.mxu0 0
        %1889 = vmatpush1.bf16.msra.mxu0 0
        %1890 = vmatprep.subr.bf16.mxu0 0
        %1891 = vmatpush1.bf16.msra.mxu0 0
        %1892 = vmatprep.subr.bf16.mxu0 0
        %1893 = vmatpush1.bf16.msra.mxu0 %v1876
        %1894 = vmatprep.subr.bf16.mxu0 0
        %1895 = vmatpush2.bf16.msra.mxu0 0
        %1896 = vmatprep.subr.bf16.mxu0 0
        %1897 = vmatpush2.bf16.msra.mxu0 0
        %1898 = vmatprep.subr.bf16.mxu0 0
        %1899 = vmatpush2.bf16.msra.mxu0 0
        %1900 = vmatprep.subr.bf16.mxu0 0
        %1901 = vmatpush2.bf16.msra.mxu0 0
        %1902 = vmatprep.subr.bf16.mxu0 0
        %1903 = vmatpush2.bf16.msra.mxu0 0
        %1904 = vmatprep.subr.bf16.mxu0 0
        %1905 = vmatpush2.bf16.msra.mxu0 0
        %1906 = vmatprep.subr.bf16.mxu0 0
        %1907 = vmatpush2.bf16.msra.mxu0 0
        %1908 = vmatprep.subr.bf16.mxu0 0
        %1909 = vmatpush2.bf16.msra.mxu0 0
        %1910 = vmatprep.mubr.bf16.mxu0 0
        %1911 = vmatmul.mubr.bf16.gmra.mxu0 %v1873
        %v1912 = vpop.f32.mrf.mxu0
        %v1913 = vadd.f32 0.0, %v1912
        %v1914 = vpop.f32.mrf.mxu0
        %v1915 = vpop.f32.mrf.mxu0
        %v1916 = vpop.f32.mrf.mxu0
        %1917 = vdwg.mxu0
        %1918 = vrot.lane.b32.xlu0 %v1584, 104
        %v1919 = vpop.permute.xlu0 %1918
        %1920 = vrot.lane.b32.xlu0 %v1585, 104
        %v1921 = vpop.permute.xlu0 %1920
        %v1923 = vsel %vm895, %v1919, 0
        %v1926 = vsel %vm895, %v1921, 0
        %1928 = vmatprep.subr.bf16.mxu0 0
        %1929 = vmatpush1.bf16.xpose.msra.mxu0 0
        %1930 = vmatprep.subr.bf16.mxu0 0
        %1931 = vmatpush1.bf16.xpose.msra.mxu0 0
        %1932 = vmatprep.subr.bf16.mxu0 0
        %1933 = vmatpush1.bf16.xpose.msra.mxu0 0
        %1934 = vmatprep.subr.bf16.mxu0 0
        %1935 = vmatpush1.bf16.xpose.msra.mxu0 0
        %1936 = vmatprep.subr.bf16.mxu0 0
        %1937 = vmatpush1.bf16.xpose.msra.mxu0 0
        %1938 = vmatprep.subr.bf16.mxu0 0
        %1939 = vmatpush1.bf16.xpose.msra.mxu0 0
        %1940 = vmatprep.subr.bf16.mxu0 0
        %1941 = vmatpush1.bf16.xpose.msra.mxu0 0
        %1942 = vmatprep.subr.bf16.mxu0 0
        %1943 = vmatpush1.bf16.xpose.msra.mxu0 %v1926
        %1944 = vmatprep.subr.bf16.mxu0 0
        %1945 = vmatpush2.bf16.xpose.msra.mxu0 0
        %1946 = vmatprep.subr.bf16.mxu0 0
        %1947 = vmatpush2.bf16.xpose.msra.mxu0 0
        %1948 = vmatprep.subr.bf16.mxu0 0
        %1949 = vmatpush2.bf16.xpose.msra.mxu0 0
        %1950 = vmatprep.subr.bf16.mxu0 0
        %1951 = vmatpush2.bf16.xpose.msra.mxu0 0
        %1952 = vmatprep.subr.bf16.mxu0 0
        %1953 = vmatpush2.bf16.xpose.msra.mxu0 0
        %1954 = vmatprep.subr.bf16.mxu0 0
        %1955 = vmatpush2.bf16.xpose.msra.mxu0 0
        %1956 = vmatprep.subr.bf16.mxu0 0
        %1957 = vmatpush2.bf16.xpose.msra.mxu0 0
        %1958 = vmatprep.subr.bf16.mxu0 0
        %1959 = vmatpush2.bf16.xpose.msra.mxu0 0
        %1960 = vmatprep.mubr.bf16.mxu0 0
        %1961 = vmatmul.mubr.bf16.gmra.mxu0 %v1923
        %v1962 = vpop.f32.mrf.mxu0
        %v1963 = vadd.f32 0.0, %v1962
        %v1964 = vpop.f32.mrf.mxu0
        %v1965 = vpop.f32.mrf.mxu0
        %v1966 = vpop.f32.mrf.mxu0
        %1967 = vdwg.mxu0
        %v1968 = vsel %vm1632, -1e+09, %v1963
        %v1969 = vsel %vm895, %v1968, -inf
        %1970 = vmax.xlane.f32.xlu0 %v1969
        %v1971 = vpop.xlane.xlu0 %1970
        %v1972 = vsub.f32 %v1968, %v1971
        %v1973 = vmul.f32 %v1972, 1.442695
        %v1974 = vpow.pop %v1973
        %v1975 = vsel %vm895, %v1974, 0.0
        %1976 = vadd.xlane.f32.xlu0 %v1975
        %v1977 = vpop.xlane.xlu0 %1976
        %v1978 = vrcp.pop %v1977
        %v1979 = vmul.f32 %v1974, %v1978
        %v1980 = vpack.c.bf16 %v1979, %v1979
        %1981 = vrot.lane.b32.xlu0 %v1585, 72
        %v1982 = vpop.permute.xlu0 %1981
        %v1984 = vsel %vm895, %v1980, 0
        %v1987 = vsel %vm961, %v1982, 0
        %1989 = vmatprep.subr.bf16.mxu0 0
        %1990 = vmatpush1.bf16.msra.mxu0 0
        %1991 = vmatprep.subr.bf16.mxu0 0
        %1992 = vmatpush1.bf16.msra.mxu0 0
        %1993 = vmatprep.subr.bf16.mxu0 0
        %1994 = vmatpush1.bf16.msra.mxu0 0
        %1995 = vmatprep.subr.bf16.mxu0 0
        %1996 = vmatpush1.bf16.msra.mxu0 0
        %1997 = vmatprep.subr.bf16.mxu0 0
        %1998 = vmatpush1.bf16.msra.mxu0 0
        %1999 = vmatprep.subr.bf16.mxu0 0
        %2000 = vmatpush1.bf16.msra.mxu0 0
        %2001 = vmatprep.subr.bf16.mxu0 0
        %2002 = vmatpush1.bf16.msra.mxu0 0
        %2003 = vmatprep.subr.bf16.mxu0 0
        %2004 = vmatpush1.bf16.msra.mxu0 %v1987
        %2005 = vmatprep.subr.bf16.mxu0 0
        %2006 = vmatpush2.bf16.msra.mxu0 0
        %2007 = vmatprep.subr.bf16.mxu0 0
        %2008 = vmatpush2.bf16.msra.mxu0 0
        %2009 = vmatprep.subr.bf16.mxu0 0
        %2010 = vmatpush2.bf16.msra.mxu0 0
        %2011 = vmatprep.subr.bf16.mxu0 0
        %2012 = vmatpush2.bf16.msra.mxu0 0
        %2013 = vmatprep.subr.bf16.mxu0 0
        %2014 = vmatpush2.bf16.msra.mxu0 0
        %2015 = vmatprep.subr.bf16.mxu0 0
        %2016 = vmatpush2.bf16.msra.mxu0 0
        %2017 = vmatprep.subr.bf16.mxu0 0
        %2018 = vmatpush2.bf16.msra.mxu0 0
        %2019 = vmatprep.subr.bf16.mxu0 0
        %2020 = vmatpush2.bf16.msra.mxu0 0
        %2021 = vmatprep.mubr.bf16.mxu0 0
        %2022 = vmatmul.mubr.bf16.gmra.mxu0 %v1984
        %v2023 = vpop.f32.mrf.mxu0
        %v2024 = vadd.f32 0.0, %v2023
        %v2025 = vpop.f32.mrf.mxu0
        %v2026 = vpop.f32.mrf.mxu0
        %v2027 = vpop.f32.mrf.mxu0
        %2028 = vdwg.mxu0
        %2030 = vrot.lane.b32.xlu0 %v1802, 8
        %v2031 = vpop.permute.xlu0 %2030
        %2034 = vrot.lane.b32.xlu0 %v1913, 16
        %v2035 = vpop.permute.xlu0 %2034
        %2038 = vrot.lane.b32.xlu0 %v2024, 24
        %v2039 = vpop.permute.xlu0 %2038
        %v2041 = vsel %vm895, %v1690, %v2031
        %v2042 = vsel %vm1351, %v2041, %v2035
        %v2043 = vsel %vm1353, %v2042, %v2039
        %v2044 = vpack.c.bf16 %v2043, %v2043
        %v2045 = vld [vmem:[#allocation16] sm:$0xf]
        %v2046 = vld [vmem:[#allocation16 + $0x4] sm:$0xf]
        %v2047 = vld [vmem:[#allocation16 + $0x8] sm:$0xf]
        %v2048 = vld [vmem:[#allocation16 + $0xc] sm:$0xf]
        %v2049 = vld [vmem:[%s13] sm:$0x1]
        %v2051 = vlaneseq
        %v2052 = vshrl.u32 %v2051, 7
        %v2053 = vsub.s32 0, %v2052
        %v2054 = vrot.slane %v2049, %v2053
        %v2060 = vunpack.c.l.b16 %v2045
        %v2061 = vunpack.c.l.b16 %v2046
        %v2062 = vunpack.c.l.b16 %v2047
        %v2063 = vunpack.c.l.b16 %v2048
        %v2064 = vpack.c.b16 %v2061, %v2060
        %v2065 = vpack.c.b16 %v2063, %v2062
        %v2069 = vsel %vm846, %v2044, 0
        %2071 = vmatprep.subr.bf16.mxu0 0
        %2072 = vmatpush1.bf16.msra.mxu0 0
        %2073 = vmatprep.subr.bf16.mxu0 0
        %2074 = vmatpush1.bf16.msra.mxu0 0
        %2075 = vmatprep.subr.bf16.mxu0 0
        %2076 = vmatpush1.bf16.msra.mxu0 0
        %2077 = vmatprep.subr.bf16.mxu0 0
        %2078 = vmatpush1.bf16.msra.mxu0 0
        %2079 = vmatprep.subr.bf16.mxu0 0
        %2080 = vmatpush1.bf16.msra.mxu0 0
        %2081 = vmatprep.subr.bf16.mxu0 0
        %2082 = vmatpush1.bf16.msra.mxu0 0
        %2083 = vmatprep.subr.bf16.mxu0 0
        %2084 = vmatpush1.bf16.msra.mxu0 %v2065
        %2085 = vmatprep.subr.bf16.mxu0 0
        %2086 = vmatpush1.bf16.msra.mxu0 %v2064
        %2087 = vmatprep.subr.bf16.mxu0 0
        %2088 = vmatpush2.bf16.msra.mxu0 0
        %2089 = vmatprep.subr.bf16.mxu0 0
        %2090 = vmatpush2.bf16.msra.mxu0 0
        %2091 = vmatprep.subr.bf16.mxu0 0
        %2092 = vmatpush2.bf16.msra.mxu0 0
        %2093 = vmatprep.subr.bf16.mxu0 0
        %2094 = vmatpush2.bf16.msra.mxu0 0
        %2095 = vmatprep.subr.bf16.mxu0 0
        %2096 = vmatpush2.bf16.msra.mxu0 0
        %2097 = vmatprep.subr.bf16.mxu0 0
        %2098 = vmatpush2.bf16.msra.mxu0 0
        %2099 = vmatprep.subr.bf16.mxu0 0
        %2100 = vmatpush2.bf16.msra.mxu0 0
        %2101 = vmatprep.subr.bf16.mxu0 0
        %2102 = vmatpush2.bf16.msra.mxu0 0
        %2103 = vmatprep.mubr.bf16.mxu0 0
        %2104 = vmatmul.mubr.bf16.gmra.mxu0 %v2069
        %v2105 = vpop.f32.mrf.mxu0
        %v2106 = vadd.f32 %v2054, %v2105
        %v2107 = vpop.f32.mrf.mxu0
        %v2108 = vpop.f32.mrf.mxu0
        %v2109 = vpop.f32.mrf.mxu0
        %2110 = vdwg.mxu0
        %v2111 = vadd.f32 %v1448, %v2106
        %v2112 = vsel %vm846, %v2111, 0.0
        %2113 = vadd.xlane.f32.xlu0 %v2112
        %v2114 = vpop.xlane.xlu0 %2113
        %v2115 = vmul.f32 %v2114, %v1426
        %v2116 = vsub.f32 %v2111, %v2115
        %v2117 = vmul.f32 %v2116, %v2116
        %v2118 = vsel %vm846, %v2117, 0.0
        %2119 = vadd.xlane.f32.xlu0 %v2118
        %v2120 = vpop.xlane.xlu0 %2119
        %v2121 = vmul.f32 %v2120, %v1426
        %v2122 = vadd.f32 %v2121, 1e-05
        %v2123 = vrsqrt.pop %v2122
        %v2124 = vmul.f32 %v2116, %v2123
        %v2125 = vld [vmem:[%s18 + $0x1] sm:$0x1]
        %v2126 = vld [vmem:[%s19 + $0x1] sm:$0x1]
        %v2127 = vlaneseq
        %v2128 = vshrl.u32 %v2127, 7
        %v2129 = vsub.s32 0, %v2128
        %v2130 = vrot.slane %v2125, %v2129
        %v2131 = vmul.f32 %v2124, %v2130
        %v2132 = vlaneseq
        %v2133 = vshrl.u32 %v2132, 7
        %v2134 = vsub.s32 0, %v2133
        %v2135 = vrot.slane %v2126, %v2134
        %v2136 = vadd.f32 %v2131, %v2135
        %v2137 = vpack.c.bf16 %v2136, %v2136
        %v2138 = vld [vmem:[#allocation17] sm:$0xf]
        %v2139 = vld [vmem:[#allocation17 + $0x4] sm:$0xf]
        %v2140 = vld [vmem:[#allocation17 + $0x8] sm:$0xf]
        %v2141 = vld [vmem:[#allocation17 + $0xc] sm:$0xf]
        %v2142 = vld [vmem:[%s15] sm:$0x1]
        %v2144 = vlaneseq
        %v2145 = vshrl.u32 %v2144, 7
        %v2146 = vsub.s32 0, %v2145
        %v2147 = vrot.slane %v2142, %v2146
        %v2153 = vunpack.c.l.b16 %v2138
        %v2154 = vunpack.c.l.b16 %v2139
        %v2155 = vunpack.c.l.b16 %v2140
        %v2156 = vunpack.c.l.b16 %v2141
        %v2157 = vpack.c.b16 %v2154, %v2153
        %v2158 = vpack.c.b16 %v2156, %v2155
        %v2162 = vsel %vm846, %v2137, 0
        %2164 = vmatprep.subr.bf16.mxu0 0
        %2165 = vmatpush1.bf16.msra.mxu0 0
        %2166 = vmatprep.subr.bf16.mxu0 0
        %2167 = vmatpush1.bf16.msra.mxu0 0
        %2168 = vmatprep.subr.bf16.mxu0 0
        %2169 = vmatpush1.bf16.msra.mxu0 0
        %2170 = vmatprep.subr.bf16.mxu0 0
        %2171 = vmatpush1.bf16.msra.mxu0 0
        %2172 = vmatprep.subr.bf16.mxu0 0
        %2173 = vmatpush1.bf16.msra.mxu0 0
        %2174 = vmatprep.subr.bf16.mxu0 0
        %2175 = vmatpush1.bf16.msra.mxu0 0
        %2176 = vmatprep.subr.bf16.mxu0 0
        %2177 = vmatpush1.bf16.msra.mxu0 %v2158
        %2178 = vmatprep.subr.bf16.mxu0 0
        %2179 = vmatpush1.bf16.msra.mxu0 %v2157
        %2180 = vmatprep.subr.bf16.mxu0 0
        %2181 = vmatpush2.bf16.msra.mxu0 0
        %2182 = vmatprep.subr.bf16.mxu0 0
        %2183 = vmatpush2.bf16.msra.mxu0 0
        %2184 = vmatprep.subr.bf16.mxu0 0
        %2185 = vmatpush2.bf16.msra.mxu0 0
        %2186 = vmatprep.subr.bf16.mxu0 0
        %2187 = vmatpush2.bf16.msra.mxu0 0
        %2188 = vmatprep.subr.bf16.mxu0 0
        %2189 = vmatpush2.bf16.msra.mxu0 0
        %2190 = vmatprep.subr.bf16.mxu0 0
        %2191 = vmatpush2.bf16.msra.mxu0 0
        %2192 = vmatprep.subr.bf16.mxu0 0
        %2193 = vmatpush2.bf16.msra.mxu0 0
        %2194 = vmatprep.subr.bf16.mxu0 0
        %2195 = vmatpush2.bf16.msra.mxu0 0
        %2196 = vmatprep.mubr.bf16.mxu0 0
        %2197 = vmatmul.mubr.bf16.gmra.mxu0 %v2162
        %v2198 = vpop.f32.mrf.mxu0
        %v2199 = vadd.f32 %v2147, %v2198
        %v2200 = vpop.f32.mrf.mxu0
        %v2201 = vpop.f32.mrf.mxu0
        %v2202 = vpop.f32.mrf.mxu0
        %2203 = vdwg.mxu0
        %v2204 = vmax.f32 %v2199, 0.0
        %v2205 = vpack.c.bf16 %v2204, %v2204
        %v2206 = vld [vmem:[%s16] sm:$0xf]
        %v2207 = vld [vmem:[%s16 + $0x4] sm:$0xf]
        %v2208 = vld [vmem:[%s16 + $0x8] sm:$0xf]
        %v2209 = vld [vmem:[%s16 + $0xc] sm:$0xf]
        %v2210 = vld [vmem:[%s16 + $0x10] sm:$0xf]
        %v2211 = vld [vmem:[%s16 + $0x14] sm:$0xf]
        %v2212 = vld [vmem:[%s16 + $0x18] sm:$0xf]
        %v2213 = vld [vmem:[%s16 + $0x1c] sm:$0xf]
        %v2214 = vld [vmem:[%s17] sm:$0x1]
        %v2216 = vlaneseq
        %v2217 = vshrl.u32 %v2216, 7
        %v2218 = vsub.s32 0, %v2217
        %v2219 = vrot.slane %v2214, %v2218
        %v2229 = vunpack.c.l.b16 %v2206
        %v2230 = vunpack.c.l.b16 %v2207
        %v2231 = vunpack.c.l.b16 %v2208
        %v2232 = vunpack.c.l.b16 %v2209
        %v2233 = vunpack.c.l.b16 %v2210
        %v2234 = vunpack.c.l.b16 %v2211
        %v2235 = vunpack.c.l.b16 %v2212
        %v2236 = vunpack.c.l.b16 %v2213
        %v2237 = vpack.c.b16 %v2230, %v2229
        %v2238 = vpack.c.b16 %v2232, %v2231
        %v2239 = vpack.c.b16 %v2234, %v2233
        %v2240 = vpack.c.b16 %v2236, %v2235
        %vm2245 = vcmask 523264
        %v2247 = vsel %vm2245, %v2205, 0
        %2249 = vmatprep.subr.bf16.mxu0 0
        %2250 = vmatpush1.bf16.msra.mxu0 0
        %2251 = vmatprep.subr.bf16.mxu0 0
        %2252 = vmatpush1.bf16.msra.mxu0 0
        %2253 = vmatprep.subr.bf16.mxu0 0
        %2254 = vmatpush1.bf16.msra.mxu0 0
        %2255 = vmatprep.subr.bf16.mxu0 0
        %2256 = vmatpush1.bf16.msra.mxu0 0
        %2257 = vmatprep.subr.bf16.mxu0 0
        %2258 = vmatpush1.bf16.msra.mxu0 %v2240
        %2259 = vmatprep.subr.bf16.mxu0 0
        %2260 = vmatpush1.bf16.msra.mxu0 %v2239
        %2261 = vmatprep.subr.bf16.mxu0 0
        %2262 = vmatpush1.bf16.msra.mxu0 %v2238
        %2263 = vmatprep.subr.bf16.mxu0 0
        %2264 = vmatpush1.bf16.msra.mxu0 %v2237
        %2265 = vmatprep.subr.bf16.mxu0 0
        %2266 = vmatpush2.bf16.msra.mxu0 0
        %2267 = vmatprep.subr.bf16.mxu0 0
        %2268 = vmatpush2.bf16.msra.mxu0 0
        %2269 = vmatprep.subr.bf16.mxu0 0
        %2270 = vmatpush2.bf16.msra.mxu0 0
        %2271 = vmatprep.subr.bf16.mxu0 0
        %2272 = vmatpush2.bf16.msra.mxu0 0
        %2273 = vmatprep.subr.bf16.mxu0 0
        %2274 = vmatpush2.bf16.msra.mxu0 0
        %2275 = vmatprep.subr.bf16.mxu0 0
        %2276 = vmatpush2.bf16.msra.mxu0 0
        %2277 = vmatprep.subr.bf16.mxu0 0
        %2278 = vmatpush2.bf16.msra.mxu0 0
        %2279 = vmatprep.subr.bf16.mxu0 0
        %2280 = vmatpush2.bf16.msra.mxu0 0
        %2281 = vmatprep.mubr.bf16.mxu0 0
        %2282 = vmatmul.mubr.bf16.gmra.mxu0 %v2247
        %v2283 = vpop.f32.mrf.mxu0
        %v2284 = vadd.f32 %v2219, %v2283
        %v2285 = vpop.f32.mrf.mxu0
        %v2286 = vpop.f32.mrf.mxu0
        %v2287 = vpop.f32.mrf.mxu0
        %2288 = vdwg.mxu0
        %v2289 = vadd.f32 %v2136, %v2284
        %v2290 = vsel %vm846, %v2289, 0.0
        %2291 = vadd.xlane.f32.xlu0 %v2290
        %v2292 = vpop.xlane.xlu0 %2291
        %v2293 = vmul.f32 %v2292, %v1426
        %v2294 = vsub.f32 %v2289, %v2293
        %v2295 = vmul.f32 %v2294, %v2294
        %v2296 = vsel %vm846, %v2295, 0.0
        %2297 = vadd.xlane.f32.xlu0 %v2296
        %v2298 = vpop.xlane.xlu0 %2297
        %v2299 = vmul.f32 %v2298, %v1426
        %v2300 = vadd.f32 %v2299, 1e-05
        %v2301 = vrsqrt.pop %v2300
        %v2302 = vmul.f32 %v2294, %v2301
        %v2303 = vld [vmem:[%s18 + $0x2] sm:$0x1]
        %v2304 = vld [vmem:[%s19 + $0x2] sm:$0x1]
        %v2305 = vlaneseq
        %v2306 = vshrl.u32 %v2305, 7
        %v2307 = vsub.s32 0, %v2306
        %v2308 = vrot.slane %v2303, %v2307
        %v2309 = vmul.f32 %v2302, %v2308
        %v2310 = vlaneseq
        %v2311 = vshrl.u32 %v2310, 7
        %v2312 = vsub.s32 0, %v2311
        %v2313 = vrot.slane %v2304, %v2312
        %v2314 = vadd.f32 %v2309, %v2313
        %2315 = vst.msk [vmem:[%s806] sm:$0xff] %vm846, %v2314
        %s2316 = sand.u32 %s490, 1
        %s2317 = scalar_lea.sflag [#allocation4], %s2316
        %s2318 = sand.u32 %s490, 1
        %s2319 = smul.addr %s2318, 8
        %s2320 = scalar_lea.vmem [#allocation19], %s2319
        // Predicated region
        $region141: #{tpu_custom_call.1} parent=99 // pred_check
          %p2321 = pneg %p500
        $region142: #{tpu_custom_call.1} parent=99 // pred_check_branch
          %2323 = sbr.rel (%p2321) target = $region144
        $region143: #{tpu_custom_call.1} parent=99 // pred_region
          %s2325 = ssub.s32 128, 128
          %2326 = vsyncadd %s2317, %s2325
          %s2327 = smul.addr %s42, 128
          %s2328 = scalar_lea.hbm %s20, %s2327
          %s2330 = sshll.u32 %s2320, 4
          %s2331 = int_to_ptr.vmem [resolvable:$true] %s2330
          %2333 = dma.vmem_to_hbm [thread:$0]  %s2331, 128, %s2328, %s2317
        $region144: #{tpu_custom_call.1} parent=99 // pred_fallthru
          _
      $region100: #{tpu_custom_call.1} parent=5 // pred_fallthru
        _
      %p2334 = scmp.le.s32.totalorder 2, %s37
      // Predicated region
      $region145: #{tpu_custom_call.1} parent=5 // pred_check
        %p2335 = pneg %p2334
      $region146: #{tpu_custom_call.1} parent=5 // pred_check_branch
        %2337 = sbr.rel (%p2335) target = $region148
      $region147: #{tpu_custom_call.1} parent=5 // pred_region
        %s2338 = ssub.s32 %s37, 2
        // Predicated region
        $region149: #{tpu_custom_call.1} parent=147 // pred_check
          %p2339 = pneg %p506
        $region150: #{tpu_custom_call.1} parent=147 // pred_check_branch
          %2341 = sbr.rel (%p2339) target = $region152
        $region151: #{tpu_custom_call.1} parent=147 // pred_region
          %s2342 = sand.u32 %s491, 1
          %s2343 = scalar_lea.sflag [#allocation4], %s2342
          %s2344 = sand.u32 %s491, 1
          %s2345 = smul.addr %s2344, 8
          %s2346 = scalar_lea.vmem [#allocation19], %s2345
          %2347 = dma.done %s2343, 128
        $region152: #{tpu_custom_call.1} parent=147 // pred_fallthru
          _
      $region148: #{tpu_custom_call.1} parent=5 // pred_fallthru
        _
    $region6: #{tpu_custom_call.1} parent=1 // loop_footer
      %s41 = sadd.s32 1, %s37
    $region7: #{tpu_custom_call.1} parent=1 // loop_footer_branch
      %36 = sbr.rel target = $region3
    $region8: #{tpu_custom_call.1} parent=1 // loop_exit
      _
    %2348 = vsyncpa [#allocation3], 1
    %s2349 = scalar_lea.sflag [#allocation3], 1
    %2350 = vsyncpa %s2349, 1
    %2351 = vsyncpa [#allocation6], 1
    %2352 = vsyncpa [#allocation9], 1
    %2353 = vsyncpa [#allocation12], 1
    %2354 = vsyncpa [#allocation15], 1
    %2355 = vsyncpa [#allocation18], 1
    %2356 = vsyncpa [#allocation4], 1
    %s2357 = scalar_lea.sflag [#allocation4], 1
    %2358 = vsyncpa %s2357, 1

</llo_original>
